<compile_context>
chip_gen: v7x
topology: tpu7x:2x2x1
jax: 0.10.0
libtpu: 0.0.40
codegen_flags: <defaults>
</compile_context>

<pallas_src>
import math

import jax
import jax.numpy as jnp
from jax import lax
from jax.experimental import pallas as pl
from jax.experimental.pallas import tpu as pltpu

DIM = 32   # MEGNet latent width
HID = 64   # encoder hidden width


# ----------------------------------------------------------------------------
# helpers used inside the kernel
# ----------------------------------------------------------------------------
def _softplus(z):
    # numerically stable log(1 + exp(z))
    return jnp.maximum(z, 0.0) + jnp.log1p(jnp.exp(-jnp.abs(z)))


def _dot(a, b):
    return jnp.dot(a, b, preferred_element_type=jnp.float32)


def _dot_t(a, b):
    # a: [K, M], b: [K, N]  ->  a.T @ b : [M, N]  (contraction over axis 0)
    return lax.dot_general(a, b, (((0,), (0,)), ((), ())),
                           preferred_element_type=jnp.float32)


def _onehot(idx_row, n_seg, n_rows):
    # idx_row: [1, n_rows] int32 -> [n_seg, n_rows] f32, onehot[s, r] = (idx[r] == s)
    iot = lax.broadcasted_iota(jnp.int32, (n_seg, n_rows), 0)
    return (jnp.broadcast_to(idx_row, (n_seg, n_rows)) == iot).astype(jnp.float32)


# ----------------------------------------------------------------------------
# fused MEGNetBlock kernel
# ----------------------------------------------------------------------------
def megnet_block_kernel(
        # data
        x_ref, ea_ref, st_ref,
        src_ref, dst_ref, eb_ref, batch_ref,
        # encoder params (BN1 folded into W2; final BN kept as scale/shift)
        ew1e_ref, ew1v_ref, ew1u_ref, eb1_ref, ew2_ref, evec_ref,
        # update-MLP params (all BNs folded into W2/W3/b3)
        uw1e_ref, uw1v_ref, uw1u_ref, uw23_ref, ubvec_ref,
        # outputs
        v_out_ref, e_out_ref, u_out_ref):

    n_nodes = x_ref.shape[0]
    n_edges = ea_ref.shape[0]
    n_graphs = st_ref.shape[0]

    # ---------------- encoders: Linear-ReLU-[BN folded]-Linear-ReLU-BN -------
    eb1 = eb1_ref[...]            # [3, 64] packed first-layer biases

    def encoder(inp, w1, b1, w2, vec):
        h = jnp.maximum(_dot(inp, w1) + b1, 0.0)
        h = jnp.maximum(_dot(h, w2) + vec[0:1], 0.0)
        return h * vec[1:2] + vec[2:3]

    e_enc = encoder(ea_ref[...], ew1e_ref[...], eb1[0:1], ew2_ref[0], evec_ref[0])
    v_enc = encoder(x_ref[...],  ew1v_ref[...], eb1[1:2], ew2_ref[1], evec_ref[1])
    u_enc = encoder(st_ref[...], ew1u_ref[...], eb1[2:3], ew2_ref[2], evec_ref[2])

    # ------------- one-hot membership matrices (segment-major) ---------------
    oh_src = _onehot(src_ref[...],   n_nodes,  n_edges)    # [N, E]
    oh_dst = _onehot(dst_ref[...],   n_nodes,  n_edges)    # [N, E]
    oh_eb  = _onehot(eb_ref[...],    n_graphs, n_edges)    # [G, E]
    oh_bat = _onehot(batch_ref[...], n_graphs, n_nodes)    # [G, N]

    # gathers via transposed one-hot matmuls (MXU)
    v_src = _dot_t(oh_src, v_enc)   # [E, 32] = v[src]
    v_dst = _dot_t(oh_dst, v_enc)   # [E, 32] = v[dst]
    u_eb  = _dot_t(oh_eb,  u_enc)   # [E, 32] = u[batch[src]]
    u_bat = _dot_t(oh_bat, u_enc)   # [N, 32] = u[batch]

    def mlp_tail(z1, w2, w3, bvec):
        # Linear(done)-Softplus-[BN folded]-Linear-Softplus-[BN folded]-Linear-[BN folded]
        h1 = _softplus(z1 + bvec[0:1])
        h2 = _softplus(_dot(h1, w2) + bvec[1:2])
        return _dot(h2, w3) + bvec[2:3]

    # ------------------------------- edge update -----------------------------
    # comb_e = [v[src], v[dst], e, u[eb]] -> done as summed block matmuls on W1
    w1e = uw1e_ref[...]             # [128, 32]
    z1 = (_dot(v_src, w1e[0:32]) + _dot(v_dst, w1e[32:64])
          + _dot(e_enc, w1e[64:96]) + _dot(u_eb, w1e[96:128]))
    e_new = mlp_tail(z1, uw23_ref[0], uw23_ref[1], ubvec_ref[0])     # [E, 32]

    # ------------------------------- node update -----------------------------
    cnt_src = jnp.maximum(jnp.sum(oh_src, axis=1, keepdims=True), 1.0)   # [N, 1]
    v_mean = _dot(oh_src, e_new) * pl.reciprocal(cnt_src, approx=True)   # [N, 32]
    w1v = uw1v_ref[...]             # [96, 32]
    z1 = (_dot(v_enc, w1v[0:32]) + _dot(v_mean, w1v[32:64])
          + _dot(u_bat, w1v[64:96]))
    v_new = mlp_tail(z1, uw23_ref[2], uw23_ref[3], ubvec_ref[1])     # [N, 32]

    # ------------------------------- state update ----------------------------
    cnt_eb  = jnp.maximum(jnp.sum(oh_eb,  axis=1, keepdims=True), 1.0)   # [G, 1]
    cnt_bat = jnp.maximum(jnp.sum(oh_bat, axis=1, keepdims=True), 1.0)   # [G, 1]
    u_e = _dot(oh_eb,  e_new) * pl.reciprocal(cnt_eb,  approx=True)      # [G, 32]
    u_v = _dot(oh_bat, v_new) * pl.reciprocal(cnt_bat, approx=True)      # [G, 32]
    w1u = uw1u_ref[...]             # [96, 32]
    z1 = (_dot(u_e, w1u[0:32]) + _dot(u_v, w1u[32:64])
          + _dot(u_enc, w1u[64:96]))
    u_new = mlp_tail(z1, uw23_ref[4], uw23_ref[5], ubvec_ref[2])     # [G, 32]

    v_out_ref[...] = v_new
    e_out_ref[...] = e_new
    u_out_ref[...] = u_new


# ----------------------------------------------------------------------------
# wrapper: one pallas_call, whole graph resident in VMEM (toy sizes)
# ----------------------------------------------------------------------------
def _vmem():
    return pl.BlockSpec(memory_space=pltpu.MemorySpace.VMEM)


def megnet_block_forward(x, edge_index, edge_attr, state, batch, packed):
    n_nodes = x.shape[0]
    n_edges = edge_attr.shape[0]
    n_graphs = state.shape[0]

    src = edge_index[0].astype(jnp.int32)
    dst = edge_index[1].astype(jnp.int32)
    eb = batch.astype(jnp.int32)[src]                 # edge -> graph map

    src_row = src.reshape(1, n_edges)
    dst_row = dst.reshape(1, n_edges)
    eb_row = eb.reshape(1, n_edges)
    batch_row = batch.astype(jnp.int32).reshape(1, n_nodes)

    inputs = (x, edge_attr, state, src_row, dst_row, eb_row, batch_row) + tuple(packed)

    out_shapes = (
        jax.ShapeDtypeStruct((n_nodes, DIM), jnp.float32),   # v
        jax.ShapeDtypeStruct((n_edges, DIM), jnp.float32),   # e
        jax.ShapeDtypeStruct((n_graphs, DIM), jnp.float32),  # u
    )

    v_new, e_new, u_new = pl.pallas_call(
        megnet_block_kernel,
        out_shape=out_shapes,
        in_specs=[_vmem()] * len(inputs),
        out_specs=(_vmem(), _vmem(), _vmem()),
    )(*inputs)
    return v_new, e_new, u_new


megnet_block_forward_jit = jax.jit(megnet_block_forward)


# ----------------------------------------------------------------------------
# deterministic parameter init (mirrors nn.Module shapes) + BN folding/packing
# ----------------------------------------------------------------------------
def init_linear(key, fin, fout):
    k_w, k_b = jax.random.split(key)
    lim = 1.0 / math.sqrt(fin)
    w = jax.random.uniform(k_w, (fin, fout), jnp.float32, -lim, lim)
    b = jax.random.uniform(k_b, (1, fout), jnp.float32, -lim, lim)
    return w, b


def init_bn_affine(key, feat, eps=1e-5):
    # eval-mode BatchNorm1d reduced to per-feature (scale, shift)
    k1, k2, k3, k4 = jax.random.split(key, 4)
    gamma = 1.0 + 0.1 * jax.random.normal(k1, (1, feat), jnp.float32)
    beta = 0.1 * jax.random.normal(k2, (1, feat), jnp.float32)
    r_mean = 0.1 * jax.random.normal(k3, (1, feat), jnp.float32)
    r_var = 0.5 + jnp.abs(jax.random.normal(k4, (1, feat), jnp.float32))
    scale = gamma / jnp.sqrt(r_var + eps)
    shift = beta - r_mean * scale
    return scale, shift


def init_encoder(key, fin):
    # Linear(fin,64) ReLU BN(64) Linear(64,32) ReLU BN(32)
    k1, k2, k3, k4 = jax.random.split(key, 4)
    w1, b1 = init_linear(k1, fin, HID)
    s1, t1 = init_bn_affine(k2, HID)
    w2, b2 = init_linear(k3, HID, DIM)
    s2, t2 = init_bn_affine(k4, DIM)
    return (w1, b1, s1, t1, w2, b2, s2, t2)


def init_update(key, fin, dim=DIM):
    # Linear(fin,dim) Softplus BN Linear(dim,dim) Softplus BN Linear(dim,dim) BN
    ks = jax.random.split(key, 6)
    w1, b1 = init_linear(ks[0], fin, dim)
    s1, t1 = init_bn_affine(ks[1], dim)
    w2, b2 = init_linear(ks[2], dim, dim)
    s2, t2 = init_bn_affine(ks[3], dim)
    w3, b3 = init_linear(ks[4], dim, dim)
    s3, t3 = init_bn_affine(ks[5], dim)
    return (w1, b1, s1, t1, w2, b2, s2, t2, w3, b3, s3, t3)


def fold_encoder(p):
    # BN1 (after ReLU1) folded into W2/b2; final BN kept as (s2, t2).
    w1, b1, s1, t1, w2, b2, s2, t2 = p
    w2f = w2 * s1.T                   # row-scale W2 by s1
    b2f = b2 + t1 @ w2
    vec = jnp.concatenate([b2f, s2, t2], axis=0)   # [3, 32]
    return w1, b1, w2f, vec


def fold_update(p):
    # BN1 -> W2/b2, BN2 -> W3/b3, BN3 (no nonlinearity) -> W3/b3 fully.
    w1, b1, s1, t1, w2, b2, s2, t2, w3, b3, s3, t3 = p
    w2f = w2 * s1.T
    b2f = b2 + t1 @ w2
    w3f = (w3 * s2.T) * s3
    b3f = (b3 + t2 @ w3) * s3 + t3
    bvec = jnp.concatenate([b1, b2f, b3f], axis=0)  # [3, 32]
    return w1, w2f, w3f, bvec


def pack_params(params):
    enc_e = fold_encoder(params["e_dense"])
    enc_v = fold_encoder(params["v_dense"])
    enc_u = fold_encoder(params["u_dense"])
    upd_e = fold_update(params["update_edge"])
    upd_v = fold_update(params["update_node"])
    upd_u = fold_update(params["update_state"])

    enc_b1 = jnp.concatenate([enc_e[1], enc_v[1], enc_u[1]], axis=0)   # [3, 64]
    enc_w2 = jnp.stack([enc_e[2], enc_v[2], enc_u[2]], axis=0)         # [3, 64, 32]
    enc_vec = jnp.stack([enc_e[3], enc_v[3], enc_u[3]], axis=0)        # [3, 3, 32]
    upd_w23 = jnp.stack([upd_e[1], upd_e[2],
                         upd_v[1], upd_v[2],
                         upd_u[1], upd_u[2]], axis=0)                  # [6, 32, 32]
    upd_bvec = jnp.stack([upd_e[3], upd_v[3], upd_u[3]], axis=0)       # [3, 3, 32]

    return (enc_e[0], enc_v[0], enc_u[0], enc_b1, enc_w2, enc_vec,
            upd_e[0], upd_v[0], upd_u[0], upd_w23, upd_bvec)


# ----------------------------------------------------------------------------
# pure-JAX reference (unfolded) for a correctness check
# ----------------------------------------------------------------------------
def reference_forward(x, edge_index, edge_attr, state, batch, params):
    def enc(inp, p):
        w1, b1, s1, t1, w2, b2, s2, t2 = p
        h = jnp.maximum(inp @ w1 + b1, 0.0) * s1 + t1
        return jnp.maximum(h @ w2 + b2, 0.0) * s2 + t2

    def upd(inp, p):
        w1, b1, s1, t1, w2, b2, s2, t2, w3, b3, s3, t3 = p
        h = _softplus(inp @ w1 + b1) * s1 + t1
        h = _softplus(h @ w2 + b2) * s2 + t2
        return (h @ w3 + b3) * s3 + t3

    def seg_mean(vals, idx, nseg):
        sums = jax.ops.segment_sum(vals, idx, nseg)
        cnt = jax.ops.segment_sum(jnp.ones((vals.shape[0],), jnp.float32), idx, nseg)
        return sums / jnp.maximum(cnt, 1.0)[:, None]

    src, dst = edge_index[0], edge_index[1]
    e = enc(edge_attr, params["e_dense"])
    v = enc(x, params["v_dense"])
    u = enc(state, params["u_dense"])
    eb = batch[src]
    comb_e = jnp.concatenate([v[src], v[dst], e, u[eb]], axis=1)
    e = upd(comb_e, params["update_edge"])
    v_mean = seg_mean(e, src, x.shape[0])
    comb_v = jnp.concatenate([v, v_mean, u[batch]], axis=1)
    v = upd(comb_v, params["update_node"])
    u_e = seg_mean(e, eb, state.shape[0])
    u_v = seg_mean(v, batch, state.shape[0])
    comb_u = jnp.concatenate([u_e, u_v, u], axis=1)
    u = upd(comb_u, params["update_state"])
    return v, e, u


# ----------------------------------------------------------------------------
# Main
# ----------------------------------------------------------------------------
if __name__ == "__main__":
    key = jax.random.PRNGKey(0)

    N_NODES = 16
    N_EDGES = 32
    N_GRAPHS = 2
    N_NODE_FEATS = 16
    N_EDGE_FEATS = 12
    N_STATE_FEATS = 8

    k_in, k_par = jax.random.split(key)
    kx, ke, ks, ksrc0, kdst0, ksrc1, kdst1 = jax.random.split(k_in, 7)

    x = jax.random.normal(kx, (N_NODES, N_NODE_FEATS), jnp.float32)
    edge_attr = jax.random.normal(ke, (N_EDGES, N_EDGE_FEATS), jnp.float32)
    state = jax.random.normal(ks, (N_GRAPHS, N_STATE_FEATS), jnp.float32)

    # batch: nodes 0..7 -> graph 0, nodes 8..15 -> graph 1
    batch = jnp.concatenate([jnp.zeros(8, jnp.int32), jnp.ones(8, jnp.int32)])

    # edges: 16 within graph 0, 16 within graph 1
    src0 = jax.random.randint(ksrc0, (16,), 0, 8, jnp.int32)
    dst0 = jax.random.randint(kdst0, (16,), 0, 8, jnp.int32)
    src1 = jax.random.randint(ksrc1, (16,), 8, 16, jnp.int32)
    dst1 = jax.random.randint(kdst1, (16,), 8, 16, jnp.int32)
    edge_index = jnp.stack(
        [jnp.concatenate([src0, src1]), jnp.concatenate([dst0, dst1])], axis=0)

    # parameters (synthetic, deterministic)
    kp = jax.random.split(k_par, 6)
    params = {
        "e_dense": init_encoder(kp[0], N_EDGE_FEATS),
        "v_dense": init_encoder(kp[1], N_NODE_FEATS),
        "u_dense": init_encoder(kp[2], N_STATE_FEATS),
        "update_edge": init_update(kp[3], DIM * 4),
        "update_node": init_update(kp[4], DIM * 3),
        "update_state": init_update(kp[5], DIM * 3),
    }
    packed = pack_params(params)

    v_out, e_out, u_out = megnet_block_forward_jit(
        x, edge_index, edge_attr, state, batch, packed)
    jax.block_until_ready((v_out, e_out, u_out))

    assert v_out.shape == (N_NODES, DIM)
    assert e_out.shape == (N_EDGES, DIM)
    assert u_out.shape == (N_GRAPHS, DIM)

    # correctness vs pure-JAX reference (loose tolerance: approx reciprocal in kernel)
    v_ref, e_ref, u_ref = reference_forward(x, edge_index, edge_attr, state, batch, params)
    assert jnp.allclose(e_out, e_ref, rtol=2e-2, atol=2e-2), "edge output mismatch"
    assert jnp.allclose(v_out, v_ref, rtol=2e-2, atol=2e-2), "node output mismatch"
    assert jnp.allclose(u_out, u_ref, rtol=2e-2, atol=2e-2), "state output mismatch"

    print("KERNEL_OK")
</pallas_src>

<mosaic_0001>
module attributes {stable_mosaic.version = 11 : i64} {
  func.func @megnet_block_kernel(%arg0: memref<16x16xf32, #tpu.memory_space<vmem>>, %arg1: memref<32x12xf32, #tpu.memory_space<vmem>>, %arg2: memref<2x8xf32, #tpu.memory_space<vmem>>, %arg3: memref<1x32xi32, #tpu.memory_space<vmem>>, %arg4: memref<1x32xi32, #tpu.memory_space<vmem>>, %arg5: memref<1x32xi32, #tpu.memory_space<vmem>>, %arg6: memref<1x16xi32, #tpu.memory_space<vmem>>, %arg7: memref<12x64xf32, #tpu.memory_space<vmem>>, %arg8: memref<16x64xf32, #tpu.memory_space<vmem>>, %arg9: memref<8x64xf32, #tpu.memory_space<vmem>>, %arg10: memref<3x64xf32, #tpu.memory_space<vmem>>, %arg11: memref<3x64x32xf32, #tpu.memory_space<vmem>>, %arg12: memref<3x3x32xf32, #tpu.memory_space<vmem>>, %arg13: memref<128x32xf32, #tpu.memory_space<vmem>>, %arg14: memref<96x32xf32, #tpu.memory_space<vmem>>, %arg15: memref<96x32xf32, #tpu.memory_space<vmem>>, %arg16: memref<6x32x32xf32, #tpu.memory_space<vmem>>, %arg17: memref<3x3x32xf32, #tpu.memory_space<vmem>>, %arg18: memref<16x32xf32, #tpu.memory_space<vmem>>, %arg19: memref<32x32xf32, #tpu.memory_space<vmem>>, %arg20: memref<2x32xf32, #tpu.memory_space<vmem>>) attributes {dimension_semantics = [], scalar_prefetch = 0 : i64, scratch_operands = 0 : i64, tpu.core_type = #tpu.core_type<tc>} {
    %c0 = arith.constant 0 : index
    %c0_0 = arith.constant 0 : index
    %0 = vector.load %arg10[%c0, %c0_0] : memref<3x64xf32, #tpu.memory_space<vmem>>, vector<3x64xf32>
    %c0_1 = arith.constant 0 : index
    %c0_2 = arith.constant 0 : index
    %1 = vector.load %arg1[%c0_1, %c0_2] : memref<32x12xf32, #tpu.memory_space<vmem>>, vector<32x12xf32>
    %c0_3 = arith.constant 0 : index
    %c0_4 = arith.constant 0 : index
    %2 = vector.load %arg7[%c0_3, %c0_4] : memref<12x64xf32, #tpu.memory_space<vmem>>, vector<12x64xf32>
    %3 = vector.extract_strided_slice %0 {offsets = [0, 0], sizes = [1, 64], strides = [1, 1]} : vector<3x64xf32> to vector<1x64xf32>
    %c0_5 = arith.constant 0 : index
    %c0_6 = arith.constant 0 : index
    %c0_7 = arith.constant 0 : index
    %4 = vector.load %arg11[%c0_5, %c0_6, %c0_7] : memref<3x64x32xf32, #tpu.memory_space<vmem>>, vector<1x64x32xf32>
    %5 = vector.shape_cast %4 : vector<1x64x32xf32> to vector<64x32xf32>
    %c0_8 = arith.constant 0 : index
    %c0_9 = arith.constant 0 : index
    %c0_10 = arith.constant 0 : index
    %6 = vector.load %arg12[%c0_8, %c0_9, %c0_10] : memref<3x3x32xf32, #tpu.memory_space<vmem>>, vector<1x3x32xf32>
    %7 = vector.shape_cast %6 : vector<1x3x32xf32> to vector<3x32xf32>
    %cst = arith.constant dense<0.000000e+00> : vector<32x64xf32>
    %8 = tpu.matmul %1, %2, %cst {dimension_numbers = #tpu.dot_dimension_numbers<[1], [0], [0], [1], [0, 0, 1, 1], [], []>} : vector<32x12xf32>, vector<12x64xf32>, vector<32x64xf32> -> vector<32x64xf32>
    %9 = vector.broadcast %3 : vector<1x64xf32> to vector<32x64xf32>
    %10 = arith.addf %8, %9 : vector<32x64xf32>
    %cst_11 = arith.constant 0.000000e+00 : f32
    %11 = vector.broadcast %cst_11 : f32 to vector<32x64xf32>
    %12 = arith.maximumf %10, %11 : vector<32x64xf32>
    %cst_12 = arith.constant dense<0.000000e+00> : vector<32x32xf32>
    %13 = tpu.matmul %12, %5, %cst_12 {dimension_numbers = #tpu.dot_dimension_numbers<[1], [0], [0], [1], [0, 0, 1, 1], [], []>} : vector<32x64xf32>, vector<64x32xf32>, vector<32x32xf32> -> vector<32x32xf32>
    %14 = vector.extract_strided_slice %7 {offsets = [0, 0], sizes = [1, 32], strides = [1, 1]} : vector<3x32xf32> to vector<1x32xf32>
    %15 = vector.broadcast %14 : vector<1x32xf32> to vector<32x32xf32>
    %16 = arith.addf %13, %15 : vector<32x32xf32>
    %cst_13 = arith.constant 0.000000e+00 : f32
    %17 = vector.broadcast %cst_13 : f32 to vector<32x32xf32>
    %18 = arith.maximumf %16, %17 : vector<32x32xf32>
    %19 = vector.extract_strided_slice %7 {offsets = [1, 0], sizes = [1, 32], strides = [1, 1]} : vector<3x32xf32> to vector<1x32xf32>
    %20 = vector.broadcast %19 : vector<1x32xf32> to vector<32x32xf32>
    %21 = arith.mulf %18, %20 : vector<32x32xf32>
    %22 = vector.extract_strided_slice %7 {offsets = [2, 0], sizes = [1, 32], strides = [1, 1]} : vector<3x32xf32> to vector<1x32xf32>
    %23 = vector.broadcast %22 : vector<1x32xf32> to vector<32x32xf32>
    %24 = arith.addf %21, %23 : vector<32x32xf32>
    %c0_14 = arith.constant 0 : index
    %c0_15 = arith.constant 0 : index
    %25 = vector.load %arg0[%c0_14, %c0_15] : memref<16x16xf32, #tpu.memory_space<vmem>>, vector<16x16xf32>
    %c0_16 = arith.constant 0 : index
    %c0_17 = arith.constant 0 : index
    %26 = vector.load %arg8[%c0_16, %c0_17] : memref<16x64xf32, #tpu.memory_space<vmem>>, vector<16x64xf32>
    %27 = vector.extract_strided_slice %0 {offsets = [1, 0], sizes = [1, 64], strides = [1, 1]} : vector<3x64xf32> to vector<1x64xf32>
    %c1 = arith.constant 1 : index
    %c0_18 = arith.constant 0 : index
    %c0_19 = arith.constant 0 : index
    %28 = vector.load %arg11[%c1, %c0_18, %c0_19] : memref<3x64x32xf32, #tpu.memory_space<vmem>>, vector<1x64x32xf32>
    %29 = vector.shape_cast %28 : vector<1x64x32xf32> to vector<64x32xf32>
    %c1_20 = arith.constant 1 : index
    %c0_21 = arith.constant 0 : index
    %c0_22 = arith.constant 0 : index
    %30 = vector.load %arg12[%c1_20, %c0_21, %c0_22] : memref<3x3x32xf32, #tpu.memory_space<vmem>>, vector<1x3x32xf32>
    %31 = vector.shape_cast %30 : vector<1x3x32xf32> to vector<3x32xf32>
    %cst_23 = arith.constant dense<0.000000e+00> : vector<16x64xf32>
    %32 = tpu.matmul %25, %26, %cst_23 {dimension_numbers = #tpu.dot_dimension_numbers<[1], [0], [0], [1], [0, 0, 1, 1], [], []>} : vector<16x16xf32>, vector<16x64xf32>, vector<16x64xf32> -> vector<16x64xf32>
    %33 = vector.broadcast %27 : vector<1x64xf32> to vector<16x64xf32>
    %34 = arith.addf %32, %33 : vector<16x64xf32>
    %cst_24 = arith.constant 0.000000e+00 : f32
    %35 = vector.broadcast %cst_24 : f32 to vector<16x64xf32>
    %36 = arith.maximumf %34, %35 : vector<16x64xf32>
    %cst_25 = arith.constant dense<0.000000e+00> : vector<16x32xf32>
    %37 = tpu.matmul %36, %29, %cst_25 {dimension_numbers = #tpu.dot_dimension_numbers<[1], [0], [0], [1], [0, 0, 1, 1], [], []>} : vector<16x64xf32>, vector<64x32xf32>, vector<16x32xf32> -> vector<16x32xf32>
    %38 = vector.extract_strided_slice %31 {offsets = [0, 0], sizes = [1, 32], strides = [1, 1]} : vector<3x32xf32> to vector<1x32xf32>
    %39 = vector.broadcast %38 : vector<1x32xf32> to vector<16x32xf32>
    %40 = arith.addf %37, %39 : vector<16x32xf32>
    %cst_26 = arith.constant 0.000000e+00 : f32
    %41 = vector.broadcast %cst_26 : f32 to vector<16x32xf32>
    %42 = arith.maximumf %40, %41 : vector<16x32xf32>
    %43 = vector.extract_strided_slice %31 {offsets = [1, 0], sizes = [1, 32], strides = [1, 1]} : vector<3x32xf32> to vector<1x32xf32>
    %44 = vector.broadcast %43 : vector<1x32xf32> to vector<16x32xf32>
    %45 = arith.mulf %42, %44 : vector<16x32xf32>
    %46 = vector.extract_strided_slice %31 {offsets = [2, 0], sizes = [1, 32], strides = [1, 1]} : vector<3x32xf32> to vector<1x32xf32>
    %47 = vector.broadcast %46 : vector<1x32xf32> to vector<16x32xf32>
    %48 = arith.addf %45, %47 : vector<16x32xf32>
    %c0_27 = arith.constant 0 : index
    %c0_28 = arith.constant 0 : index
    %49 = vector.load %arg2[%c0_27, %c0_28] : memref<2x8xf32, #tpu.memory_space<vmem>>, vector<2x8xf32>
    %c0_29 = arith.constant 0 : index
    %c0_30 = arith.constant 0 : index
    %50 = vector.load %arg9[%c0_29, %c0_30] : memref<8x64xf32, #tpu.memory_space<vmem>>, vector<8x64xf32>
    %51 = vector.extract_strided_slice %0 {offsets = [2, 0], sizes = [1, 64], strides = [1, 1]} : vector<3x64xf32> to vector<1x64xf32>
    %c2 = arith.constant 2 : index
    %c0_31 = arith.constant 0 : index
    %c0_32 = arith.constant 0 : index
    %52 = vector.load %arg11[%c2, %c0_31, %c0_32] : memref<3x64x32xf32, #tpu.memory_space<vmem>>, vector<1x64x32xf32>
    %53 = vector.shape_cast %52 : vector<1x64x32xf32> to vector<64x32xf32>
    %c2_33 = arith.constant 2 : index
    %c0_34 = arith.constant 0 : index
    %c0_35 = arith.constant 0 : index
    %54 = vector.load %arg12[%c2_33, %c0_34, %c0_35] : memref<3x3x32xf32, #tpu.memory_space<vmem>>, vector<1x3x32xf32>
    %55 = vector.shape_cast %54 : vector<1x3x32xf32> to vector<3x32xf32>
    %cst_36 = arith.constant dense<0.000000e+00> : vector<2x64xf32>
    %56 = tpu.matmul %49, %50, %cst_36 {dimension_numbers = #tpu.dot_dimension_numbers<[1], [0], [0], [1], [0, 0, 1, 1], [], []>} : vector<2x8xf32>, vector<8x64xf32>, vector<2x64xf32> -> vector<2x64xf32>
    %57 = vector.broadcast %51 : vector<1x64xf32> to vector<2x64xf32>
    %58 = arith.addf %56, %57 : vector<2x64xf32>
    %cst_37 = arith.constant 0.000000e+00 : f32
    %59 = vector.broadcast %cst_37 : f32 to vector<2x64xf32>
    %60 = arith.maximumf %58, %59 : vector<2x64xf32>
    %cst_38 = arith.constant dense<0.000000e+00> : vector<2x32xf32>
    %61 = tpu.matmul %60, %53, %cst_38 {dimension_numbers = #tpu.dot_dimension_numbers<[1], [0], [0], [1], [0, 0, 1, 1], [], []>} : vector<2x64xf32>, vector<64x32xf32>, vector<2x32xf32> -> vector<2x32xf32>
    %62 = vector.extract_strided_slice %55 {offsets = [0, 0], sizes = [1, 32], strides = [1, 1]} : vector<3x32xf32> to vector<1x32xf32>
    %63 = vector.broadcast %62 : vector<1x32xf32> to vector<2x32xf32>
    %64 = arith.addf %61, %63 : vector<2x32xf32>
    %cst_39 = arith.constant 0.000000e+00 : f32
    %65 = vector.broadcast %cst_39 : f32 to vector<2x32xf32>
    %66 = arith.maximumf %64, %65 : vector<2x32xf32>
    %67 = vector.extract_strided_slice %55 {offsets = [1, 0], sizes = [1, 32], strides = [1, 1]} : vector<3x32xf32> to vector<1x32xf32>
    %68 = vector.broadcast %67 : vector<1x32xf32> to vector<2x32xf32>
    %69 = arith.mulf %66, %68 : vector<2x32xf32>
    %70 = vector.extract_strided_slice %55 {offsets = [2, 0], sizes = [1, 32], strides = [1, 1]} : vector<3x32xf32> to vector<1x32xf32>
    %71 = vector.broadcast %70 : vector<1x32xf32> to vector<2x32xf32>
    %72 = arith.addf %69, %71 : vector<2x32xf32>
    %c0_40 = arith.constant 0 : index
    %c0_41 = arith.constant 0 : index
    %73 = vector.load %arg3[%c0_40, %c0_41] : memref<1x32xi32, #tpu.memory_space<vmem>>, vector<1x32xi32>
    %74 = tpu.iota {dimensions = array<i32: 0>} : vector<16x32xi32>
    %75 = vector.shape_cast %73 : vector<1x32xi32> to vector<1x32xi32>
    %76 = vector.broadcast %75 : vector<1x32xi32> to vector<16x32xi32>
    %77 = arith.cmpi eq, %76, %74 : vector<16x32xi32>
    %78 = arith.extui %77 : vector<16x32xi1> to vector<16x32xi32>
    %79 = arith.sitofp %78 : vector<16x32xi32> to vector<16x32xf32>
    %c0_42 = arith.constant 0 : index
    %c0_43 = arith.constant 0 : index
    %80 = vector.load %arg4[%c0_42, %c0_43] : memref<1x32xi32, #tpu.memory_space<vmem>>, vector<1x32xi32>
    %81 = tpu.iota {dimensions = array<i32: 0>} : vector<16x32xi32>
    %82 = vector.shape_cast %80 : vector<1x32xi32> to vector<1x32xi32>
    %83 = vector.broadcast %82 : vector<1x32xi32> to vector<16x32xi32>
    %84 = arith.cmpi eq, %83, %81 : vector<16x32xi32>
    %85 = arith.extui %84 : vector<16x32xi1> to vector<16x32xi32>
    %86 = arith.sitofp %85 : vector<16x32xi32> to vector<16x32xf32>
    %c0_44 = arith.constant 0 : index
    %c0_45 = arith.constant 0 : index
    %87 = vector.load %arg5[%c0_44, %c0_45] : memref<1x32xi32, #tpu.memory_space<vmem>>, vector<1x32xi32>
    %88 = tpu.iota {dimensions = array<i32: 0>} : vector<2x32xi32>
    %89 = vector.shape_cast %87 : vector<1x32xi32> to vector<1x32xi32>
    %90 = vector.broadcast %89 : vector<1x32xi32> to vector<2x32xi32>
    %91 = arith.cmpi eq, %90, %88 : vector<2x32xi32>
    %92 = arith.extui %91 : vector<2x32xi1> to vector<2x32xi32>
    %93 = arith.sitofp %92 : vector<2x32xi32> to vector<2x32xf32>
    %c0_46 = arith.constant 0 : index
    %c0_47 = arith.constant 0 : index
    %94 = vector.load %arg6[%c0_46, %c0_47] : memref<1x16xi32, #tpu.memory_space<vmem>>, vector<1x16xi32>
    %95 = tpu.iota {dimensions = array<i32: 0>} : vector<2x16xi32>
    %96 = vector.shape_cast %94 : vector<1x16xi32> to vector<1x16xi32>
    %97 = vector.broadcast %96 : vector<1x16xi32> to vector<2x16xi32>
    %98 = arith.cmpi eq, %97, %95 : vector<2x16xi32>
    %99 = arith.extui %98 : vector<2x16xi1> to vector<2x16xi32>
    %100 = arith.sitofp %99 : vector<2x16xi32> to vector<2x16xf32>
    %cst_48 = arith.constant dense<0.000000e+00> : vector<32x32xf32>
    %101 = tpu.matmul %79, %48, %cst_48 {dimension_numbers = #tpu.dot_dimension_numbers<[0], [0], [1], [1], [0, 1, 1, 1], [], []>} : vector<16x32xf32>, vector<16x32xf32>, vector<32x32xf32> -> vector<32x32xf32>
    %cst_49 = arith.constant dense<0.000000e+00> : vector<32x32xf32>
    %102 = tpu.matmul %86, %48, %cst_49 {dimension_numbers = #tpu.dot_dimension_numbers<[0], [0], [1], [1], [0, 1, 1, 1], [], []>} : vector<16x32xf32>, vector<16x32xf32>, vector<32x32xf32> -> vector<32x32xf32>
    %cst_50 = arith.constant dense<0.000000e+00> : vector<32x32xf32>
    %103 = tpu.matmul %93, %72, %cst_50 {dimension_numbers = #tpu.dot_dimension_numbers<[0], [0], [1], [1], [0, 1, 1, 1], [], []>} : vector<2x32xf32>, vector<2x32xf32>, vector<32x32xf32> -> vector<32x32xf32>
    %cst_51 = arith.constant dense<0.000000e+00> : vector<16x32xf32>
    %104 = tpu.matmul %100, %72, %cst_51 {dimension_numbers = #tpu.dot_dimension_numbers<[0], [0], [1], [1], [0, 1, 1, 1], [], []>} : vector<2x16xf32>, vector<2x32xf32>, vector<16x32xf32> -> vector<16x32xf32>
    %c0_52 = arith.constant 0 : index
    %c0_53 = arith.constant 0 : index
    %105 = vector.load %arg13[%c0_52, %c0_53] : memref<128x32xf32, #tpu.memory_space<vmem>>, vector<128x32xf32>
    %106 = vector.extract_strided_slice %105 {offsets = [0, 0], sizes = [32, 32], strides = [1, 1]} : vector<128x32xf32> to vector<32x32xf32>
    %cst_54 = arith.constant dense<0.000000e+00> : vector<32x32xf32>
    %107 = tpu.matmul %101, %106, %cst_54 {dimension_numbers = #tpu.dot_dimension_numbers<[1], [0], [0], [1], [0, 0, 1, 1], [], []>} : vector<32x32xf32>, vector<32x32xf32>, vector<32x32xf32> -> vector<32x32xf32>
    %108 = vector.extract_strided_slice %105 {offsets = [32, 0], sizes = [32, 32], strides = [1, 1]} : vector<128x32xf32> to vector<32x32xf32>
    %cst_55 = arith.constant dense<0.000000e+00> : vector<32x32xf32>
    %109 = tpu.matmul %102, %108, %cst_55 {dimension_numbers = #tpu.dot_dimension_numbers<[1], [0], [0], [1], [0, 0, 1, 1], [], []>} : vector<32x32xf32>, vector<32x32xf32>, vector<32x32xf32> -> vector<32x32xf32>
    %110 = arith.addf %107, %109 : vector<32x32xf32>
    %111 = vector.extract_strided_slice %105 {offsets = [64, 0], sizes = [32, 32], strides = [1, 1]} : vector<128x32xf32> to vector<32x32xf32>
    %cst_56 = arith.constant dense<0.000000e+00> : vector<32x32xf32>
    %112 = tpu.matmul %24, %111, %cst_56 {dimension_numbers = #tpu.dot_dimension_numbers<[1], [0], [0], [1], [0, 0, 1, 1], [], []>} : vector<32x32xf32>, vector<32x32xf32>, vector<32x32xf32> -> vector<32x32xf32>
    %113 = arith.addf %110, %112 : vector<32x32xf32>
    %114 = vector.extract_strided_slice %105 {offsets = [96, 0], sizes = [32, 32], strides = [1, 1]} : vector<128x32xf32> to vector<32x32xf32>
    %cst_57 = arith.constant dense<0.000000e+00> : vector<32x32xf32>
    %115 = tpu.matmul %103, %114, %cst_57 {dimension_numbers = #tpu.dot_dimension_numbers<[1], [0], [0], [1], [0, 0, 1, 1], [], []>} : vector<32x32xf32>, vector<32x32xf32>, vector<32x32xf32> -> vector<32x32xf32>
    %116 = arith.addf %113, %115 : vector<32x32xf32>
    %c0_58 = arith.constant 0 : index
    %c0_59 = arith.constant 0 : index
    %c0_60 = arith.constant 0 : index
    %117 = vector.load %arg16[%c0_58, %c0_59, %c0_60] : memref<6x32x32xf32, #tpu.memory_space<vmem>>, vector<1x32x32xf32>
    %118 = vector.shape_cast %117 : vector<1x32x32xf32> to vector<32x32xf32>
    %c1_61 = arith.constant 1 : index
    %c0_62 = arith.constant 0 : index
    %c0_63 = arith.constant 0 : index
    %119 = vector.load %arg16[%c1_61, %c0_62, %c0_63] : memref<6x32x32xf32, #tpu.memory_space<vmem>>, vector<1x32x32xf32>
    %120 = vector.shape_cast %119 : vector<1x32x32xf32> to vector<32x32xf32>
    %c0_64 = arith.constant 0 : index
    %c0_65 = arith.constant 0 : index
    %c0_66 = arith.constant 0 : index
    %121 = vector.load %arg17[%c0_64, %c0_65, %c0_66] : memref<3x3x32xf32, #tpu.memory_space<vmem>>, vector<1x3x32xf32>
    %122 = vector.shape_cast %121 : vector<1x3x32xf32> to vector<3x32xf32>
    %123 = vector.extract_strided_slice %122 {offsets = [0, 0], sizes = [1, 32], strides = [1, 1]} : vector<3x32xf32> to vector<1x32xf32>
    %124 = vector.broadcast %123 : vector<1x32xf32> to vector<32x32xf32>
    %125 = arith.addf %116, %124 : vector<32x32xf32>
    %cst_67 = arith.constant 0.000000e+00 : f32
    %126 = vector.broadcast %cst_67 : f32 to vector<32x32xf32>
    %127 = arith.maximumf %125, %126 : vector<32x32xf32>
    %128 = math.absf %125 : vector<32x32xf32>
    %cst_68 = arith.constant 0.000000e+00 : f32
    %129 = vector.broadcast %cst_68 : f32 to vector<32x32xf32>
    %130 = arith.subf %129, %128 : vector<32x32xf32>
    %131 = math.exp %130 : vector<32x32xf32>
    %132 = math.log1p %131 : vector<32x32xf32>
    %133 = arith.addf %127, %132 : vector<32x32xf32>
    %cst_69 = arith.constant dense<0.000000e+00> : vector<32x32xf32>
    %134 = tpu.matmul %133, %118, %cst_69 {dimension_numbers = #tpu.dot_dimension_numbers<[1], [0], [0], [1], [0, 0, 1, 1], [], []>} : vector<32x32xf32>, vector<32x32xf32>, vector<32x32xf32> -> vector<32x32xf32>
    %135 = vector.extract_strided_slice %122 {offsets = [1, 0], sizes = [1, 32], strides = [1, 1]} : vector<3x32xf32> to vector<1x32xf32>
    %136 = vector.broadcast %135 : vector<1x32xf32> to vector<32x32xf32>
    %137 = arith.addf %134, %136 : vector<32x32xf32>
    %cst_70 = arith.constant 0.000000e+00 : f32
    %138 = vector.broadcast %cst_70 : f32 to vector<32x32xf32>
    %139 = arith.maximumf %137, %138 : vector<32x32xf32>
    %140 = math.absf %137 : vector<32x32xf32>
    %cst_71 = arith.constant 0.000000e+00 : f32
    %141 = vector.broadcast %cst_71 : f32 to vector<32x32xf32>
    %142 = arith.subf %141, %140 : vector<32x32xf32>
    %143 = math.exp %142 : vector<32x32xf32>
    %144 = math.log1p %143 : vector<32x32xf32>
    %145 = arith.addf %139, %144 : vector<32x32xf32>
    %cst_72 = arith.constant dense<0.000000e+00> : vector<32x32xf32>
    %146 = tpu.matmul %145, %120, %cst_72 {dimension_numbers = #tpu.dot_dimension_numbers<[1], [0], [0], [1], [0, 0, 1, 1], [], []>} : vector<32x32xf32>, vector<32x32xf32>, vector<32x32xf32> -> vector<32x32xf32>
    %147 = vector.extract_strided_slice %122 {offsets = [2, 0], sizes = [1, 32], strides = [1, 1]} : vector<3x32xf32> to vector<1x32xf32>
    %148 = vector.broadcast %147 : vector<1x32xf32> to vector<32x32xf32>
    %149 = arith.addf %146, %148 : vector<32x32xf32>
    %cst_73 = arith.constant dense<0.000000e+00> : vector<16xf32>
    %150 = vector.multi_reduction <add>, %79, %cst_73 [1] : vector<16x32xf32> to vector<16xf32>
    %151 = vector.shape_cast %150 : vector<16xf32> to vector<16x1xf32>
    %cst_74 = arith.constant 1.000000e+00 : f32
    %152 = vector.broadcast %cst_74 : f32 to vector<16x1xf32>
    %153 = arith.maximumf %151, %152 : vector<16x1xf32>
    %cst_75 = arith.constant dense<0.000000e+00> : vector<16x32xf32>
    %154 = tpu.matmul %79, %149, %cst_75 {dimension_numbers = #tpu.dot_dimension_numbers<[1], [0], [0], [1], [0, 0, 1, 1], [], []>} : vector<16x32xf32>, vector<32x32xf32>, vector<16x32xf32> -> vector<16x32xf32>
    %155 = tpu.reciprocal %153 {approx = true} : vector<16x1xf32> -> vector<16x1xf32>
    %156 = vector.broadcast %155 : vector<16x1xf32> to vector<16x32xf32>
    %157 = arith.mulf %154, %156 : vector<16x32xf32>
    %c0_76 = arith.constant 0 : index
    %c0_77 = arith.constant 0 : index
    %158 = vector.load %arg14[%c0_76, %c0_77] : memref<96x32xf32, #tpu.memory_space<vmem>>, vector<96x32xf32>
    %159 = vector.extract_strided_slice %158 {offsets = [0, 0], sizes = [32, 32], strides = [1, 1]} : vector<96x32xf32> to vector<32x32xf32>
    %cst_78 = arith.constant dense<0.000000e+00> : vector<16x32xf32>
    %160 = tpu.matmul %48, %159, %cst_78 {dimension_numbers = #tpu.dot_dimension_numbers<[1], [0], [0], [1], [0, 0, 1, 1], [], []>} : vector<16x32xf32>, vector<32x32xf32>, vector<16x32xf32> -> vector<16x32xf32>
    %161 = vector.extract_strided_slice %158 {offsets = [32, 0], sizes = [32, 32], strides = [1, 1]} : vector<96x32xf32> to vector<32x32xf32>
    %cst_79 = arith.constant dense<0.000000e+00> : vector<16x32xf32>
    %162 = tpu.matmul %157, %161, %cst_79 {dimension_numbers = #tpu.dot_dimension_numbers<[1], [0], [0], [1], [0, 0, 1, 1], [], []>} : vector<16x32xf32>, vector<32x32xf32>, vector<16x32xf32> -> vector<16x32xf32>
    %163 = arith.addf %160, %162 : vector<16x32xf32>
    %164 = vector.extract_strided_slice %158 {offsets = [64, 0], sizes = [32, 32], strides = [1, 1]} : vector<96x32xf32> to vector<32x32xf32>
    %cst_80 = arith.constant dense<0.000000e+00> : vector<16x32xf32>
    %165 = tpu.matmul %104, %164, %cst_80 {dimension_numbers = #tpu.dot_dimension_numbers<[1], [0], [0], [1], [0, 0, 1, 1], [], []>} : vector<16x32xf32>, vector<32x32xf32>, vector<16x32xf32> -> vector<16x32xf32>
    %166 = arith.addf %163, %165 : vector<16x32xf32>
    %c2_81 = arith.constant 2 : index
    %c0_82 = arith.constant 0 : index
    %c0_83 = arith.constant 0 : index
    %167 = vector.load %arg16[%c2_81, %c0_82, %c0_83] : memref<6x32x32xf32, #tpu.memory_space<vmem>>, vector<1x32x32xf32>
    %168 = vector.shape_cast %167 : vector<1x32x32xf32> to vector<32x32xf32>
    %c3 = arith.constant 3 : index
    %c0_84 = arith.constant 0 : index
    %c0_85 = arith.constant 0 : index
    %169 = vector.load %arg16[%c3, %c0_84, %c0_85] : memref<6x32x32xf32, #tpu.memory_space<vmem>>, vector<1x32x32xf32>
    %170 = vector.shape_cast %169 : vector<1x32x32xf32> to vector<32x32xf32>
    %c1_86 = arith.constant 1 : index
    %c0_87 = arith.constant 0 : index
    %c0_88 = arith.constant 0 : index
    %171 = vector.load %arg17[%c1_86, %c0_87, %c0_88] : memref<3x3x32xf32, #tpu.memory_space<vmem>>, vector<1x3x32xf32>
    %172 = vector.shape_cast %171 : vector<1x3x32xf32> to vector<3x32xf32>
    %173 = vector.extract_strided_slice %172 {offsets = [0, 0], sizes = [1, 32], strides = [1, 1]} : vector<3x32xf32> to vector<1x32xf32>
    %174 = vector.broadcast %173 : vector<1x32xf32> to vector<16x32xf32>
    %175 = arith.addf %166, %174 : vector<16x32xf32>
    %cst_89 = arith.constant 0.000000e+00 : f32
    %176 = vector.broadcast %cst_89 : f32 to vector<16x32xf32>
    %177 = arith.maximumf %175, %176 : vector<16x32xf32>
    %178 = math.absf %175 : vector<16x32xf32>
    %cst_90 = arith.constant 0.000000e+00 : f32
    %179 = vector.broadcast %cst_90 : f32 to vector<16x32xf32>
    %180 = arith.subf %179, %178 : vector<16x32xf32>
    %181 = math.exp %180 : vector<16x32xf32>
    %182 = math.log1p %181 : vector<16x32xf32>
    %183 = arith.addf %177, %182 : vector<16x32xf32>
    %cst_91 = arith.constant dense<0.000000e+00> : vector<16x32xf32>
    %184 = tpu.matmul %183, %168, %cst_91 {dimension_numbers = #tpu.dot_dimension_numbers<[1], [0], [0], [1], [0, 0, 1, 1], [], []>} : vector<16x32xf32>, vector<32x32xf32>, vector<16x32xf32> -> vector<16x32xf32>
    %185 = vector.extract_strided_slice %172 {offsets = [1, 0], sizes = [1, 32], strides = [1, 1]} : vector<3x32xf32> to vector<1x32xf32>
    %186 = vector.broadcast %185 : vector<1x32xf32> to vector<16x32xf32>
    %187 = arith.addf %184, %186 : vector<16x32xf32>
    %cst_92 = arith.constant 0.000000e+00 : f32
    %188 = vector.broadcast %cst_92 : f32 to vector<16x32xf32>
    %189 = arith.maximumf %187, %188 : vector<16x32xf32>
    %190 = math.absf %187 : vector<16x32xf32>
    %cst_93 = arith.constant 0.000000e+00 : f32
    %191 = vector.broadcast %cst_93 : f32 to vector<16x32xf32>
    %192 = arith.subf %191, %190 : vector<16x32xf32>
    %193 = math.exp %192 : vector<16x32xf32>
    %194 = math.log1p %193 : vector<16x32xf32>
    %195 = arith.addf %189, %194 : vector<16x32xf32>
    %cst_94 = arith.constant dense<0.000000e+00> : vector<16x32xf32>
    %196 = tpu.matmul %195, %170, %cst_94 {dimension_numbers = #tpu.dot_dimension_numbers<[1], [0], [0], [1], [0, 0, 1, 1], [], []>} : vector<16x32xf32>, vector<32x32xf32>, vector<16x32xf32> -> vector<16x32xf32>
    %197 = vector.extract_strided_slice %172 {offsets = [2, 0], sizes = [1, 32], strides = [1, 1]} : vector<3x32xf32> to vector<1x32xf32>
    %198 = vector.broadcast %197 : vector<1x32xf32> to vector<16x32xf32>
    %199 = arith.addf %196, %198 : vector<16x32xf32>
    %cst_95 = arith.constant dense<0.000000e+00> : vector<2xf32>
    %200 = vector.multi_reduction <add>, %93, %cst_95 [1] : vector<2x32xf32> to vector<2xf32>
    %201 = vector.shape_cast %200 : vector<2xf32> to vector<2x1xf32>
    %cst_96 = arith.constant 1.000000e+00 : f32
    %202 = vector.broadcast %cst_96 : f32 to vector<2x1xf32>
    %203 = arith.maximumf %201, %202 : vector<2x1xf32>
    %cst_97 = arith.constant dense<0.000000e+00> : vector<2xf32>
    %204 = vector.multi_reduction <add>, %100, %cst_97 [1] : vector<2x16xf32> to vector<2xf32>
    %205 = vector.shape_cast %204 : vector<2xf32> to vector<2x1xf32>
    %cst_98 = arith.constant 1.000000e+00 : f32
    %206 = vector.broadcast %cst_98 : f32 to vector<2x1xf32>
    %207 = arith.maximumf %205, %206 : vector<2x1xf32>
    %cst_99 = arith.constant dense<0.000000e+00> : vector<2x32xf32>
    %208 = tpu.matmul %93, %149, %cst_99 {dimension_numbers = #tpu.dot_dimension_numbers<[1], [0], [0], [1], [0, 0, 1, 1], [], []>} : vector<2x32xf32>, vector<32x32xf32>, vector<2x32xf32> -> vector<2x32xf32>
    %209 = tpu.reciprocal %203 {approx = true} : vector<2x1xf32> -> vector<2x1xf32>
    %210 = vector.broadcast %209 : vector<2x1xf32> to vector<2x32xf32>
    %211 = arith.mulf %208, %210 : vector<2x32xf32>
    %cst_100 = arith.constant dense<0.000000e+00> : vector<2x32xf32>
    %212 = tpu.matmul %100, %199, %cst_100 {dimension_numbers = #tpu.dot_dimension_numbers<[1], [0], [0], [1], [0, 0, 1, 1], [], []>} : vector<2x16xf32>, vector<16x32xf32>, vector<2x32xf32> -> vector<2x32xf32>
    %213 = tpu.reciprocal %207 {approx = true} : vector<2x1xf32> -> vector<2x1xf32>
    %214 = vector.broadcast %213 : vector<2x1xf32> to vector<2x32xf32>
    %215 = arith.mulf %212, %214 : vector<2x32xf32>
    %c0_101 = arith.constant 0 : index
    %c0_102 = arith.constant 0 : index
    %216 = vector.load %arg15[%c0_101, %c0_102] : memref<96x32xf32, #tpu.memory_space<vmem>>, vector<96x32xf32>
    %217 = vector.extract_strided_slice %216 {offsets = [0, 0], sizes = [32, 32], strides = [1, 1]} : vector<96x32xf32> to vector<32x32xf32>
    %cst_103 = arith.constant dense<0.000000e+00> : vector<2x32xf32>
    %218 = tpu.matmul %211, %217, %cst_103 {dimension_numbers = #tpu.dot_dimension_numbers<[1], [0], [0], [1], [0, 0, 1, 1], [], []>} : vector<2x32xf32>, vector<32x32xf32>, vector<2x32xf32> -> vector<2x32xf32>
    %219 = vector.extract_strided_slice %216 {offsets = [32, 0], sizes = [32, 32], strides = [1, 1]} : vector<96x32xf32> to vector<32x32xf32>
    %cst_104 = arith.constant dense<0.000000e+00> : vector<2x32xf32>
    %220 = tpu.matmul %215, %219, %cst_104 {dimension_numbers = #tpu.dot_dimension_numbers<[1], [0], [0], [1], [0, 0, 1, 1], [], []>} : vector<2x32xf32>, vector<32x32xf32>, vector<2x32xf32> -> vector<2x32xf32>
    %221 = arith.addf %218, %220 : vector<2x32xf32>
    %222 = vector.extract_strided_slice %216 {offsets = [64, 0], sizes = [32, 32], strides = [1, 1]} : vector<96x32xf32> to vector<32x32xf32>
    %cst_105 = arith.constant dense<0.000000e+00> : vector<2x32xf32>
    %223 = tpu.matmul %72, %222, %cst_105 {dimension_numbers = #tpu.dot_dimension_numbers<[1], [0], [0], [1], [0, 0, 1, 1], [], []>} : vector<2x32xf32>, vector<32x32xf32>, vector<2x32xf32> -> vector<2x32xf32>
    %224 = arith.addf %221, %223 : vector<2x32xf32>
    %c4 = arith.constant 4 : index
    %c0_106 = arith.constant 0 : index
    %c0_107 = arith.constant 0 : index
    %225 = vector.load %arg16[%c4, %c0_106, %c0_107] : memref<6x32x32xf32, #tpu.memory_space<vmem>>, vector<1x32x32xf32>
    %226 = vector.shape_cast %225 : vector<1x32x32xf32> to vector<32x32xf32>
    %c5 = arith.constant 5 : index
    %c0_108 = arith.constant 0 : index
    %c0_109 = arith.constant 0 : index
    %227 = vector.load %arg16[%c5, %c0_108, %c0_109] : memref<6x32x32xf32, #tpu.memory_space<vmem>>, vector<1x32x32xf32>
    %228 = vector.shape_cast %227 : vector<1x32x32xf32> to vector<32x32xf32>
    %c2_110 = arith.constant 2 : index
    %c0_111 = arith.constant 0 : index
    %c0_112 = arith.constant 0 : index
    %229 = vector.load %arg17[%c2_110, %c0_111, %c0_112] : memref<3x3x32xf32, #tpu.memory_space<vmem>>, vector<1x3x32xf32>
    %230 = vector.shape_cast %229 : vector<1x3x32xf32> to vector<3x32xf32>
    %231 = vector.extract_strided_slice %230 {offsets = [0, 0], sizes = [1, 32], strides = [1, 1]} : vector<3x32xf32> to vector<1x32xf32>
    %232 = vector.broadcast %231 : vector<1x32xf32> to vector<2x32xf32>
    %233 = arith.addf %224, %232 : vector<2x32xf32>
    %cst_113 = arith.constant 0.000000e+00 : f32
    %234 = vector.broadcast %cst_113 : f32 to vector<2x32xf32>
    %235 = arith.maximumf %233, %234 : vector<2x32xf32>
    %236 = math.absf %233 : vector<2x32xf32>
    %cst_114 = arith.constant 0.000000e+00 : f32
    %237 = vector.broadcast %cst_114 : f32 to vector<2x32xf32>
    %238 = arith.subf %237, %236 : vector<2x32xf32>
    %239 = math.exp %238 : vector<2x32xf32>
    %240 = math.log1p %239 : vector<2x32xf32>
    %241 = arith.addf %235, %240 : vector<2x32xf32>
    %cst_115 = arith.constant dense<0.000000e+00> : vector<2x32xf32>
    %242 = tpu.matmul %241, %226, %cst_115 {dimension_numbers = #tpu.dot_dimension_numbers<[1], [0], [0], [1], [0, 0, 1, 1], [], []>} : vector<2x32xf32>, vector<32x32xf32>, vector<2x32xf32> -> vector<2x32xf32>
    %243 = vector.extract_strided_slice %230 {offsets = [1, 0], sizes = [1, 32], strides = [1, 1]} : vector<3x32xf32> to vector<1x32xf32>
    %244 = vector.broadcast %243 : vector<1x32xf32> to vector<2x32xf32>
    %245 = arith.addf %242, %244 : vector<2x32xf32>
    %cst_116 = arith.constant 0.000000e+00 : f32
    %246 = vector.broadcast %cst_116 : f32 to vector<2x32xf32>
    %247 = arith.maximumf %245, %246 : vector<2x32xf32>
    %248 = math.absf %245 : vector<2x32xf32>
    %cst_117 = arith.constant 0.000000e+00 : f32
    %249 = vector.broadcast %cst_117 : f32 to vector<2x32xf32>
    %250 = arith.subf %249, %248 : vector<2x32xf32>
    %251 = math.exp %250 : vector<2x32xf32>
    %252 = math.log1p %251 : vector<2x32xf32>
    %253 = arith.addf %247, %252 : vector<2x32xf32>
    %cst_118 = arith.constant dense<0.000000e+00> : vector<2x32xf32>
    %254 = tpu.matmul %253, %228, %cst_118 {dimension_numbers = #tpu.dot_dimension_numbers<[1], [0], [0], [1], [0, 0, 1, 1], [], []>} : vector<2x32xf32>, vector<32x32xf32>, vector<2x32xf32> -> vector<2x32xf32>
    %255 = vector.extract_strided_slice %230 {offsets = [2, 0], sizes = [1, 32], strides = [1, 1]} : vector<3x32xf32> to vector<1x32xf32>
    %256 = vector.broadcast %255 : vector<1x32xf32> to vector<2x32xf32>
    %257 = arith.addf %254, %256 : vector<2x32xf32>
    %c0_119 = arith.constant 0 : index
    %c0_120 = arith.constant 0 : index
    %258 = vector.load %arg18[%c0_119, %c0_120] : memref<16x32xf32, #tpu.memory_space<vmem>>, vector<16x32xf32>
    tpu.vector_store %arg18[%c0_119, %c0_120], %199 {strides = array<i32>} : memref<16x32xf32, #tpu.memory_space<vmem>>, vector<16x32xf32>,
    %c0_121 = arith.constant 0 : index
    %c0_122 = arith.constant 0 : index
    %259 = vector.load %arg19[%c0_121, %c0_122] : memref<32x32xf32, #tpu.memory_space<vmem>>, vector<32x32xf32>
    tpu.vector_store %arg19[%c0_121, %c0_122], %149 {strides = array<i32>} : memref<32x32xf32, #tpu.memory_space<vmem>>, vector<32x32xf32>,
    %c0_123 = arith.constant 0 : index
    %c0_124 = arith.constant 0 : index
    %260 = vector.load %arg20[%c0_123, %c0_124] : memref<2x32xf32, #tpu.memory_space<vmem>>, vector<2x32xf32>
    tpu.vector_store %arg20[%c0_123, %c0_124], %257 {strides = array<i32>} : memref<2x32xf32, #tpu.memory_space<vmem>>, vector<2x32xf32>,
    return
  }
}

</mosaic_0001>

<llo_original>
// kernel: megnet_block_forward.1
$region0: #{megnet_block_forward.1}
  #allocation0 [shape = 'u32[]', space=smem, size = 0x4, offset = 0x4, fixed_abs, tag = 'smem constant byte address 0x4 - core index']
  #allocation1 [shape = 'u32[144,128]{1,0:T(1,128)}', space=vmem, size = 0x12000, scoped, tag = 'internal scratch']
  %s0 = inlined_call_operand.vmem [shape: f32[16,16], index: 0, kind: input, shape index: {}]
  %s1 = inlined_call_operand.vmem [shape: f32[32,12], index: 1, kind: input, shape index: {}]
  %s2 = inlined_call_operand.vmem [shape: f32[2,8], index: 2, kind: input, shape index: {}]
  %s3 = inlined_call_operand.vmem [shape: s32[1,32], index: 3, kind: input, shape index: {}]
  %s4 = inlined_call_operand.vmem [shape: s32[1,32], index: 4, kind: input, shape index: {}]
  %s5 = inlined_call_operand.vmem [shape: s32[1,32], index: 5, kind: input, shape index: {}]
  %s6 = inlined_call_operand.vmem [shape: s32[1,16], index: 6, kind: input, shape index: {}]
  %s7 = inlined_call_operand.vmem [shape: f32[12,64], index: 7, kind: input, shape index: {}]
  %s8 = inlined_call_operand.vmem [shape: f32[16,64], index: 8, kind: input, shape index: {}]
  %s9 = inlined_call_operand.vmem [shape: f32[8,64], index: 9, kind: input, shape index: {}]
  %s10 = inlined_call_operand.vmem [shape: f32[3,64], index: 10, kind: input, shape index: {}]
  %s11 = inlined_call_operand.vmem [shape: f32[3,64,32], index: 11, kind: input, shape index: {}]
  %s12 = inlined_call_operand.vmem [shape: f32[3,3,32], index: 12, kind: input, shape index: {}]
  %s13 = inlined_call_operand.vmem [shape: f32[128,32], index: 13, kind: input, shape index: {}]
  %s14 = inlined_call_operand.vmem [shape: f32[96,32], index: 14, kind: input, shape index: {}]
  %s15 = inlined_call_operand.vmem [shape: f32[96,32], index: 15, kind: input, shape index: {}]
  %s16 = inlined_call_operand.vmem [shape: f32[6,32,32], index: 16, kind: input, shape index: {}]
  %s17 = inlined_call_operand.vmem [shape: f32[3,3,32], index: 17, kind: input, shape index: {}]
  %s18 = inlined_call_operand.hbm [shape: f32[16,32], index: 18, kind: output, shape index: {0}]
  %s19 = inlined_call_operand.hbm [shape: f32[32,32], index: 19, kind: output, shape index: {1}]
  %s20 = inlined_call_operand.hbm [shape: f32[2,32], index: 20, kind: output, shape index: {2}]
  %21 = xla_tuple %s18, %s19, %s20
  %s22 = sld [smem:[#allocation0]]
  $region98: #{megnet_block_forward.1} parent=0
    _
  %s24 = ssub.s32 1, %s22
  %s25 = scalar_select 0, %s24, %s22
  $region1: #{megnet_block_forward.1} parent=0
    #allocation2 [shape = 'u8[8192]{0}', space=vmem, size = 0x2000, scoped, tag = 'output window, operand 0, single buffered']
    #allocation3 [shape = 's32[1]{0}', space=sflag, size = 0x4, scoped, tag = 'scoped memory for megnet_block_forward.1']
    #allocation4 [shape = 'u8[16384]{0}', space=vmem, size = 0x4000, scoped, tag = 'output window, operand 1, single buffered']
    #allocation5 [shape = 's32[1]{0}', space=sflag, size = 0x4, scoped, tag = 'scoped memory for megnet_block_forward.1']
    #allocation6 [shape = 'u8[1024]{0}', space=vmem, size = 0x400, scoped, tag = 'output window, operand 2, single buffered']
    %26 = vsyncpa [#allocation3], 0
    %27 = vsyncpa [#allocation5], 0
    // Predicated region
    $region2: #{megnet_block_forward.1} parent=1 // pred_check
      _
    $region3: #{megnet_block_forward.1} parent=1 // pred_check_branch
      %29 = sbr.rel (0) target = $region5
    $region4: #{megnet_block_forward.1} parent=1 // pred_region
      _
    $region5: #{megnet_block_forward.1} parent=1 // pred_fallthru
      _
    // Predicated region
    $region6: #{megnet_block_forward.1} parent=1 // pred_check
      _
    $region7: #{megnet_block_forward.1} parent=1 // pred_check_branch
      %31 = sbr.rel (0) target = $region9
    $region8: #{megnet_block_forward.1} parent=1 // pred_region
      _
    $region9: #{megnet_block_forward.1} parent=1 // pred_fallthru
      _
    // Predicated region
    $region10: #{megnet_block_forward.1} parent=1 // pred_check
      _
    $region11: #{megnet_block_forward.1} parent=1 // pred_check_branch
      %33 = sbr.rel (0) target = $region13
    $region12: #{megnet_block_forward.1} parent=1 // pred_region
      _
    $region13: #{megnet_block_forward.1} parent=1 // pred_fallthru
      _
    // Predicated region
    $region14: #{megnet_block_forward.1} parent=1 // pred_check
      _
    $region15: #{megnet_block_forward.1} parent=1 // pred_check_branch
      %35 = sbr.rel (0) target = $region17
    $region16: #{megnet_block_forward.1} parent=1 // pred_region
      _
    $region17: #{megnet_block_forward.1} parent=1 // pred_fallthru
      _
    // Predicated region
    $region18: #{megnet_block_forward.1} parent=1 // pred_check
      _
    $region19: #{megnet_block_forward.1} parent=1 // pred_check_branch
      %37 = sbr.rel (0) target = $region21
    $region20: #{megnet_block_forward.1} parent=1 // pred_region
      _
    $region21: #{megnet_block_forward.1} parent=1 // pred_fallthru
      _
    // Predicated region
    $region22: #{megnet_block_forward.1} parent=1 // pred_check
      _
    $region23: #{megnet_block_forward.1} parent=1 // pred_check_branch
      %39 = sbr.rel (0) target = $region25
    $region24: #{megnet_block_forward.1} parent=1 // pred_region
      _
    $region25: #{megnet_block_forward.1} parent=1 // pred_fallthru
      _
    // Predicated region
    $region26: #{megnet_block_forward.1} parent=1 // pred_check
      _
    $region27: #{megnet_block_forward.1} parent=1 // pred_check_branch
      %41 = sbr.rel (0) target = $region29
    $region28: #{megnet_block_forward.1} parent=1 // pred_region
      _
    $region29: #{megnet_block_forward.1} parent=1 // pred_fallthru
      _
    // Predicated region
    $region30: #{megnet_block_forward.1} parent=1 // pred_check
      _
    $region31: #{megnet_block_forward.1} parent=1 // pred_check_branch
      %43 = sbr.rel (0) target = $region33
    $region32: #{megnet_block_forward.1} parent=1 // pred_region
      _
    $region33: #{megnet_block_forward.1} parent=1 // pred_fallthru
      _
    // Predicated region
    $region34: #{megnet_block_forward.1} parent=1 // pred_check
      _
    $region35: #{megnet_block_forward.1} parent=1 // pred_check_branch
      %45 = sbr.rel (0) target = $region37
    $region36: #{megnet_block_forward.1} parent=1 // pred_region
      _
    $region37: #{megnet_block_forward.1} parent=1 // pred_fallthru
      _
    // Predicated region
    $region38: #{megnet_block_forward.1} parent=1 // pred_check
      _
    $region39: #{megnet_block_forward.1} parent=1 // pred_check_branch
      %47 = sbr.rel (0) target = $region41
    $region40: #{megnet_block_forward.1} parent=1 // pred_region
      _
    $region41: #{megnet_block_forward.1} parent=1 // pred_fallthru
      _
    // Predicated region
    $region42: #{megnet_block_forward.1} parent=1 // pred_check
      _
    $region43: #{megnet_block_forward.1} parent=1 // pred_check_branch
      %49 = sbr.rel (0) target = $region45
    $region44: #{megnet_block_forward.1} parent=1 // pred_region
      _
    $region45: #{megnet_block_forward.1} parent=1 // pred_fallthru
      _
    // Predicated region
    $region46: #{megnet_block_forward.1} parent=1 // pred_check
      _
    $region47: #{megnet_block_forward.1} parent=1 // pred_check_branch
      %51 = sbr.rel (0) target = $region49
    $region48: #{megnet_block_forward.1} parent=1 // pred_region
      _
    $region49: #{megnet_block_forward.1} parent=1 // pred_fallthru
      _
    // Predicated region
    $region50: #{megnet_block_forward.1} parent=1 // pred_check
      _
    $region51: #{megnet_block_forward.1} parent=1 // pred_check_branch
      %53 = sbr.rel (0) target = $region53
    $region52: #{megnet_block_forward.1} parent=1 // pred_region
      _
    $region53: #{megnet_block_forward.1} parent=1 // pred_fallthru
      _
    // Predicated region
    $region54: #{megnet_block_forward.1} parent=1 // pred_check
      _
    $region55: #{megnet_block_forward.1} parent=1 // pred_check_branch
      %55 = sbr.rel (0) target = $region57
    $region56: #{megnet_block_forward.1} parent=1 // pred_region
      _
    $region57: #{megnet_block_forward.1} parent=1 // pred_fallthru
      _
    // Predicated region
    $region58: #{megnet_block_forward.1} parent=1 // pred_check
      _
    $region59: #{megnet_block_forward.1} parent=1 // pred_check_branch
      %57 = sbr.rel (0) target = $region61
    $region60: #{megnet_block_forward.1} parent=1 // pred_region
      _
    $region61: #{megnet_block_forward.1} parent=1 // pred_fallthru
      _
    // Predicated region
    $region62: #{megnet_block_forward.1} parent=1 // pred_check
      _
    $region63: #{megnet_block_forward.1} parent=1 // pred_check_branch
      %59 = sbr.rel (0) target = $region65
    $region64: #{megnet_block_forward.1} parent=1 // pred_region
      _
    $region65: #{megnet_block_forward.1} parent=1 // pred_fallthru
      _
    // Predicated region
    $region66: #{megnet_block_forward.1} parent=1 // pred_check
      _
    $region67: #{megnet_block_forward.1} parent=1 // pred_check_branch
      %61 = sbr.rel (0) target = $region69
    $region68: #{megnet_block_forward.1} parent=1 // pred_region
      _
    $region69: #{megnet_block_forward.1} parent=1 // pred_fallthru
      _
    // Predicated region
    $region70: #{megnet_block_forward.1} parent=1 // pred_check
      _
    $region71: #{megnet_block_forward.1} parent=1 // pred_check_branch
      %63 = sbr.rel (0) target = $region73
    $region72: #{megnet_block_forward.1} parent=1 // pred_region
      _
    $region73: #{megnet_block_forward.1} parent=1 // pred_fallthru
      _
    %v64 = vld [vmem:[%s10] sm:$0x7]
    %v65 = vld [vmem:[%s1] sm:$0xff]
    %v66 = vld [vmem:[%s1 + $0x8] sm:$0xff]
    %v67 = vld [vmem:[%s1 + $0x10] sm:$0xff]
    %v68 = vld [vmem:[%s1 + $0x18] sm:$0xff]
    %v69 = vld [vmem:[%s7] sm:$0xff]
    %v70 = vld [vmem:[%s7 + $0x8] sm:$0xf]
    %v71 = vld [vmem:[%s11] sm:$0xff]
    %v72 = vld [vmem:[%s11 + $0x8] sm:$0xff]
    %v73 = vld [vmem:[%s11 + $0x10] sm:$0xff]
    %v74 = vld [vmem:[%s11 + $0x18] sm:$0xff]
    %v75 = vld [vmem:[%s11 + $0x20] sm:$0xff]
    %v76 = vld [vmem:[%s11 + $0x28] sm:$0xff]
    %v77 = vld [vmem:[%s11 + $0x30] sm:$0xff]
    %v78 = vld [vmem:[%s11 + $0x38] sm:$0xff]
    %v79 = vld [vmem:[%s12] sm:$0x7]
    %v80 = vlaneseq
    %v81 = vshrl.u32 %v80, 7
    %v82 = vsub.s32 0, %v81
    %v83 = vrot.slane %v64, %v82
    %vm84 = vcmask 97280
    %v86 = vsel %vm84, %v65, 0
    %v89 = vsel %vm84, %v66, 0
    %v92 = vsel %vm84, %v67, 0
    %v95 = vsel %vm84, %v68, 0
    %vm97 = vcmask 1043456
    %v99 = vsel %vm97, %v70, 0
    %101 = vmatprep.subr.mxu0 0.0
    %102 = vmatpush1.msra.mxu0 %v69
    %103 = vmatprep.subr.mxu0 0.0
    %104 = vmatpush1.msra.mxu0 %v99
    %105 = vmatprep.subr.mxu0 0.0
    %106 = vmatpush1.msra.mxu0 0.0
    %107 = vmatprep.subr.mxu0 0.0
    %108 = vmatpush1.msra.mxu0 0.0
    %109 = vmatprep.subr.mxu0 0.0
    %110 = vmatpush1.msra.mxu0 0.0
    %111 = vmatprep.subr.mxu0 0.0
    %112 = vmatpush1.msra.mxu0 0.0
    %113 = vmatprep.subr.mxu0 0.0
    %114 = vmatpush1.msra.mxu0 0.0
    %115 = vmatprep.subr.mxu0 0.0
    %116 = vmatpush1.msra.mxu0 0.0
    %117 = vmatprep.subr.mxu0 0.0
    %118 = vmatpush1.msra.mxu0 0.0
    %119 = vmatprep.subr.mxu0 0.0
    %120 = vmatpush1.msra.mxu0 0.0
    %121 = vmatprep.subr.mxu0 0.0
    %122 = vmatpush1.msra.mxu0 0.0
    %123 = vmatprep.subr.mxu0 0.0
    %124 = vmatpush1.msra.mxu0 0.0
    %125 = vmatprep.subr.mxu0 0.0
    %126 = vmatpush1.msra.mxu0 0.0
    %127 = vmatprep.subr.mxu0 0.0
    %128 = vmatpush1.msra.mxu0 0.0
    %129 = vmatprep.subr.mxu0 0.0
    %130 = vmatpush1.msra.mxu0 0.0
    %131 = vmatprep.subr.mxu0 0.0
    %132 = vmatpush1.msra.mxu0 0.0
    %133 = vmatprep.subr.mxu0 0.0
    %134 = vmatpush1.msra.mxu0 0.0
    %135 = vmatprep.subr.mxu0 0.0
    %136 = vmatpush1.msra.mxu0 0.0
    %137 = vmatprep.subr.mxu0 0.0
    %138 = vmatpush1.msra.mxu0 0.0
    %139 = vmatprep.subr.mxu0 0.0
    %140 = vmatpush1.msra.mxu0 0.0
    %141 = vmatprep.subr.mxu0 0.0
    %142 = vmatpush1.msra.mxu0 0.0
    %143 = vmatprep.subr.mxu0 0.0
    %144 = vmatpush1.msra.mxu0 0.0
    %145 = vmatprep.subr.mxu0 0.0
    %146 = vmatpush1.msra.mxu0 0.0
    %147 = vmatprep.subr.mxu0 0.0
    %148 = vmatpush1.msra.mxu0 0.0
    %149 = vmatprep.subr.mxu0 0.0
    %150 = vmatpush1.msra.mxu0 0.0
    %151 = vmatprep.subr.mxu0 0.0
    %152 = vmatpush1.msra.mxu0 0.0
    %153 = vmatprep.subr.mxu0 0.0
    %154 = vmatpush1.msra.mxu0 0.0
    %155 = vmatprep.subr.mxu0 0.0
    %156 = vmatpush1.msra.mxu0 0.0
    %157 = vmatprep.subr.mxu0 0.0
    %158 = vmatpush1.msra.mxu0 0.0
    %159 = vmatprep.subr.mxu0 0.0
    %160 = vmatpush1.msra.mxu0 0.0
    %161 = vmatprep.subr.mxu0 0.0
    %162 = vmatpush1.msra.mxu0 0.0
    %163 = vmatprep.subr.mxu0 0.0
    %164 = vmatpush1.msra.mxu0 0.0
    %165 = vmatprep.mubr.f32.mxu0 0.0
    %166 = vmatmul.mubr.f32.gmra.mrb[0].mxu0 %v86
    %v167 = vpop.f32.mrb[0].mxu0
    %v168 = vadd.f32 %v83, %v167
    %v169 = vpop.f32.mrb[0].mxu0
    %170 = vmatprep.mubr.f32.mxu0 0.0
    %171 = vmatmul.mubr.f32.gmra.mrb[0].mxu0 %v89
    %v172 = vpop.f32.mrb[0].mxu0
    %v173 = vadd.f32 %v83, %v172
    %v174 = vpop.f32.mrb[0].mxu0
    %175 = vmatprep.mubr.f32.mxu0 0.0
    %176 = vmatmul.mubr.f32.gmra.mrb[0].mxu0 %v92
    %v177 = vpop.f32.mrb[0].mxu0
    %v178 = vadd.f32 %v83, %v177
    %v179 = vpop.f32.mrb[0].mxu0
    %180 = vmatprep.mubr.f32.mxu0 0.0
    %181 = vmatmul.mubr.f32.gmra.mrb[0].mxu0 %v95
    %v182 = vpop.f32.mrb[0].mxu0
    %v183 = vadd.f32 %v83, %v182
    %v184 = vpop.f32.mrb[0].mxu0
    %185 = vdwg.mxu0
    %v186 = vmax.f32 %v168, 0.0
    %v187 = vmax.f32 %v173, 0.0
    %v188 = vmax.f32 %v178, 0.0
    %v189 = vmax.f32 %v183, 0.0
    %v190 = vlaneseq
    %v191 = vshrl.u32 %v190, 7
    %v192 = vsub.s32 0, %v191
    %v193 = vrot.slane %v79, %v192
    %vm194 = vcmask 523264
    %v196 = vsel %vm194, %v186, 0
    %v199 = vsel %vm194, %v187, 0
    %v202 = vsel %vm194, %v188, 0
    %v205 = vsel %vm194, %v189, 0
    %207 = vmatprep.subr.mxu0 0.0
    %208 = vmatpush1.msra.mxu0 %v71
    %209 = vmatprep.subr.mxu0 0.0
    %210 = vmatpush1.msra.mxu0 %v72
    %211 = vmatprep.subr.mxu0 0.0
    %212 = vmatpush1.msra.mxu0 %v73
    %213 = vmatprep.subr.mxu0 0.0
    %214 = vmatpush1.msra.mxu0 %v74
    %215 = vmatprep.subr.mxu0 0.0
    %216 = vmatpush1.msra.mxu0 %v75
    %217 = vmatprep.subr.mxu0 0.0
    %218 = vmatpush1.msra.mxu0 %v76
    %219 = vmatprep.subr.mxu0 0.0
    %220 = vmatpush1.msra.mxu0 %v77
    %221 = vmatprep.subr.mxu0 0.0
    %222 = vmatpush1.msra.mxu0 %v78
    %223 = vmatprep.subr.mxu0 0.0
    %224 = vmatpush1.msra.mxu0 0.0
    %225 = vmatprep.subr.mxu0 0.0
    %226 = vmatpush1.msra.mxu0 0.0
    %227 = vmatprep.subr.mxu0 0.0
    %228 = vmatpush1.msra.mxu0 0.0
    %229 = vmatprep.subr.mxu0 0.0
    %230 = vmatpush1.msra.mxu0 0.0
    %231 = vmatprep.subr.mxu0 0.0
    %232 = vmatpush1.msra.mxu0 0.0
    %233 = vmatprep.subr.mxu0 0.0
    %234 = vmatpush1.msra.mxu0 0.0
    %235 = vmatprep.subr.mxu0 0.0
    %236 = vmatpush1.msra.mxu0 0.0
    %237 = vmatprep.subr.mxu0 0.0
    %238 = vmatpush1.msra.mxu0 0.0
    %239 = vmatprep.subr.mxu0 0.0
    %240 = vmatpush1.msra.mxu0 0.0
    %241 = vmatprep.subr.mxu0 0.0
    %242 = vmatpush1.msra.mxu0 0.0
    %243 = vmatprep.subr.mxu0 0.0
    %244 = vmatpush1.msra.mxu0 0.0
    %245 = vmatprep.subr.mxu0 0.0
    %246 = vmatpush1.msra.mxu0 0.0
    %247 = vmatprep.subr.mxu0 0.0
    %248 = vmatpush1.msra.mxu0 0.0
    %249 = vmatprep.subr.mxu0 0.0
    %250 = vmatpush1.msra.mxu0 0.0
    %251 = vmatprep.subr.mxu0 0.0
    %252 = vmatpush1.msra.mxu0 0.0
    %253 = vmatprep.subr.mxu0 0.0
    %254 = vmatpush1.msra.mxu0 0.0
    %255 = vmatprep.subr.mxu0 0.0
    %256 = vmatpush1.msra.mxu0 0.0
    %257 = vmatprep.subr.mxu0 0.0
    %258 = vmatpush1.msra.mxu0 0.0
    %259 = vmatprep.subr.mxu0 0.0
    %260 = vmatpush1.msra.mxu0 0.0
    %261 = vmatprep.subr.mxu0 0.0
    %262 = vmatpush1.msra.mxu0 0.0
    %263 = vmatprep.subr.mxu0 0.0
    %264 = vmatpush1.msra.mxu0 0.0
    %265 = vmatprep.subr.mxu0 0.0
    %266 = vmatpush1.msra.mxu0 0.0
    %267 = vmatprep.subr.mxu0 0.0
    %268 = vmatpush1.msra.mxu0 0.0
    %269 = vmatprep.subr.mxu0 0.0
    %270 = vmatpush1.msra.mxu0 0.0
    %271 = vmatprep.mubr.f32.mxu0 0.0
    %272 = vmatmul.mubr.f32.gmra.mrb[0].mxu0 %v196
    %v273 = vpop.f32.mrb[0].mxu0
    %v274 = vadd.f32 %v193, %v273
    %v275 = vpop.f32.mrb[0].mxu0
    %276 = vmatprep.mubr.f32.mxu0 0.0
    %277 = vmatmul.mubr.f32.gmra.mrb[0].mxu0 %v199
    %v278 = vpop.f32.mrb[0].mxu0
    %v279 = vadd.f32 %v193, %v278
    %v280 = vpop.f32.mrb[0].mxu0
    %281 = vmatprep.mubr.f32.mxu0 0.0
    %282 = vmatmul.mubr.f32.gmra.mrb[0].mxu0 %v202
    %v283 = vpop.f32.mrb[0].mxu0
    %v284 = vadd.f32 %v193, %v283
    %v285 = vpop.f32.mrb[0].mxu0
    %286 = vmatprep.mubr.f32.mxu0 0.0
    %287 = vmatmul.mubr.f32.gmra.mrb[0].mxu0 %v205
    %v288 = vpop.f32.mrb[0].mxu0
    %v289 = vadd.f32 %v193, %v288
    %v290 = vpop.f32.mrb[0].mxu0
    %291 = vdwg.mxu0
    %v292 = vmax.f32 %v274, 0.0
    %v293 = vmax.f32 %v279, 0.0
    %v294 = vmax.f32 %v284, 0.0
    %v295 = vmax.f32 %v289, 0.0
    %v296 = vlaneseq
    %v297 = vshrl.u32 %v296, 7
    %v298 = vsub.s32 1, %v297
    %v299 = vrot.slane %v79, %v298
    %v300 = vmul.f32 %v292, %v299
    %v301 = vmul.f32 %v293, %v299
    %v302 = vmul.f32 %v294, %v299
    %v303 = vmul.f32 %v295, %v299
    %v304 = vlaneseq
    %v305 = vshrl.u32 %v304, 7
    %v306 = vsub.s32 2, %v305
    %v307 = vrot.slane %v79, %v306
    %v308 = vadd.f32 %v300, %v307
    %v309 = vadd.f32 %v301, %v307
    %v310 = vadd.f32 %v302, %v307
    %v311 = vadd.f32 %v303, %v307
    %v312 = vld [vmem:[%s0] sm:$0xff]
    %v313 = vld [vmem:[%s0 + $0x8] sm:$0xff]
    %v314 = vld [vmem:[%s8] sm:$0xff]
    %v315 = vld [vmem:[%s8 + $0x8] sm:$0xff]
    %s316 = scalar_lea.vmem %s11, 64
    %v317 = vld [vmem:[%s316] sm:$0xff]
    %v318 = vld [vmem:[%s316 + $0x8] sm:$0xff]
    %v319 = vld [vmem:[%s316 + $0x10] sm:$0xff]
    %v320 = vld [vmem:[%s316 + $0x18] sm:$0xff]
    %v321 = vld [vmem:[%s316 + $0x20] sm:$0xff]
    %v322 = vld [vmem:[%s316 + $0x28] sm:$0xff]
    %v323 = vld [vmem:[%s316 + $0x30] sm:$0xff]
    %v324 = vld [vmem:[%s316 + $0x38] sm:$0xff]
    %s325 = scalar_lea.vmem %s12, 4
    %v326 = vld [vmem:[%s325] sm:$0x7]
    %v327 = vlaneseq
    %v328 = vshrl.u32 %v327, 7
    %v329 = vsub.s32 1, %v328
    %v330 = vrot.slane %v64, %v329
    %vm331 = vcmask 130048
    %v333 = vsel %vm331, %v312, 0
    %v336 = vsel %vm331, %v313, 0
    %338 = vmatprep.subr.mxu0 0.0
    %339 = vmatpush1.msra.mxu0 %v314
    %340 = vmatprep.subr.mxu0 0.0
    %341 = vmatpush1.msra.mxu0 %v315
    %342 = vmatprep.subr.mxu0 0.0
    %343 = vmatpush1.msra.mxu0 0.0
    %344 = vmatprep.subr.mxu0 0.0
    %345 = vmatpush1.msra.mxu0 0.0
    %346 = vmatprep.subr.mxu0 0.0
    %347 = vmatpush1.msra.mxu0 0.0
    %348 = vmatprep.subr.mxu0 0.0
    %349 = vmatpush1.msra.mxu0 0.0
    %350 = vmatprep.subr.mxu0 0.0
    %351 = vmatpush1.msra.mxu0 0.0
    %352 = vmatprep.subr.mxu0 0.0
    %353 = vmatpush1.msra.mxu0 0.0
    %354 = vmatprep.subr.mxu0 0.0
    %355 = vmatpush1.msra.mxu0 0.0
    %356 = vmatprep.subr.mxu0 0.0
    %357 = vmatpush1.msra.mxu0 0.0
    %358 = vmatprep.subr.mxu0 0.0
    %359 = vmatpush1.msra.mxu0 0.0
    %360 = vmatprep.subr.mxu0 0.0
    %361 = vmatpush1.msra.mxu0 0.0
    %362 = vmatprep.subr.mxu0 0.0
    %363 = vmatpush1.msra.mxu0 0.0
    %364 = vmatprep.subr.mxu0 0.0
    %365 = vmatpush1.msra.mxu0 0.0
    %366 = vmatprep.subr.mxu0 0.0
    %367 = vmatpush1.msra.mxu0 0.0
    %368 = vmatprep.subr.mxu0 0.0
    %369 = vmatpush1.msra.mxu0 0.0
    %370 = vmatprep.subr.mxu0 0.0
    %371 = vmatpush1.msra.mxu0 0.0
    %372 = vmatprep.subr.mxu0 0.0
    %373 = vmatpush1.msra.mxu0 0.0
    %374 = vmatprep.subr.mxu0 0.0
    %375 = vmatpush1.msra.mxu0 0.0
    %376 = vmatprep.subr.mxu0 0.0
    %377 = vmatpush1.msra.mxu0 0.0
    %378 = vmatprep.subr.mxu0 0.0
    %379 = vmatpush1.msra.mxu0 0.0
    %380 = vmatprep.subr.mxu0 0.0
    %381 = vmatpush1.msra.mxu0 0.0
    %382 = vmatprep.subr.mxu0 0.0
    %383 = vmatpush1.msra.mxu0 0.0
    %384 = vmatprep.subr.mxu0 0.0
    %385 = vmatpush1.msra.mxu0 0.0
    %386 = vmatprep.subr.mxu0 0.0
    %387 = vmatpush1.msra.mxu0 0.0
    %388 = vmatprep.subr.mxu0 0.0
    %389 = vmatpush1.msra.mxu0 0.0
    %390 = vmatprep.subr.mxu0 0.0
    %391 = vmatpush1.msra.mxu0 0.0
    %392 = vmatprep.subr.mxu0 0.0
    %393 = vmatpush1.msra.mxu0 0.0
    %394 = vmatprep.subr.mxu0 0.0
    %395 = vmatpush1.msra.mxu0 0.0
    %396 = vmatprep.subr.mxu0 0.0
    %397 = vmatpush1.msra.mxu0 0.0
    %398 = vmatprep.subr.mxu0 0.0
    %399 = vmatpush1.msra.mxu0 0.0
    %400 = vmatprep.subr.mxu0 0.0
    %401 = vmatpush1.msra.mxu0 0.0
    %402 = vmatprep.mubr.f32.mxu0 0.0
    %403 = vmatmul.mubr.f32.gmra.mrb[0].mxu0 %v333
    %v404 = vpop.f32.mrb[0].mxu0
    %v405 = vadd.f32 %v330, %v404
    %v406 = vpop.f32.mrb[0].mxu0
    %407 = vmatprep.mubr.f32.mxu0 0.0
    %408 = vmatmul.mubr.f32.gmra.mrb[0].mxu0 %v336
    %v409 = vpop.f32.mrb[0].mxu0
    %v410 = vadd.f32 %v330, %v409
    %v411 = vpop.f32.mrb[0].mxu0
    %412 = vdwg.mxu0
    %v413 = vmax.f32 %v405, 0.0
    %v414 = vmax.f32 %v410, 0.0
    %v415 = vlaneseq
    %v416 = vshrl.u32 %v415, 7
    %v417 = vsub.s32 0, %v416
    %v418 = vrot.slane %v326, %v417
    %v420 = vsel %vm194, %v413, 0
    %v423 = vsel %vm194, %v414, 0
    %425 = vmatprep.subr.mxu0 0.0
    %426 = vmatpush1.msra.mxu0 %v317
    %427 = vmatprep.subr.mxu0 0.0
    %428 = vmatpush1.msra.mxu0 %v318
    %429 = vmatprep.subr.mxu0 0.0
    %430 = vmatpush1.msra.mxu0 %v319
    %431 = vmatprep.subr.mxu0 0.0
    %432 = vmatpush1.msra.mxu0 %v320
    %433 = vmatprep.subr.mxu0 0.0
    %434 = vmatpush1.msra.mxu0 %v321
    %435 = vmatprep.subr.mxu0 0.0
    %436 = vmatpush1.msra.mxu0 %v322
    %437 = vmatprep.subr.mxu0 0.0
    %438 = vmatpush1.msra.mxu0 %v323
    %439 = vmatprep.subr.mxu0 0.0
    %440 = vmatpush1.msra.mxu0 %v324
    %441 = vmatprep.subr.mxu0 0.0
    %442 = vmatpush1.msra.mxu0 0.0
    %443 = vmatprep.subr.mxu0 0.0
    %444 = vmatpush1.msra.mxu0 0.0
    %445 = vmatprep.subr.mxu0 0.0
    %446 = vmatpush1.msra.mxu0 0.0
    %447 = vmatprep.subr.mxu0 0.0
    %448 = vmatpush1.msra.mxu0 0.0
    %449 = vmatprep.subr.mxu0 0.0
    %450 = vmatpush1.msra.mxu0 0.0
    %451 = vmatprep.subr.mxu0 0.0
    %452 = vmatpush1.msra.mxu0 0.0
    %453 = vmatprep.subr.mxu0 0.0
    %454 = vmatpush1.msra.mxu0 0.0
    %455 = vmatprep.subr.mxu0 0.0
    %456 = vmatpush1.msra.mxu0 0.0
    %457 = vmatprep.subr.mxu0 0.0
    %458 = vmatpush1.msra.mxu0 0.0
    %459 = vmatprep.subr.mxu0 0.0
    %460 = vmatpush1.msra.mxu0 0.0
    %461 = vmatprep.subr.mxu0 0.0
    %462 = vmatpush1.msra.mxu0 0.0
    %463 = vmatprep.subr.mxu0 0.0
    %464 = vmatpush1.msra.mxu0 0.0
    %465 = vmatprep.subr.mxu0 0.0
    %466 = vmatpush1.msra.mxu0 0.0
    %467 = vmatprep.subr.mxu0 0.0
    %468 = vmatpush1.msra.mxu0 0.0
    %469 = vmatprep.subr.mxu0 0.0
    %470 = vmatpush1.msra.mxu0 0.0
    %471 = vmatprep.subr.mxu0 0.0
    %472 = vmatpush1.msra.mxu0 0.0
    %473 = vmatprep.subr.mxu0 0.0
    %474 = vmatpush1.msra.mxu0 0.0
    %475 = vmatprep.subr.mxu0 0.0
    %476 = vmatpush1.msra.mxu0 0.0
    %477 = vmatprep.subr.mxu0 0.0
    %478 = vmatpush1.msra.mxu0 0.0
    %479 = vmatprep.subr.mxu0 0.0
    %480 = vmatpush1.msra.mxu0 0.0
    %481 = vmatprep.subr.mxu0 0.0
    %482 = vmatpush1.msra.mxu0 0.0
    %483 = vmatprep.subr.mxu0 0.0
    %484 = vmatpush1.msra.mxu0 0.0
    %485 = vmatprep.subr.mxu0 0.0
    %486 = vmatpush1.msra.mxu0 0.0
    %487 = vmatprep.subr.mxu0 0.0
    %488 = vmatpush1.msra.mxu0 0.0
    %489 = vmatprep.mubr.f32.mxu0 0.0
    %490 = vmatmul.mubr.f32.gmra.mrb[0].mxu0 %v420
    %v491 = vpop.f32.mrb[0].mxu0
    %v492 = vadd.f32 %v418, %v491
    %v493 = vpop.f32.mrb[0].mxu0
    %494 = vmatprep.mubr.f32.mxu0 0.0
    %495 = vmatmul.mubr.f32.gmra.mrb[0].mxu0 %v423
    %v496 = vpop.f32.mrb[0].mxu0
    %v497 = vadd.f32 %v418, %v496
    %v498 = vpop.f32.mrb[0].mxu0
    %499 = vdwg.mxu0
    %v500 = vmax.f32 %v492, 0.0
    %v501 = vmax.f32 %v497, 0.0
    %v502 = vlaneseq
    %v503 = vshrl.u32 %v502, 7
    %v504 = vsub.s32 1, %v503
    %v505 = vrot.slane %v326, %v504
    %v506 = vmul.f32 %v500, %v505
    %v507 = vmul.f32 %v501, %v505
    %v508 = vlaneseq
    %v509 = vshrl.u32 %v508, 7
    %v510 = vsub.s32 2, %v509
    %v511 = vrot.slane %v326, %v510
    %v512 = vadd.f32 %v506, %v511
    %v513 = vadd.f32 %v507, %v511
    %v514 = vld [vmem:[%s2] sm:$0x3]
    %v515 = vld [vmem:[%s9] sm:$0xff]
    %s516 = scalar_lea.vmem %s11, 128
    %v517 = vld [vmem:[%s516] sm:$0xff]
    %v518 = vld [vmem:[%s516 + $0x8] sm:$0xff]
    %v519 = vld [vmem:[%s516 + $0x10] sm:$0xff]
    %v520 = vld [vmem:[%s516 + $0x18] sm:$0xff]
    %v521 = vld [vmem:[%s516 + $0x20] sm:$0xff]
    %v522 = vld [vmem:[%s516 + $0x28] sm:$0xff]
    %v523 = vld [vmem:[%s516 + $0x30] sm:$0xff]
    %v524 = vld [vmem:[%s516 + $0x38] sm:$0xff]
    %s525 = scalar_lea.vmem %s12, 8
    %v526 = vld [vmem:[%s525] sm:$0x7]
    %v527 = vlaneseq
    %v528 = vshrl.u32 %v527, 7
    %v529 = vsub.s32 2, %v528
    %v530 = vrot.slane %v64, %v529
    %vm531 = vcmask 64512
    %v533 = vsel %vm531, %v514, 0
    %535 = vmatprep.subr.mxu0 0.0
    %536 = vmatpush1.msra.mxu0 %v515
    %537 = vmatprep.subr.mxu0 0.0
    %538 = vmatpush1.msra.mxu0 0.0
    %539 = vmatprep.subr.mxu0 0.0
    %540 = vmatpush1.msra.mxu0 0.0
    %541 = vmatprep.subr.mxu0 0.0
    %542 = vmatpush1.msra.mxu0 0.0
    %543 = vmatprep.subr.mxu0 0.0
    %544 = vmatpush1.msra.mxu0 0.0
    %545 = vmatprep.subr.mxu0 0.0
    %546 = vmatpush1.msra.mxu0 0.0
    %547 = vmatprep.subr.mxu0 0.0
    %548 = vmatpush1.msra.mxu0 0.0
    %549 = vmatprep.subr.mxu0 0.0
    %550 = vmatpush1.msra.mxu0 0.0
    %551 = vmatprep.subr.mxu0 0.0
    %552 = vmatpush1.msra.mxu0 0.0
    %553 = vmatprep.subr.mxu0 0.0
    %554 = vmatpush1.msra.mxu0 0.0
    %555 = vmatprep.subr.mxu0 0.0
    %556 = vmatpush1.msra.mxu0 0.0
    %557 = vmatprep.subr.mxu0 0.0
    %558 = vmatpush1.msra.mxu0 0.0
    %559 = vmatprep.subr.mxu0 0.0
    %560 = vmatpush1.msra.mxu0 0.0
    %561 = vmatprep.subr.mxu0 0.0
    %562 = vmatpush1.msra.mxu0 0.0
    %563 = vmatprep.subr.mxu0 0.0
    %564 = vmatpush1.msra.mxu0 0.0
    %565 = vmatprep.subr.mxu0 0.0
    %566 = vmatpush1.msra.mxu0 0.0
    %567 = vmatprep.subr.mxu0 0.0
    %568 = vmatpush1.msra.mxu0 0.0
    %569 = vmatprep.subr.mxu0 0.0
    %570 = vmatpush1.msra.mxu0 0.0
    %571 = vmatprep.subr.mxu0 0.0
    %572 = vmatpush1.msra.mxu0 0.0
    %573 = vmatprep.subr.mxu0 0.0
    %574 = vmatpush1.msra.mxu0 0.0
    %575 = vmatprep.subr.mxu0 0.0
    %576 = vmatpush1.msra.mxu0 0.0
    %577 = vmatprep.subr.mxu0 0.0
    %578 = vmatpush1.msra.mxu0 0.0
    %579 = vmatprep.subr.mxu0 0.0
    %580 = vmatpush1.msra.mxu0 0.0
    %581 = vmatprep.subr.mxu0 0.0
    %582 = vmatpush1.msra.mxu0 0.0
    %583 = vmatprep.subr.mxu0 0.0
    %584 = vmatpush1.msra.mxu0 0.0
    %585 = vmatprep.subr.mxu0 0.0
    %586 = vmatpush1.msra.mxu0 0.0
    %587 = vmatprep.subr.mxu0 0.0
    %588 = vmatpush1.msra.mxu0 0.0
    %589 = vmatprep.subr.mxu0 0.0
    %590 = vmatpush1.msra.mxu0 0.0
    %591 = vmatprep.subr.mxu0 0.0
    %592 = vmatpush1.msra.mxu0 0.0
    %593 = vmatprep.subr.mxu0 0.0
    %594 = vmatpush1.msra.mxu0 0.0
    %595 = vmatprep.subr.mxu0 0.0
    %596 = vmatpush1.msra.mxu0 0.0
    %597 = vmatprep.subr.mxu0 0.0
    %598 = vmatpush1.msra.mxu0 0.0
    %599 = vmatprep.mubr.f32.mxu0 0.0
    %600 = vmatmul.mubr.f32.gmra.mrb[0].mxu0 %v533
    %v601 = vpop.f32.mrb[0].mxu0
    %v602 = vadd.f32 %v530, %v601
    %v603 = vpop.f32.mrb[0].mxu0
    %604 = vdwg.mxu0
    %v605 = vmax.f32 %v602, 0.0
    %v606 = vlaneseq
    %v607 = vshrl.u32 %v606, 7
    %v608 = vsub.s32 0, %v607
    %v609 = vrot.slane %v526, %v608
    %v611 = vsel %vm194, %v605, 0
    %613 = vmatprep.subr.mxu0 0.0
    %614 = vmatpush1.msra.mxu0 %v517
    %615 = vmatprep.subr.mxu0 0.0
    %616 = vmatpush1.msra.mxu0 %v518
    %617 = vmatprep.subr.mxu0 0.0
    %618 = vmatpush1.msra.mxu0 %v519
    %619 = vmatprep.subr.mxu0 0.0
    %620 = vmatpush1.msra.mxu0 %v520
    %621 = vmatprep.subr.mxu0 0.0
    %622 = vmatpush1.msra.mxu0 %v521
    %623 = vmatprep.subr.mxu0 0.0
    %624 = vmatpush1.msra.mxu0 %v522
    %625 = vmatprep.subr.mxu0 0.0
    %626 = vmatpush1.msra.mxu0 %v523
    %627 = vmatprep.subr.mxu0 0.0
    %628 = vmatpush1.msra.mxu0 %v524
    %629 = vmatprep.subr.mxu0 0.0
    %630 = vmatpush1.msra.mxu0 0.0
    %631 = vmatprep.subr.mxu0 0.0
    %632 = vmatpush1.msra.mxu0 0.0
    %633 = vmatprep.subr.mxu0 0.0
    %634 = vmatpush1.msra.mxu0 0.0
    %635 = vmatprep.subr.mxu0 0.0
    %636 = vmatpush1.msra.mxu0 0.0
    %637 = vmatprep.subr.mxu0 0.0
    %638 = vmatpush1.msra.mxu0 0.0
    %639 = vmatprep.subr.mxu0 0.0
    %640 = vmatpush1.msra.mxu0 0.0
    %641 = vmatprep.subr.mxu0 0.0
    %642 = vmatpush1.msra.mxu0 0.0
    %643 = vmatprep.subr.mxu0 0.0
    %644 = vmatpush1.msra.mxu0 0.0
    %645 = vmatprep.subr.mxu0 0.0
    %646 = vmatpush1.msra.mxu0 0.0
    %647 = vmatprep.subr.mxu0 0.0
    %648 = vmatpush1.msra.mxu0 0.0
    %649 = vmatprep.subr.mxu0 0.0
    %650 = vmatpush1.msra.mxu0 0.0
    %651 = vmatprep.subr.mxu0 0.0
    %652 = vmatpush1.msra.mxu0 0.0
    %653 = vmatprep.subr.mxu0 0.0
    %654 = vmatpush1.msra.mxu0 0.0
    %655 = vmatprep.subr.mxu0 0.0
    %656 = vmatpush1.msra.mxu0 0.0
    %657 = vmatprep.subr.mxu0 0.0
    %658 = vmatpush1.msra.mxu0 0.0
    %659 = vmatprep.subr.mxu0 0.0
    %660 = vmatpush1.msra.mxu0 0.0
    %661 = vmatprep.subr.mxu0 0.0
    %662 = vmatpush1.msra.mxu0 0.0
    %663 = vmatprep.subr.mxu0 0.0
    %664 = vmatpush1.msra.mxu0 0.0
    %665 = vmatprep.subr.mxu0 0.0
    %666 = vmatpush1.msra.mxu0 0.0
    %667 = vmatprep.subr.mxu0 0.0
    %668 = vmatpush1.msra.mxu0 0.0
    %669 = vmatprep.subr.mxu0 0.0
    %670 = vmatpush1.msra.mxu0 0.0
    %671 = vmatprep.subr.mxu0 0.0
    %672 = vmatpush1.msra.mxu0 0.0
    %673 = vmatprep.subr.mxu0 0.0
    %674 = vmatpush1.msra.mxu0 0.0
    %675 = vmatprep.subr.mxu0 0.0
    %676 = vmatpush1.msra.mxu0 0.0
    %677 = vmatprep.mubr.f32.mxu0 0.0
    %678 = vmatmul.mubr.f32.gmra.mrb[0].mxu0 %v611
    %v679 = vpop.f32.mrb[0].mxu0
    %v680 = vadd.f32 %v609, %v679
    %v681 = vpop.f32.mrb[0].mxu0
    %682 = vdwg.mxu0
    %v683 = vmax.f32 %v680, 0.0
    %v684 = vlaneseq
    %v685 = vshrl.u32 %v684, 7
    %v686 = vsub.s32 1, %v685
    %v687 = vrot.slane %v526, %v686
    %v688 = vmul.f32 %v683, %v687
    %v689 = vlaneseq
    %v690 = vshrl.u32 %v689, 7
    %v691 = vsub.s32 2, %v690
    %v692 = vrot.slane %v526, %v691
    %v693 = vadd.f32 %v688, %v692
    %v694 = vld [vmem:[%s3] sm:$0x1]
    %v695 = vlaneseq
    %v696 = vshrl.u32 %v695, 7
    %v697 = vadd.s32 %v696, 8
    %v698 = vlaneseq
    %v699 = vshrl.u32 %v698, 7
    %v700 = vsub.s32 0, %v699
    %v701 = vrot.slane %v694, %v700
    %vm702 = vcmp.eq.s32.totalorder %v701, %v696
    %vm703 = vcmp.eq.s32.totalorder %v701, %v697
    %v704 = vsel %vm702, 1, 0
    %v705 = vsel %vm703, 1, 0
    %v706 = vcvt.s32.f32 %v704
    %v707 = vcvt.s32.f32 %v705
    %v708 = vld [vmem:[%s4] sm:$0x1]
    %v709 = vlaneseq
    %v710 = vshrl.u32 %v709, 7
    %v711 = vsub.s32 0, %v710
    %v712 = vrot.slane %v708, %v711
    %vm713 = vcmp.eq.s32.totalorder %v712, %v696
    %vm714 = vcmp.eq.s32.totalorder %v712, %v697
    %v715 = vsel %vm713, 1, 0
    %v716 = vsel %vm714, 1, 0
    %v717 = vcvt.s32.f32 %v715
    %v718 = vcvt.s32.f32 %v716
    %v719 = vld [vmem:[%s5] sm:$0x1]
    %v720 = vlaneseq
    %v721 = vshrl.u32 %v720, 7
    %v722 = vsub.s32 0, %v721
    %v723 = vrot.slane %v719, %v722
    %vm724 = vcmp.eq.s32.totalorder %v723, %v696
    %v725 = vsel %vm724, 1, 0
    %v726 = vcvt.s32.f32 %v725
    %v727 = vld [vmem:[%s6] sm:$0x1]
    %v728 = vlaneseq
    %v729 = vshrl.u32 %v728, 7
    %v730 = vsub.s32 0, %v729
    %v731 = vrot.slane %v727, %v730
    %vm732 = vcmp.eq.s32.totalorder %v731, %v696
    %v733 = vsel %vm732, 1, 0
    %v734 = vcvt.s32.f32 %v733
    %735 = vxpose.xlu0.b32.start [1/16] %v706, 128
    %736 = vxpose.xlu0.b32.cont [2/16] %v707, 128
    %737 = vxpose.xlu0.b32.cont [3/16] 0.0, 128
    %738 = vxpose.xlu0.b32.cont [4/16] 0.0, 128
    %739 = vxpose.xlu0.b32.cont [5/16] 0.0, 128
    %740 = vxpose.xlu0.b32.cont [6/16] 0.0, 128
    %741 = vxpose.xlu0.b32.cont [7/16] 0.0, 128
    %742 = vxpose.xlu0.b32.cont [8/16] 0.0, 128
    %743 = vxpose.xlu0.b32.cont [9/16] 0.0, 128
    %744 = vxpose.xlu0.b32.cont [10/16] 0.0, 128
    %745 = vxpose.xlu0.b32.cont [11/16] 0.0, 128
    %746 = vxpose.xlu0.b32.cont [12/16] 0.0, 128
    %747 = vxpose.xlu0.b32.cont [13/16] 0.0, 128
    %748 = vxpose.xlu0.b32.cont [14/16] 0.0, 128
    %749 = vxpose.xlu0.b32.cont [15/16] 0.0, 128
    %750 = vxpose.xlu0.b32.end [16/16] 0.0, 128
    %v751 = vpop.trf.xlu0
    %v752 = vpop.trf.xlu0
    %v753 = vpop.trf.xlu0
    %v754 = vpop.trf.xlu0
    %v755 = vpop.trf.xlu0
    %v756 = vpop.trf.xlu0
    %v757 = vpop.trf.xlu0
    %v758 = vpop.trf.xlu0
    %v759 = vpop.trf.xlu0
    %v760 = vpop.trf.xlu0
    %v761 = vpop.trf.xlu0
    %v762 = vpop.trf.xlu0
    %v763 = vpop.trf.xlu0
    %v764 = vpop.trf.xlu0
    %v765 = vpop.trf.xlu0
    %v766 = vpop.trf.xlu0
    %v768 = vsel %vm331, %v751, 0
    %v771 = vsel %vm331, %v752, 0
    %v774 = vsel %vm331, %v753, 0
    %v777 = vsel %vm331, %v754, 0
    %779 = vmatprep.subr.mxu0 0.0
    %780 = vmatpush1.msra.mxu0 %v512
    %781 = vmatprep.subr.mxu0 0.0
    %782 = vmatpush1.msra.mxu0 %v513
    %783 = vmatprep.subr.mxu0 0.0
    %784 = vmatpush1.msra.mxu0 0.0
    %785 = vmatprep.subr.mxu0 0.0
    %786 = vmatpush1.msra.mxu0 0.0
    %787 = vmatprep.subr.mxu0 0.0
    %788 = vmatpush1.msra.mxu0 0.0
    %789 = vmatprep.subr.mxu0 0.0
    %790 = vmatpush1.msra.mxu0 0.0
    %791 = vmatprep.subr.mxu0 0.0
    %792 = vmatpush1.msra.mxu0 0.0
    %793 = vmatprep.subr.mxu0 0.0
    %794 = vmatpush1.msra.mxu0 0.0
    %795 = vmatprep.subr.mxu0 0.0
    %796 = vmatpush1.msra.mxu0 0.0
    %797 = vmatprep.subr.mxu0 0.0
    %798 = vmatpush1.msra.mxu0 0.0
    %799 = vmatprep.subr.mxu0 0.0
    %800 = vmatpush1.msra.mxu0 0.0
    %801 = vmatprep.subr.mxu0 0.0
    %802 = vmatpush1.msra.mxu0 0.0
    %803 = vmatprep.subr.mxu0 0.0
    %804 = vmatpush1.msra.mxu0 0.0
    %805 = vmatprep.subr.mxu0 0.0
    %806 = vmatpush1.msra.mxu0 0.0
    %807 = vmatprep.subr.mxu0 0.0
    %808 = vmatpush1.msra.mxu0 0.0
    %809 = vmatprep.subr.mxu0 0.0
    %810 = vmatpush1.msra.mxu0 0.0
    %811 = vmatprep.subr.mxu0 0.0
    %812 = vmatpush1.msra.mxu0 0.0
    %813 = vmatprep.subr.mxu0 0.0
    %814 = vmatpush1.msra.mxu0 0.0
    %815 = vmatprep.subr.mxu0 0.0
    %816 = vmatpush1.msra.mxu0 0.0
    %817 = vmatprep.subr.mxu0 0.0
    %818 = vmatpush1.msra.mxu0 0.0
    %819 = vmatprep.subr.mxu0 0.0
    %820 = vmatpush1.msra.mxu0 0.0
    %821 = vmatprep.subr.mxu0 0.0
    %822 = vmatpush1.msra.mxu0 0.0
    %823 = vmatprep.subr.mxu0 0.0
    %824 = vmatpush1.msra.mxu0 0.0
    %825 = vmatprep.subr.mxu0 0.0
    %826 = vmatpush1.msra.mxu0 0.0
    %827 = vmatprep.subr.mxu0 0.0
    %828 = vmatpush1.msra.mxu0 0.0
    %829 = vmatprep.subr.mxu0 0.0
    %830 = vmatpush1.msra.mxu0 0.0
    %831 = vmatprep.subr.mxu0 0.0
    %832 = vmatpush1.msra.mxu0 0.0
    %833 = vmatprep.subr.mxu0 0.0
    %834 = vmatpush1.msra.mxu0 0.0
    %835 = vmatprep.subr.mxu0 0.0
    %836 = vmatpush1.msra.mxu0 0.0
    %837 = vmatprep.subr.mxu0 0.0
    %838 = vmatpush1.msra.mxu0 0.0
    %839 = vmatprep.subr.mxu0 0.0
    %840 = vmatpush1.msra.mxu0 0.0
    %841 = vmatprep.subr.mxu0 0.0
    %842 = vmatpush1.msra.mxu0 0.0
    %843 = vmatprep.mubr.f32.mxu0 0.0
    %844 = vmatmul.mubr.f32.gmra.mrb[0].mxu0 %v768
    %v845 = vpop.f32.mrb[0].mxu0
    %v846 = vadd.f32 0.0, %v845
    %v847 = vpop.f32.mrb[0].mxu0
    %848 = vmatprep.mubr.f32.mxu0 0.0
    %849 = vmatmul.mubr.f32.gmra.mrb[0].mxu0 %v771
    %v850 = vpop.f32.mrb[0].mxu0
    %v851 = vadd.f32 0.0, %v850
    %v852 = vpop.f32.mrb[0].mxu0
    %853 = vmatprep.mubr.f32.mxu0 0.0
    %854 = vmatmul.mubr.f32.gmra.mrb[0].mxu0 %v774
    %v855 = vpop.f32.mrb[0].mxu0
    %v856 = vadd.f32 0.0, %v855
    %v857 = vpop.f32.mrb[0].mxu0
    %858 = vmatprep.mubr.f32.mxu0 0.0
    %859 = vmatmul.mubr.f32.gmra.mrb[0].mxu0 %v777
    %v860 = vpop.f32.mrb[0].mxu0
    %v861 = vadd.f32 0.0, %v860
    %v862 = vpop.f32.mrb[0].mxu0
    %863 = vdwg.mxu0
    %864 = vxpose.xlu0.b32.start [1/16] %v717, 128
    %865 = vxpose.xlu0.b32.cont [2/16] %v718, 128
    %866 = vxpose.xlu0.b32.cont [3/16] 0.0, 128
    %867 = vxpose.xlu0.b32.cont [4/16] 0.0, 128
    %868 = vxpose.xlu0.b32.cont [5/16] 0.0, 128
    %869 = vxpose.xlu0.b32.cont [6/16] 0.0, 128
    %870 = vxpose.xlu0.b32.cont [7/16] 0.0, 128
    %871 = vxpose.xlu0.b32.cont [8/16] 0.0, 128
    %872 = vxpose.xlu0.b32.cont [9/16] 0.0, 128
    %873 = vxpose.xlu0.b32.cont [10/16] 0.0, 128
    %874 = vxpose.xlu0.b32.cont [11/16] 0.0, 128
    %875 = vxpose.xlu0.b32.cont [12/16] 0.0, 128
    %876 = vxpose.xlu0.b32.cont [13/16] 0.0, 128
    %877 = vxpose.xlu0.b32.cont [14/16] 0.0, 128
    %878 = vxpose.xlu0.b32.cont [15/16] 0.0, 128
    %879 = vxpose.xlu0.b32.end [16/16] 0.0, 128
    %v880 = vpop.trf.xlu0
    %v881 = vpop.trf.xlu0
    %v882 = vpop.trf.xlu0
    %v883 = vpop.trf.xlu0
    %v884 = vpop.trf.xlu0
    %v885 = vpop.trf.xlu0
    %v886 = vpop.trf.xlu0
    %v887 = vpop.trf.xlu0
    %v888 = vpop.trf.xlu0
    %v889 = vpop.trf.xlu0
    %v890 = vpop.trf.xlu0
    %v891 = vpop.trf.xlu0
    %v892 = vpop.trf.xlu0
    %v893 = vpop.trf.xlu0
    %v894 = vpop.trf.xlu0
    %v895 = vpop.trf.xlu0
    %v897 = vsel %vm331, %v880, 0
    %v900 = vsel %vm331, %v881, 0
    %v903 = vsel %vm331, %v882, 0
    %v906 = vsel %vm331, %v883, 0
    %908 = vmatprep.subr.mxu0 0.0
    %909 = vmatpush1.msra.mxu0 %v512
    %910 = vmatprep.subr.mxu0 0.0
    %911 = vmatpush1.msra.mxu0 %v513
    %912 = vmatprep.subr.mxu0 0.0
    %913 = vmatpush1.msra.mxu0 0.0
    %914 = vmatprep.subr.mxu0 0.0
    %915 = vmatpush1.msra.mxu0 0.0
    %916 = vmatprep.subr.mxu0 0.0
    %917 = vmatpush1.msra.mxu0 0.0
    %918 = vmatprep.subr.mxu0 0.0
    %919 = vmatpush1.msra.mxu0 0.0
    %920 = vmatprep.subr.mxu0 0.0
    %921 = vmatpush1.msra.mxu0 0.0
    %922 = vmatprep.subr.mxu0 0.0
    %923 = vmatpush1.msra.mxu0 0.0
    %924 = vmatprep.subr.mxu0 0.0
    %925 = vmatpush1.msra.mxu0 0.0
    %926 = vmatprep.subr.mxu0 0.0
    %927 = vmatpush1.msra.mxu0 0.0
    %928 = vmatprep.subr.mxu0 0.0
    %929 = vmatpush1.msra.mxu0 0.0
    %930 = vmatprep.subr.mxu0 0.0
    %931 = vmatpush1.msra.mxu0 0.0
    %932 = vmatprep.subr.mxu0 0.0
    %933 = vmatpush1.msra.mxu0 0.0
    %934 = vmatprep.subr.mxu0 0.0
    %935 = vmatpush1.msra.mxu0 0.0
    %936 = vmatprep.subr.mxu0 0.0
    %937 = vmatpush1.msra.mxu0 0.0
    %938 = vmatprep.subr.mxu0 0.0
    %939 = vmatpush1.msra.mxu0 0.0
    %940 = vmatprep.subr.mxu0 0.0
    %941 = vmatpush1.msra.mxu0 0.0
    %942 = vmatprep.subr.mxu0 0.0
    %943 = vmatpush1.msra.mxu0 0.0
    %944 = vmatprep.subr.mxu0 0.0
    %945 = vmatpush1.msra.mxu0 0.0
    %946 = vmatprep.subr.mxu0 0.0
    %947 = vmatpush1.msra.mxu0 0.0
    %948 = vmatprep.subr.mxu0 0.0
    %949 = vmatpush1.msra.mxu0 0.0
    %950 = vmatprep.subr.mxu0 0.0
    %951 = vmatpush1.msra.mxu0 0.0
    %952 = vmatprep.subr.mxu0 0.0
    %953 = vmatpush1.msra.mxu0 0.0
    %954 = vmatprep.subr.mxu0 0.0
    %955 = vmatpush1.msra.mxu0 0.0
    %956 = vmatprep.subr.mxu0 0.0
    %957 = vmatpush1.msra.mxu0 0.0
    %958 = vmatprep.subr.mxu0 0.0
    %959 = vmatpush1.msra.mxu0 0.0
    %960 = vmatprep.subr.mxu0 0.0
    %961 = vmatpush1.msra.mxu0 0.0
    %962 = vmatprep.subr.mxu0 0.0
    %963 = vmatpush1.msra.mxu0 0.0
    %964 = vmatprep.subr.mxu0 0.0
    %965 = vmatpush1.msra.mxu0 0.0
    %966 = vmatprep.subr.mxu0 0.0
    %967 = vmatpush1.msra.mxu0 0.0
    %968 = vmatprep.subr.mxu0 0.0
    %969 = vmatpush1.msra.mxu0 0.0
    %970 = vmatprep.subr.mxu0 0.0
    %971 = vmatpush1.msra.mxu0 0.0
    %972 = vmatprep.mubr.f32.mxu0 0.0
    %973 = vmatmul.mubr.f32.gmra.mrb[0].mxu0 %v897
    %v974 = vpop.f32.mrb[0].mxu0
    %v975 = vadd.f32 0.0, %v974
    %v976 = vpop.f32.mrb[0].mxu0
    %977 = vmatprep.mubr.f32.mxu0 0.0
    %978 = vmatmul.mubr.f32.gmra.mrb[0].mxu0 %v900
    %v979 = vpop.f32.mrb[0].mxu0
    %v980 = vadd.f32 0.0, %v979
    %v981 = vpop.f32.mrb[0].mxu0
    %982 = vmatprep.mubr.f32.mxu0 0.0
    %983 = vmatmul.mubr.f32.gmra.mrb[0].mxu0 %v903
    %v984 = vpop.f32.mrb[0].mxu0
    %v985 = vadd.f32 0.0, %v984
    %v986 = vpop.f32.mrb[0].mxu0
    %987 = vmatprep.mubr.f32.mxu0 0.0
    %988 = vmatmul.mubr.f32.gmra.mrb[0].mxu0 %v906
    %v989 = vpop.f32.mrb[0].mxu0
    %v990 = vadd.f32 0.0, %v989
    %v991 = vpop.f32.mrb[0].mxu0
    %992 = vdwg.mxu0
    %993 = vxpose.xlu0.b32.start [1/16] %v726, 128
    %994 = vxpose.xlu0.b32.cont [2/16] 0.0, 128
    %995 = vxpose.xlu0.b32.cont [3/16] 0.0, 128
    %996 = vxpose.xlu0.b32.cont [4/16] 0.0, 128
    %997 = vxpose.xlu0.b32.cont [5/16] 0.0, 128
    %998 = vxpose.xlu0.b32.cont [6/16] 0.0, 128
    %999 = vxpose.xlu0.b32.cont [7/16] 0.0, 128
    %1000 = vxpose.xlu0.b32.cont [8/16] 0.0, 128
    %1001 = vxpose.xlu0.b32.cont [9/16] 0.0, 128
    %1002 = vxpose.xlu0.b32.cont [10/16] 0.0, 128
    %1003 = vxpose.xlu0.b32.cont [11/16] 0.0, 128
    %1004 = vxpose.xlu0.b32.cont [12/16] 0.0, 128
    %1005 = vxpose.xlu0.b32.cont [13/16] 0.0, 128
    %1006 = vxpose.xlu0.b32.cont [14/16] 0.0, 128
    %1007 = vxpose.xlu0.b32.cont [15/16] 0.0, 128
    %1008 = vxpose.xlu0.b32.end [16/16] 0.0, 128
    %v1009 = vpop.trf.xlu0
    %v1010 = vpop.trf.xlu0
    %v1011 = vpop.trf.xlu0
    %v1012 = vpop.trf.xlu0
    %v1013 = vpop.trf.xlu0
    %v1014 = vpop.trf.xlu0
    %v1015 = vpop.trf.xlu0
    %v1016 = vpop.trf.xlu0
    %v1017 = vpop.trf.xlu0
    %v1018 = vpop.trf.xlu0
    %v1019 = vpop.trf.xlu0
    %v1020 = vpop.trf.xlu0
    %v1021 = vpop.trf.xlu0
    %v1022 = vpop.trf.xlu0
    %v1023 = vpop.trf.xlu0
    %v1024 = vpop.trf.xlu0
    %vm1025 = vcmask 15360
    %v1027 = vsel %vm1025, %v1009, 0
    %v1030 = vsel %vm1025, %v1010, 0
    %v1033 = vsel %vm1025, %v1011, 0
    %v1036 = vsel %vm1025, %v1012, 0
    %vm1038 = vcmask 1041408
    %v1040 = vsel %vm1038, %v693, 0
    %1042 = vmatprep.subr.mxu0 0.0
    %1043 = vmatpush1.msra.mxu0 %v1040
    %1044 = vmatprep.subr.mxu0 0.0
    %1045 = vmatpush1.msra.mxu0 0.0
    %1046 = vmatprep.subr.mxu0 0.0
    %1047 = vmatpush1.msra.mxu0 0.0
    %1048 = vmatprep.subr.mxu0 0.0
    %1049 = vmatpush1.msra.mxu0 0.0
    %1050 = vmatprep.subr.mxu0 0.0
    %1051 = vmatpush1.msra.mxu0 0.0
    %1052 = vmatprep.subr.mxu0 0.0
    %1053 = vmatpush1.msra.mxu0 0.0
    %1054 = vmatprep.subr.mxu0 0.0
    %1055 = vmatpush1.msra.mxu0 0.0
    %1056 = vmatprep.subr.mxu0 0.0
    %1057 = vmatpush1.msra.mxu0 0.0
    %1058 = vmatprep.subr.mxu0 0.0
    %1059 = vmatpush1.msra.mxu0 0.0
    %1060 = vmatprep.subr.mxu0 0.0
    %1061 = vmatpush1.msra.mxu0 0.0
    %1062 = vmatprep.subr.mxu0 0.0
    %1063 = vmatpush1.msra.mxu0 0.0
    %1064 = vmatprep.subr.mxu0 0.0
    %1065 = vmatpush1.msra.mxu0 0.0
    %1066 = vmatprep.subr.mxu0 0.0
    %1067 = vmatpush1.msra.mxu0 0.0
    %1068 = vmatprep.subr.mxu0 0.0
    %1069 = vmatpush1.msra.mxu0 0.0
    %1070 = vmatprep.subr.mxu0 0.0
    %1071 = vmatpush1.msra.mxu0 0.0
    %1072 = vmatprep.subr.mxu0 0.0
    %1073 = vmatpush1.msra.mxu0 0.0
    %1074 = vmatprep.subr.mxu0 0.0
    %1075 = vmatpush1.msra.mxu0 0.0
    %1076 = vmatprep.subr.mxu0 0.0
    %1077 = vmatpush1.msra.mxu0 0.0
    %1078 = vmatprep.subr.mxu0 0.0
    %1079 = vmatpush1.msra.mxu0 0.0
    %1080 = vmatprep.subr.mxu0 0.0
    %1081 = vmatpush1.msra.mxu0 0.0
    %1082 = vmatprep.subr.mxu0 0.0
    %1083 = vmatpush1.msra.mxu0 0.0
    %1084 = vmatprep.subr.mxu0 0.0
    %1085 = vmatpush1.msra.mxu0 0.0
    %1086 = vmatprep.subr.mxu0 0.0
    %1087 = vmatpush1.msra.mxu0 0.0
    %1088 = vmatprep.subr.mxu0 0.0
    %1089 = vmatpush1.msra.mxu0 0.0
    %1090 = vmatprep.subr.mxu0 0.0
    %1091 = vmatpush1.msra.mxu0 0.0
    %1092 = vmatprep.subr.mxu0 0.0
    %1093 = vmatpush1.msra.mxu0 0.0
    %1094 = vmatprep.subr.mxu0 0.0
    %1095 = vmatpush1.msra.mxu0 0.0
    %1096 = vmatprep.subr.mxu0 0.0
    %1097 = vmatpush1.msra.mxu0 0.0
    %1098 = vmatprep.subr.mxu0 0.0
    %1099 = vmatpush1.msra.mxu0 0.0
    %1100 = vmatprep.subr.mxu0 0.0
    %1101 = vmatpush1.msra.mxu0 0.0
    %1102 = vmatprep.subr.mxu0 0.0
    %1103 = vmatpush1.msra.mxu0 0.0
    %1104 = vmatprep.subr.mxu0 0.0
    %1105 = vmatpush1.msra.mxu0 0.0
    %1106 = vmatprep.mubr.f32.mxu0 0.0
    %1107 = vmatmul.mubr.f32.gmra.mrb[0].mxu0 %v1027
    %v1108 = vpop.f32.mrb[0].mxu0
    %v1109 = vadd.f32 0.0, %v1108
    %v1110 = vpop.f32.mrb[0].mxu0
    %1111 = vmatprep.mubr.f32.mxu0 0.0
    %1112 = vmatmul.mubr.f32.gmra.mrb[0].mxu0 %v1030
    %v1113 = vpop.f32.mrb[0].mxu0
    %v1114 = vadd.f32 0.0, %v1113
    %v1115 = vpop.f32.mrb[0].mxu0
    %1116 = vmatprep.mubr.f32.mxu0 0.0
    %1117 = vmatmul.mubr.f32.gmra.mrb[0].mxu0 %v1033
    %v1118 = vpop.f32.mrb[0].mxu0
    %v1119 = vadd.f32 0.0, %v1118
    %v1120 = vpop.f32.mrb[0].mxu0
    %1121 = vmatprep.mubr.f32.mxu0 0.0
    %1122 = vmatmul.mubr.f32.gmra.mrb[0].mxu0 %v1036
    %v1123 = vpop.f32.mrb[0].mxu0
    %v1124 = vadd.f32 0.0, %v1123
    %v1125 = vpop.f32.mrb[0].mxu0
    %1126 = vdwg.mxu0
    %1127 = vxpose.xlu0.b32.start [1/16] %v734, 128
    %1128 = vxpose.xlu0.b32.cont [2/16] 0.0, 128
    %1129 = vxpose.xlu0.b32.cont [3/16] 0.0, 128
    %1130 = vxpose.xlu0.b32.cont [4/16] 0.0, 128
    %1131 = vxpose.xlu0.b32.cont [5/16] 0.0, 128
    %1132 = vxpose.xlu0.b32.cont [6/16] 0.0, 128
    %1133 = vxpose.xlu0.b32.cont [7/16] 0.0, 128
    %1134 = vxpose.xlu0.b32.cont [8/16] 0.0, 128
    %1135 = vxpose.xlu0.b32.cont [9/16] 0.0, 128
    %1136 = vxpose.xlu0.b32.cont [10/16] 0.0, 128
    %1137 = vxpose.xlu0.b32.cont [11/16] 0.0, 128
    %1138 = vxpose.xlu0.b32.cont [12/16] 0.0, 128
    %1139 = vxpose.xlu0.b32.cont [13/16] 0.0, 128
    %1140 = vxpose.xlu0.b32.cont [14/16] 0.0, 128
    %1141 = vxpose.xlu0.b32.cont [15/16] 0.0, 128
    %1142 = vxpose.xlu0.b32.end [16/16] 0.0, 128
    %v1143 = vpop.trf.xlu0
    %v1144 = vpop.trf.xlu0
    %v1145 = vpop.trf.xlu0
    %v1146 = vpop.trf.xlu0
    %v1147 = vpop.trf.xlu0
    %v1148 = vpop.trf.xlu0
    %v1149 = vpop.trf.xlu0
    %v1150 = vpop.trf.xlu0
    %v1151 = vpop.trf.xlu0
    %v1152 = vpop.trf.xlu0
    %v1153 = vpop.trf.xlu0
    %v1154 = vpop.trf.xlu0
    %v1155 = vpop.trf.xlu0
    %v1156 = vpop.trf.xlu0
    %v1157 = vpop.trf.xlu0
    %v1158 = vpop.trf.xlu0
    %v1160 = vsel %vm1025, %v1143, 0
    %v1163 = vsel %vm1025, %v1144, 0
    %1165 = vmatprep.subr.mxu0 0.0
    %1166 = vmatpush1.msra.mxu0 %v1040
    %1167 = vmatprep.subr.mxu0 0.0
    %1168 = vmatpush1.msra.mxu0 0.0
    %1169 = vmatprep.subr.mxu0 0.0
    %1170 = vmatpush1.msra.mxu0 0.0
    %1171 = vmatprep.subr.mxu0 0.0
    %1172 = vmatpush1.msra.mxu0 0.0
    %1173 = vmatprep.subr.mxu0 0.0
    %1174 = vmatpush1.msra.mxu0 0.0
    %1175 = vmatprep.subr.mxu0 0.0
    %1176 = vmatpush1.msra.mxu0 0.0
    %1177 = vmatprep.subr.mxu0 0.0
    %1178 = vmatpush1.msra.mxu0 0.0
    %1179 = vmatprep.subr.mxu0 0.0
    %1180 = vmatpush1.msra.mxu0 0.0
    %1181 = vmatprep.subr.mxu0 0.0
    %1182 = vmatpush1.msra.mxu0 0.0
    %1183 = vmatprep.subr.mxu0 0.0
    %1184 = vmatpush1.msra.mxu0 0.0
    %1185 = vmatprep.subr.mxu0 0.0
    %1186 = vmatpush1.msra.mxu0 0.0
    %1187 = vmatprep.subr.mxu0 0.0
    %1188 = vmatpush1.msra.mxu0 0.0
    %1189 = vmatprep.subr.mxu0 0.0
    %1190 = vmatpush1.msra.mxu0 0.0
    %1191 = vmatprep.subr.mxu0 0.0
    %1192 = vmatpush1.msra.mxu0 0.0
    %1193 = vmatprep.subr.mxu0 0.0
    %1194 = vmatpush1.msra.mxu0 0.0
    %1195 = vmatprep.subr.mxu0 0.0
    %1196 = vmatpush1.msra.mxu0 0.0
    %1197 = vmatprep.subr.mxu0 0.0
    %1198 = vmatpush1.msra.mxu0 0.0
    %1199 = vmatprep.subr.mxu0 0.0
    %1200 = vmatpush1.msra.mxu0 0.0
    %1201 = vmatprep.subr.mxu0 0.0
    %1202 = vmatpush1.msra.mxu0 0.0
    %1203 = vmatprep.subr.mxu0 0.0
    %1204 = vmatpush1.msra.mxu0 0.0
    %1205 = vmatprep.subr.mxu0 0.0
    %1206 = vmatpush1.msra.mxu0 0.0
    %1207 = vmatprep.subr.mxu0 0.0
    %1208 = vmatpush1.msra.mxu0 0.0
    %1209 = vmatprep.subr.mxu0 0.0
    %1210 = vmatpush1.msra.mxu0 0.0
    %1211 = vmatprep.subr.mxu0 0.0
    %1212 = vmatpush1.msra.mxu0 0.0
    %1213 = vmatprep.subr.mxu0 0.0
    %1214 = vmatpush1.msra.mxu0 0.0
    %1215 = vmatprep.subr.mxu0 0.0
    %1216 = vmatpush1.msra.mxu0 0.0
    %1217 = vmatprep.subr.mxu0 0.0
    %1218 = vmatpush1.msra.mxu0 0.0
    %1219 = vmatprep.subr.mxu0 0.0
    %1220 = vmatpush1.msra.mxu0 0.0
    %1221 = vmatprep.subr.mxu0 0.0
    %1222 = vmatpush1.msra.mxu0 0.0
    %1223 = vmatprep.subr.mxu0 0.0
    %1224 = vmatpush1.msra.mxu0 0.0
    %1225 = vmatprep.subr.mxu0 0.0
    %1226 = vmatpush1.msra.mxu0 0.0
    %1227 = vmatprep.subr.mxu0 0.0
    %1228 = vmatpush1.msra.mxu0 0.0
    %1229 = vmatprep.mubr.f32.mxu0 0.0
    %1230 = vmatmul.mubr.f32.gmra.mrb[0].mxu0 %v1160
    %v1231 = vpop.f32.mrb[0].mxu0
    %v1232 = vadd.f32 0.0, %v1231
    %v1233 = vpop.f32.mrb[0].mxu0
    %1234 = vmatprep.mubr.f32.mxu0 0.0
    %1235 = vmatmul.mubr.f32.gmra.mrb[0].mxu0 %v1163
    %v1236 = vpop.f32.mrb[0].mxu0
    %v1237 = vadd.f32 0.0, %v1236
    %v1238 = vpop.f32.mrb[0].mxu0
    %1239 = vdwg.mxu0
    %v1240 = vld [vmem:[%s13] sm:$0xff]
    %v1241 = vld [vmem:[%s13 + $0x8] sm:$0xff]
    %v1242 = vld [vmem:[%s13 + $0x10] sm:$0xff]
    %v1243 = vld [vmem:[%s13 + $0x18] sm:$0xff]
    %v1244 = vld [vmem:[%s13 + $0x20] sm:$0xff]
    %v1245 = vld [vmem:[%s13 + $0x28] sm:$0xff]
    %v1246 = vld [vmem:[%s13 + $0x30] sm:$0xff]
    %v1247 = vld [vmem:[%s13 + $0x38] sm:$0xff]
    %v1248 = vld [vmem:[%s13 + $0x40] sm:$0xff]
    %v1249 = vld [vmem:[%s13 + $0x48] sm:$0xff]
    %v1250 = vld [vmem:[%s13 + $0x50] sm:$0xff]
    %v1251 = vld [vmem:[%s13 + $0x58] sm:$0xff]
    %v1252 = vld [vmem:[%s13 + $0x60] sm:$0xff]
    %v1253 = vld [vmem:[%s13 + $0x68] sm:$0xff]
    %v1254 = vld [vmem:[%s13 + $0x70] sm:$0xff]
    %v1255 = vld [vmem:[%s13 + $0x78] sm:$0xff]
    %vm1256 = vcmask 261120
    %v1258 = vsel %vm1256, %v975, 0
    %v1261 = vsel %vm1256, %v980, 0
    %v1264 = vsel %vm1256, %v985, 0
    %v1267 = vsel %vm1256, %v990, 0
    %1269 = vmatprep.subr.mxu0 0.0
    %1270 = vmatpush1.msra.mxu0 %v1244
    %1271 = vmatprep.subr.mxu0 0.0
    %1272 = vmatpush1.msra.mxu0 %v1245
    %1273 = vmatprep.subr.mxu0 0.0
    %1274 = vmatpush1.msra.mxu0 %v1246
    %1275 = vmatprep.subr.mxu0 0.0
    %1276 = vmatpush1.msra.mxu0 %v1247
    %1277 = vmatprep.subr.mxu0 0.0
    %1278 = vmatpush1.msra.mxu0 0.0
    %1279 = vmatprep.subr.mxu0 0.0
    %1280 = vmatpush1.msra.mxu0 0.0
    %1281 = vmatprep.subr.mxu0 0.0
    %1282 = vmatpush1.msra.mxu0 0.0
    %1283 = vmatprep.subr.mxu0 0.0
    %1284 = vmatpush1.msra.mxu0 0.0
    %1285 = vmatprep.subr.mxu0 0.0
    %1286 = vmatpush1.msra.mxu0 0.0
    %1287 = vmatprep.subr.mxu0 0.0
    %1288 = vmatpush1.msra.mxu0 0.0
    %1289 = vmatprep.subr.mxu0 0.0
    %1290 = vmatpush1.msra.mxu0 0.0
    %1291 = vmatprep.subr.mxu0 0.0
    %1292 = vmatpush1.msra.mxu0 0.0
    %1293 = vmatprep.subr.mxu0 0.0
    %1294 = vmatpush1.msra.mxu0 0.0
    %1295 = vmatprep.subr.mxu0 0.0
    %1296 = vmatpush1.msra.mxu0 0.0
    %1297 = vmatprep.subr.mxu0 0.0
    %1298 = vmatpush1.msra.mxu0 0.0
    %1299 = vmatprep.subr.mxu0 0.0
    %1300 = vmatpush1.msra.mxu0 0.0
    %1301 = vmatprep.subr.mxu0 0.0
    %1302 = vmatpush1.msra.mxu0 0.0
    %1303 = vmatprep.subr.mxu0 0.0
    %1304 = vmatpush1.msra.mxu0 0.0
    %1305 = vmatprep.subr.mxu0 0.0
    %1306 = vmatpush1.msra.mxu0 0.0
    %1307 = vmatprep.subr.mxu0 0.0
    %1308 = vmatpush1.msra.mxu0 0.0
    %1309 = vmatprep.subr.mxu0 0.0
    %1310 = vmatpush1.msra.mxu0 0.0
    %1311 = vmatprep.subr.mxu0 0.0
    %1312 = vmatpush1.msra.mxu0 0.0
    %1313 = vmatprep.subr.mxu0 0.0
    %1314 = vmatpush1.msra.mxu0 0.0
    %1315 = vmatprep.subr.mxu0 0.0
    %1316 = vmatpush1.msra.mxu0 0.0
    %1317 = vmatprep.subr.mxu0 0.0
    %1318 = vmatpush1.msra.mxu0 0.0
    %1319 = vmatprep.subr.mxu0 0.0
    %1320 = vmatpush1.msra.mxu0 0.0
    %1321 = vmatprep.subr.mxu0 0.0
    %1322 = vmatpush1.msra.mxu0 0.0
    %1323 = vmatprep.subr.mxu0 0.0
    %1324 = vmatpush1.msra.mxu0 0.0
    %1325 = vmatprep.subr.mxu0 0.0
    %1326 = vmatpush1.msra.mxu0 0.0
    %1327 = vmatprep.subr.mxu0 0.0
    %1328 = vmatpush1.msra.mxu0 0.0
    %1329 = vmatprep.subr.mxu0 0.0
    %1330 = vmatpush1.msra.mxu0 0.0
    %1331 = vmatprep.subr.mxu0 0.0
    %1332 = vmatpush1.msra.mxu0 0.0
    %1333 = vmatprep.mubr.f32.mxu0 0.0
    %1334 = vmatmul.mubr.f32.gmra.mrb[0].mxu0 %v1258
    %v1335 = vpop.f32.mrb[0].mxu0
    %v1336 = vadd.f32 0.0, %v1335
    %v1337 = vpop.f32.mrb[0].mxu0
    %1338 = vmatprep.mubr.f32.mxu0 0.0
    %1339 = vmatmul.mubr.f32.gmra.mrb[0].mxu0 %v1261
    %v1340 = vpop.f32.mrb[0].mxu0
    %v1341 = vadd.f32 0.0, %v1340
    %v1342 = vpop.f32.mrb[0].mxu0
    %1343 = vmatprep.mubr.f32.mxu0 0.0
    %1344 = vmatmul.mubr.f32.gmra.mrb[0].mxu0 %v1264
    %v1345 = vpop.f32.mrb[0].mxu0
    %v1346 = vadd.f32 0.0, %v1345
    %v1347 = vpop.f32.mrb[0].mxu0
    %1348 = vmatprep.mubr.f32.mxu0 0.0
    %1349 = vmatmul.mubr.f32.gmra.mrb[0].mxu0 %v1267
    %v1350 = vpop.f32.mrb[0].mxu0
    %v1351 = vadd.f32 0.0, %v1350
    %v1352 = vpop.f32.mrb[0].mxu0
    %1353 = vdwg.mxu0
    %v1355 = vsel %vm1256, %v846, 0
    %v1358 = vsel %vm1256, %v851, 0
    %v1361 = vsel %vm1256, %v856, 0
    %v1364 = vsel %vm1256, %v861, 0
    %1366 = vmatprep.subr.mxu0 0.0
    %1367 = vmatpush1.msra.mxu0 %v1240
    %1368 = vmatprep.subr.mxu0 0.0
    %1369 = vmatpush1.msra.mxu0 %v1241
    %1370 = vmatprep.subr.mxu0 0.0
    %1371 = vmatpush1.msra.mxu0 %v1242
    %1372 = vmatprep.subr.mxu0 0.0
    %1373 = vmatpush1.msra.mxu0 %v1243
    %1374 = vmatprep.subr.mxu0 0.0
    %1375 = vmatpush1.msra.mxu0 0.0
    %1376 = vmatprep.subr.mxu0 0.0
    %1377 = vmatpush1.msra.mxu0 0.0
    %1378 = vmatprep.subr.mxu0 0.0
    %1379 = vmatpush1.msra.mxu0 0.0
    %1380 = vmatprep.subr.mxu0 0.0
    %1381 = vmatpush1.msra.mxu0 0.0
    %1382 = vmatprep.subr.mxu0 0.0
    %1383 = vmatpush1.msra.mxu0 0.0
    %1384 = vmatprep.subr.mxu0 0.0
    %1385 = vmatpush1.msra.mxu0 0.0
    %1386 = vmatprep.subr.mxu0 0.0
    %1387 = vmatpush1.msra.mxu0 0.0
    %1388 = vmatprep.subr.mxu0 0.0
    %1389 = vmatpush1.msra.mxu0 0.0
    %1390 = vmatprep.subr.mxu0 0.0
    %1391 = vmatpush1.msra.mxu0 0.0
    %1392 = vmatprep.subr.mxu0 0.0
    %1393 = vmatpush1.msra.mxu0 0.0
    %1394 = vmatprep.subr.mxu0 0.0
    %1395 = vmatpush1.msra.mxu0 0.0
    %1396 = vmatprep.subr.mxu0 0.0
    %1397 = vmatpush1.msra.mxu0 0.0
    %1398 = vmatprep.subr.mxu0 0.0
    %1399 = vmatpush1.msra.mxu0 0.0
    %1400 = vmatprep.subr.mxu0 0.0
    %1401 = vmatpush1.msra.mxu0 0.0
    %1402 = vmatprep.subr.mxu0 0.0
    %1403 = vmatpush1.msra.mxu0 0.0
    %1404 = vmatprep.subr.mxu0 0.0
    %1405 = vmatpush1.msra.mxu0 0.0
    %1406 = vmatprep.subr.mxu0 0.0
    %1407 = vmatpush1.msra.mxu0 0.0
    %1408 = vmatprep.subr.mxu0 0.0
    %1409 = vmatpush1.msra.mxu0 0.0
    %1410 = vmatprep.subr.mxu0 0.0
    %1411 = vmatpush1.msra.mxu0 0.0
    %1412 = vmatprep.subr.mxu0 0.0
    %1413 = vmatpush1.msra.mxu0 0.0
    %1414 = vmatprep.subr.mxu0 0.0
    %1415 = vmatpush1.msra.mxu0 0.0
    %1416 = vmatprep.subr.mxu0 0.0
    %1417 = vmatpush1.msra.mxu0 0.0
    %1418 = vmatprep.subr.mxu0 0.0
    %1419 = vmatpush1.msra.mxu0 0.0
    %1420 = vmatprep.subr.mxu0 0.0
    %1421 = vmatpush1.msra.mxu0 0.0
    %1422 = vmatprep.subr.mxu0 0.0
    %1423 = vmatpush1.msra.mxu0 0.0
    %1424 = vmatprep.subr.mxu0 0.0
    %1425 = vmatpush1.msra.mxu0 0.0
    %1426 = vmatprep.subr.mxu0 0.0
    %1427 = vmatpush1.msra.mxu0 0.0
    %1428 = vmatprep.subr.mxu0 0.0
    %1429 = vmatpush1.msra.mxu0 0.0
    %1430 = vmatprep.mubr.f32.mxu0 0.0
    %1431 = vmatmul.mubr.f32.gmra.mrb[0].mxu0 %v1355
    %v1432 = vpop.f32.mrb[0].mxu0
    %v1433 = vadd.f32 %v1336, %v1432
    %v1434 = vpop.f32.mrb[0].mxu0
    %1435 = vmatprep.mubr.f32.mxu0 0.0
    %1436 = vmatmul.mubr.f32.gmra.mrb[0].mxu0 %v1358
    %v1437 = vpop.f32.mrb[0].mxu0
    %v1438 = vadd.f32 %v1341, %v1437
    %v1439 = vpop.f32.mrb[0].mxu0
    %1440 = vmatprep.mubr.f32.mxu0 0.0
    %1441 = vmatmul.mubr.f32.gmra.mrb[0].mxu0 %v1361
    %v1442 = vpop.f32.mrb[0].mxu0
    %v1443 = vadd.f32 %v1346, %v1442
    %v1444 = vpop.f32.mrb[0].mxu0
    %1445 = vmatprep.mubr.f32.mxu0 0.0
    %1446 = vmatmul.mubr.f32.gmra.mrb[0].mxu0 %v1364
    %v1447 = vpop.f32.mrb[0].mxu0
    %v1448 = vadd.f32 %v1351, %v1447
    %v1449 = vpop.f32.mrb[0].mxu0
    %1450 = vdwg.mxu0
    %v1452 = vsel %vm1256, %v308, 0
    %v1455 = vsel %vm1256, %v309, 0
    %v1458 = vsel %vm1256, %v310, 0
    %v1461 = vsel %vm1256, %v311, 0
    %1463 = vmatprep.subr.mxu0 0.0
    %1464 = vmatpush1.msra.mxu0 %v1248
    %1465 = vmatprep.subr.mxu0 0.0
    %1466 = vmatpush1.msra.mxu0 %v1249
    %1467 = vmatprep.subr.mxu0 0.0
    %1468 = vmatpush1.msra.mxu0 %v1250
    %1469 = vmatprep.subr.mxu0 0.0
    %1470 = vmatpush1.msra.mxu0 %v1251
    %1471 = vmatprep.subr.mxu0 0.0
    %1472 = vmatpush1.msra.mxu0 0.0
    %1473 = vmatprep.subr.mxu0 0.0
    %1474 = vmatpush1.msra.mxu0 0.0
    %1475 = vmatprep.subr.mxu0 0.0
    %1476 = vmatpush1.msra.mxu0 0.0
    %1477 = vmatprep.subr.mxu0 0.0
    %1478 = vmatpush1.msra.mxu0 0.0
    %1479 = vmatprep.subr.mxu0 0.0
    %1480 = vmatpush1.msra.mxu0 0.0
    %1481 = vmatprep.subr.mxu0 0.0
    %1482 = vmatpush1.msra.mxu0 0.0
    %1483 = vmatprep.subr.mxu0 0.0
    %1484 = vmatpush1.msra.mxu0 0.0
    %1485 = vmatprep.subr.mxu0 0.0
    %1486 = vmatpush1.msra.mxu0 0.0
    %1487 = vmatprep.subr.mxu0 0.0
    %1488 = vmatpush1.msra.mxu0 0.0
    %1489 = vmatprep.subr.mxu0 0.0
    %1490 = vmatpush1.msra.mxu0 0.0
    %1491 = vmatprep.subr.mxu0 0.0
    %1492 = vmatpush1.msra.mxu0 0.0
    %1493 = vmatprep.subr.mxu0 0.0
    %1494 = vmatpush1.msra.mxu0 0.0
    %1495 = vmatprep.subr.mxu0 0.0
    %1496 = vmatpush1.msra.mxu0 0.0
    %1497 = vmatprep.subr.mxu0 0.0
    %1498 = vmatpush1.msra.mxu0 0.0
    %1499 = vmatprep.subr.mxu0 0.0
    %1500 = vmatpush1.msra.mxu0 0.0
    %1501 = vmatprep.subr.mxu0 0.0
    %1502 = vmatpush1.msra.mxu0 0.0
    %1503 = vmatprep.subr.mxu0 0.0
    %1504 = vmatpush1.msra.mxu0 0.0
    %1505 = vmatprep.subr.mxu0 0.0
    %1506 = vmatpush1.msra.mxu0 0.0
    %1507 = vmatprep.subr.mxu0 0.0
    %1508 = vmatpush1.msra.mxu0 0.0
    %1509 = vmatprep.subr.mxu0 0.0
    %1510 = vmatpush1.msra.mxu0 0.0
    %1511 = vmatprep.subr.mxu0 0.0
    %1512 = vmatpush1.msra.mxu0 0.0
    %1513 = vmatprep.subr.mxu0 0.0
    %1514 = vmatpush1.msra.mxu0 0.0
    %1515 = vmatprep.subr.mxu0 0.0
    %1516 = vmatpush1.msra.mxu0 0.0
    %1517 = vmatprep.subr.mxu0 0.0
    %1518 = vmatpush1.msra.mxu0 0.0
    %1519 = vmatprep.subr.mxu0 0.0
    %1520 = vmatpush1.msra.mxu0 0.0
    %1521 = vmatprep.subr.mxu0 0.0
    %1522 = vmatpush1.msra.mxu0 0.0
    %1523 = vmatprep.subr.mxu0 0.0
    %1524 = vmatpush1.msra.mxu0 0.0
    %1525 = vmatprep.subr.mxu0 0.0
    %1526 = vmatpush1.msra.mxu0 0.0
    %1527 = vmatprep.mubr.f32.mxu0 0.0
    %1528 = vmatmul.mubr.f32.gmra.mrb[0].mxu0 %v1452
    %v1529 = vpop.f32.mrb[0].mxu0
    %v1530 = vadd.f32 0.0, %v1529
    %v1531 = vpop.f32.mrb[0].mxu0
    %1532 = vmatprep.mubr.f32.mxu0 0.0
    %1533 = vmatmul.mubr.f32.gmra.mrb[0].mxu0 %v1455
    %v1534 = vpop.f32.mrb[0].mxu0
    %v1535 = vadd.f32 0.0, %v1534
    %v1536 = vpop.f32.mrb[0].mxu0
    %1537 = vmatprep.mubr.f32.mxu0 0.0
    %1538 = vmatmul.mubr.f32.gmra.mrb[0].mxu0 %v1458
    %v1539 = vpop.f32.mrb[0].mxu0
    %v1540 = vadd.f32 0.0, %v1539
    %v1541 = vpop.f32.mrb[0].mxu0
    %1542 = vmatprep.mubr.f32.mxu0 0.0
    %1543 = vmatmul.mubr.f32.gmra.mrb[0].mxu0 %v1461
    %v1544 = vpop.f32.mrb[0].mxu0
    %v1545 = vadd.f32 0.0, %v1544
    %v1546 = vpop.f32.mrb[0].mxu0
    %1547 = vdwg.mxu0
    %v1548 = vadd.f32 %v1433, %v1530
    %v1549 = vadd.f32 %v1438, %v1535
    %v1550 = vadd.f32 %v1443, %v1540
    %v1551 = vadd.f32 %v1448, %v1545
    %v1553 = vsel %vm1256, %v1109, 0
    %v1556 = vsel %vm1256, %v1114, 0
    %v1559 = vsel %vm1256, %v1119, 0
    %v1562 = vsel %vm1256, %v1124, 0
    %1564 = vmatprep.subr.mxu0 0.0
    %1565 = vmatpush1.msra.mxu0 %v1252
    %1566 = vmatprep.subr.mxu0 0.0
    %1567 = vmatpush1.msra.mxu0 %v1253
    %1568 = vmatprep.subr.mxu0 0.0
    %1569 = vmatpush1.msra.mxu0 %v1254
    %1570 = vmatprep.subr.mxu0 0.0
    %1571 = vmatpush1.msra.mxu0 %v1255
    %1572 = vmatprep.subr.mxu0 0.0
    %1573 = vmatpush1.msra.mxu0 0.0
    %1574 = vmatprep.subr.mxu0 0.0
    %1575 = vmatpush1.msra.mxu0 0.0
    %1576 = vmatprep.subr.mxu0 0.0
    %1577 = vmatpush1.msra.mxu0 0.0
    %1578 = vmatprep.subr.mxu0 0.0
    %1579 = vmatpush1.msra.mxu0 0.0
    %1580 = vmatprep.subr.mxu0 0.0
    %1581 = vmatpush1.msra.mxu0 0.0
    %1582 = vmatprep.subr.mxu0 0.0
    %1583 = vmatpush1.msra.mxu0 0.0
    %1584 = vmatprep.subr.mxu0 0.0
    %1585 = vmatpush1.msra.mxu0 0.0
    %1586 = vmatprep.subr.mxu0 0.0
    %1587 = vmatpush1.msra.mxu0 0.0
    %1588 = vmatprep.subr.mxu0 0.0
    %1589 = vmatpush1.msra.mxu0 0.0
    %1590 = vmatprep.subr.mxu0 0.0
    %1591 = vmatpush1.msra.mxu0 0.0
    %1592 = vmatprep.subr.mxu0 0.0
    %1593 = vmatpush1.msra.mxu0 0.0
    %1594 = vmatprep.subr.mxu0 0.0
    %1595 = vmatpush1.msra.mxu0 0.0
    %1596 = vmatprep.subr.mxu0 0.0
    %1597 = vmatpush1.msra.mxu0 0.0
    %1598 = vmatprep.subr.mxu0 0.0
    %1599 = vmatpush1.msra.mxu0 0.0
    %1600 = vmatprep.subr.mxu0 0.0
    %1601 = vmatpush1.msra.mxu0 0.0
    %1602 = vmatprep.subr.mxu0 0.0
    %1603 = vmatpush1.msra.mxu0 0.0
    %1604 = vmatprep.subr.mxu0 0.0
    %1605 = vmatpush1.msra.mxu0 0.0
    %1606 = vmatprep.subr.mxu0 0.0
    %1607 = vmatpush1.msra.mxu0 0.0
    %1608 = vmatprep.subr.mxu0 0.0
    %1609 = vmatpush1.msra.mxu0 0.0
    %1610 = vmatprep.subr.mxu0 0.0
    %1611 = vmatpush1.msra.mxu0 0.0
    %1612 = vmatprep.subr.mxu0 0.0
    %1613 = vmatpush1.msra.mxu0 0.0
    %1614 = vmatprep.subr.mxu0 0.0
    %1615 = vmatpush1.msra.mxu0 0.0
    %1616 = vmatprep.subr.mxu0 0.0
    %1617 = vmatpush1.msra.mxu0 0.0
    %1618 = vmatprep.subr.mxu0 0.0
    %1619 = vmatpush1.msra.mxu0 0.0
    %1620 = vmatprep.subr.mxu0 0.0
    %1621 = vmatpush1.msra.mxu0 0.0
    %1622 = vmatprep.subr.mxu0 0.0
    %1623 = vmatpush1.msra.mxu0 0.0
    %1624 = vmatprep.subr.mxu0 0.0
    %1625 = vmatpush1.msra.mxu0 0.0
    %1626 = vmatprep.subr.mxu0 0.0
    %1627 = vmatpush1.msra.mxu0 0.0
    %1628 = vmatprep.mubr.f32.mxu0 0.0
    %1629 = vmatmul.mubr.f32.gmra.mrb[0].mxu0 %v1553
    %v1630 = vpop.f32.mrb[0].mxu0
    %v1631 = vadd.f32 0.0, %v1630
    %v1632 = vpop.f32.mrb[0].mxu0
    %1633 = vmatprep.mubr.f32.mxu0 0.0
    %1634 = vmatmul.mubr.f32.gmra.mrb[0].mxu0 %v1556
    %v1635 = vpop.f32.mrb[0].mxu0
    %v1636 = vadd.f32 0.0, %v1635
    %v1637 = vpop.f32.mrb[0].mxu0
    %1638 = vmatprep.mubr.f32.mxu0 0.0
    %1639 = vmatmul.mubr.f32.gmra.mrb[0].mxu0 %v1559
    %v1640 = vpop.f32.mrb[0].mxu0
    %v1641 = vadd.f32 0.0, %v1640
    %v1642 = vpop.f32.mrb[0].mxu0
    %1643 = vmatprep.mubr.f32.mxu0 0.0
    %1644 = vmatmul.mubr.f32.gmra.mrb[0].mxu0 %v1562
    %v1645 = vpop.f32.mrb[0].mxu0
    %v1646 = vadd.f32 0.0, %v1645
    %v1647 = vpop.f32.mrb[0].mxu0
    %1648 = vdwg.mxu0
    %v1649 = vadd.f32 %v1548, %v1631
    %v1650 = vadd.f32 %v1549, %v1636
    %v1651 = vadd.f32 %v1550, %v1641
    %v1652 = vadd.f32 %v1551, %v1646
    %v1653 = vld [vmem:[%s16] sm:$0xff]
    %v1654 = vld [vmem:[%s16 + $0x8] sm:$0xff]
    %v1655 = vld [vmem:[%s16 + $0x10] sm:$0xff]
    %v1656 = vld [vmem:[%s16 + $0x18] sm:$0xff]
    %s1657 = scalar_lea.vmem %s16, 32
    %v1658 = vld [vmem:[%s1657] sm:$0xff]
    %v1659 = vld [vmem:[%s1657 + $0x8] sm:$0xff]
    %v1660 = vld [vmem:[%s1657 + $0x10] sm:$0xff]
    %v1661 = vld [vmem:[%s1657 + $0x18] sm:$0xff]
    %v1662 = vld [vmem:[%s17] sm:$0x7]
    %v1663 = vlaneseq
    %v1664 = vshrl.u32 %v1663, 7
    %v1665 = vsub.s32 0, %v1664
    %v1666 = vrot.slane %v1662, %v1665
    %v1667 = vadd.f32 %v1649, %v1666
    %v1668 = vadd.f32 %v1650, %v1666
    %v1669 = vadd.f32 %v1651, %v1666
    %v1670 = vadd.f32 %v1652, %v1666
    %v1671 = vmax.f32 %v1667, 0.0
    %v1672 = vmax.f32 %v1668, 0.0
    %v1673 = vmax.f32 %v1669, 0.0
    %v1674 = vmax.f32 %v1670, 0.0
    %v1675 = vand.u32 2147483647, %v1667
    %v1676 = vand.u32 2147483647, %v1668
    %v1677 = vand.u32 2147483647, %v1669
    %v1678 = vand.u32 2147483647, %v1670
    %v1679 = vsub.f32 0.0, %v1675
    %v1680 = vsub.f32 0.0, %v1676
    %v1681 = vsub.f32 0.0, %v1677
    %v1682 = vsub.f32 0.0, %v1678
    %v1683 = vmul.f32 %v1679, 1.442695
    %v1684 = vpow.pop %v1683
    %v1685 = vmul.f32 %v1680, 1.442695
    %v1686 = vpow.pop %v1685
    %v1687 = vmul.f32 %v1681, 1.442695
    %v1688 = vpow.pop %v1687
    %v1689 = vmul.f32 %v1682, 1.442695
    %v1690 = vpow.pop %v1689
    %v1691 = vadd.f32 %v1684, 1.0
    %v1692 = vlog2.pop %v1691
    %v1693 = vmul.f32 %v1692, 0.6931472
    %v1694 = vmul.f32 -0.5, %v1684
    %v1695 = vadd.f32 %v1694, 1.0
    %v1696 = vmul.f32 %v1695, %v1684
    %v1697 = vand.u32 2147483647, %v1684
    %vm1698 = vcmp.lt.f32.partialorder %v1697, 0.0004427343
    %v1699 = vsel %vm1698, %v1696, %v1693
    %v1700 = vadd.f32 %v1686, 1.0
    %v1701 = vlog2.pop %v1700
    %v1702 = vmul.f32 %v1701, 0.6931472
    %v1703 = vmul.f32 -0.5, %v1686
    %v1704 = vadd.f32 %v1703, 1.0
    %v1705 = vmul.f32 %v1704, %v1686
    %v1706 = vand.u32 2147483647, %v1686
    %vm1707 = vcmp.lt.f32.partialorder %v1706, 0.0004427343
    %v1708 = vsel %vm1707, %v1705, %v1702
    %v1709 = vadd.f32 %v1688, 1.0
    %v1710 = vlog2.pop %v1709
    %v1711 = vmul.f32 %v1710, 0.6931472
    %v1712 = vmul.f32 -0.5, %v1688
    %v1713 = vadd.f32 %v1712, 1.0
    %v1714 = vmul.f32 %v1713, %v1688
    %v1715 = vand.u32 2147483647, %v1688
    %vm1716 = vcmp.lt.f32.partialorder %v1715, 0.0004427343
    %v1717 = vsel %vm1716, %v1714, %v1711
    %v1718 = vadd.f32 %v1690, 1.0
    %v1719 = vlog2.pop %v1718
    %v1720 = vmul.f32 %v1719, 0.6931472
    %v1721 = vmul.f32 -0.5, %v1690
    %v1722 = vadd.f32 %v1721, 1.0
    %v1723 = vmul.f32 %v1722, %v1690
    %v1724 = vand.u32 2147483647, %v1690
    %vm1725 = vcmp.lt.f32.partialorder %v1724, 0.0004427343
    %v1726 = vsel %vm1725, %v1723, %v1720
    %v1727 = vadd.f32 %v1671, %v1699
    %v1728 = vadd.f32 %v1672, %v1708
    %v1729 = vadd.f32 %v1673, %v1717
    %v1730 = vadd.f32 %v1674, %v1726
    %v1731 = vlaneseq
    %v1732 = vshrl.u32 %v1731, 7
    %v1733 = vsub.s32 1, %v1732
    %v1734 = vrot.slane %v1662, %v1733
    %v1736 = vsel %vm1256, %v1727, 0
    %v1739 = vsel %vm1256, %v1728, 0
    %v1742 = vsel %vm1256, %v1729, 0
    %v1745 = vsel %vm1256, %v1730, 0
    %1747 = vmatprep.subr.mxu0 0.0
    %1748 = vmatpush1.msra.mxu0 %v1653
    %1749 = vmatprep.subr.mxu0 0.0
    %1750 = vmatpush1.msra.mxu0 %v1654
    %1751 = vmatprep.subr.mxu0 0.0
    %1752 = vmatpush1.msra.mxu0 %v1655
    %1753 = vmatprep.subr.mxu0 0.0
    %1754 = vmatpush1.msra.mxu0 %v1656
    %1755 = vmatprep.subr.mxu0 0.0
    %1756 = vmatpush1.msra.mxu0 0.0
    %1757 = vmatprep.subr.mxu0 0.0
    %1758 = vmatpush1.msra.mxu0 0.0
    %1759 = vmatprep.subr.mxu0 0.0
    %1760 = vmatpush1.msra.mxu0 0.0
    %1761 = vmatprep.subr.mxu0 0.0
    %1762 = vmatpush1.msra.mxu0 0.0
    %1763 = vmatprep.subr.mxu0 0.0
    %1764 = vmatpush1.msra.mxu0 0.0
    %1765 = vmatprep.subr.mxu0 0.0
    %1766 = vmatpush1.msra.mxu0 0.0
    %1767 = vmatprep.subr.mxu0 0.0
    %1768 = vmatpush1.msra.mxu0 0.0
    %1769 = vmatprep.subr.mxu0 0.0
    %1770 = vmatpush1.msra.mxu0 0.0
    %1771 = vmatprep.subr.mxu0 0.0
    %1772 = vmatpush1.msra.mxu0 0.0
    %1773 = vmatprep.subr.mxu0 0.0
    %1774 = vmatpush1.msra.mxu0 0.0
    %1775 = vmatprep.subr.mxu0 0.0
    %1776 = vmatpush1.msra.mxu0 0.0
    %1777 = vmatprep.subr.mxu0 0.0
    %1778 = vmatpush1.msra.mxu0 0.0
    %1779 = vmatprep.subr.mxu0 0.0
    %1780 = vmatpush1.msra.mxu0 0.0
    %1781 = vmatprep.subr.mxu0 0.0
    %1782 = vmatpush1.msra.mxu0 0.0
    %1783 = vmatprep.subr.mxu0 0.0
    %1784 = vmatpush1.msra.mxu0 0.0
    %1785 = vmatprep.subr.mxu0 0.0
    %1786 = vmatpush1.msra.mxu0 0.0
    %1787 = vmatprep.subr.mxu0 0.0
    %1788 = vmatpush1.msra.mxu0 0.0
    %1789 = vmatprep.subr.mxu0 0.0
    %1790 = vmatpush1.msra.mxu0 0.0
    %1791 = vmatprep.subr.mxu0 0.0
    %1792 = vmatpush1.msra.mxu0 0.0
    %1793 = vmatprep.subr.mxu0 0.0
    %1794 = vmatpush1.msra.mxu0 0.0
    %1795 = vmatprep.subr.mxu0 0.0
    %1796 = vmatpush1.msra.mxu0 0.0
    %1797 = vmatprep.subr.mxu0 0.0
    %1798 = vmatpush1.msra.mxu0 0.0
    %1799 = vmatprep.subr.mxu0 0.0
    %1800 = vmatpush1.msra.mxu0 0.0
    %1801 = vmatprep.subr.mxu0 0.0
    %1802 = vmatpush1.msra.mxu0 0.0
    %1803 = vmatprep.subr.mxu0 0.0
    %1804 = vmatpush1.msra.mxu0 0.0
    %1805 = vmatprep.subr.mxu0 0.0
    %1806 = vmatpush1.msra.mxu0 0.0
    %1807 = vmatprep.subr.mxu0 0.0
    %1808 = vmatpush1.msra.mxu0 0.0
    %1809 = vmatprep.subr.mxu0 0.0
    %1810 = vmatpush1.msra.mxu0 0.0
    %1811 = vmatprep.mubr.f32.mxu0 0.0
    %1812 = vmatmul.mubr.f32.gmra.mrb[0].mxu0 %v1736
    %v1813 = vpop.f32.mrb[0].mxu0
    %v1814 = vadd.f32 %v1734, %v1813
    %v1815 = vpop.f32.mrb[0].mxu0
    %1816 = vmatprep.mubr.f32.mxu0 0.0
    %1817 = vmatmul.mubr.f32.gmra.mrb[0].mxu0 %v1739
    %v1818 = vpop.f32.mrb[0].mxu0
    %v1819 = vadd.f32 %v1734, %v1818
    %v1820 = vpop.f32.mrb[0].mxu0
    %1821 = vmatprep.mubr.f32.mxu0 0.0
    %1822 = vmatmul.mubr.f32.gmra.mrb[0].mxu0 %v1742
    %v1823 = vpop.f32.mrb[0].mxu0
    %v1824 = vadd.f32 %v1734, %v1823
    %v1825 = vpop.f32.mrb[0].mxu0
    %1826 = vmatprep.mubr.f32.mxu0 0.0
    %1827 = vmatmul.mubr.f32.gmra.mrb[0].mxu0 %v1745
    %v1828 = vpop.f32.mrb[0].mxu0
    %v1829 = vadd.f32 %v1734, %v1828
    %v1830 = vpop.f32.mrb[0].mxu0
    %1831 = vdwg.mxu0
    %v1832 = vmax.f32 %v1814, 0.0
    %v1833 = vmax.f32 %v1819, 0.0
    %v1834 = vmax.f32 %v1824, 0.0
    %v1835 = vmax.f32 %v1829, 0.0
    %v1836 = vand.u32 2147483647, %v1814
    %v1837 = vand.u32 2147483647, %v1819
    %v1838 = vand.u32 2147483647, %v1824
    %v1839 = vand.u32 2147483647, %v1829
    %v1840 = vsub.f32 0.0, %v1836
    %v1841 = vsub.f32 0.0, %v1837
    %v1842 = vsub.f32 0.0, %v1838
    %v1843 = vsub.f32 0.0, %v1839
    %v1844 = vmul.f32 %v1840, 1.442695
    %v1845 = vpow.pop %v1844
    %v1846 = vmul.f32 %v1841, 1.442695
    %v1847 = vpow.pop %v1846
    %v1848 = vmul.f32 %v1842, 1.442695
    %v1849 = vpow.pop %v1848
    %v1850 = vmul.f32 %v1843, 1.442695
    %v1851 = vpow.pop %v1850
    %v1852 = vadd.f32 %v1845, 1.0
    %v1853 = vlog2.pop %v1852
    %v1854 = vmul.f32 %v1853, 0.6931472
    %v1855 = vmul.f32 -0.5, %v1845
    %v1856 = vadd.f32 %v1855, 1.0
    %v1857 = vmul.f32 %v1856, %v1845
    %v1858 = vand.u32 2147483647, %v1845
    %vm1859 = vcmp.lt.f32.partialorder %v1858, 0.0004427343
    %v1860 = vsel %vm1859, %v1857, %v1854
    %v1861 = vadd.f32 %v1847, 1.0
    %v1862 = vlog2.pop %v1861
    %v1863 = vmul.f32 %v1862, 0.6931472
    %v1864 = vmul.f32 -0.5, %v1847
    %v1865 = vadd.f32 %v1864, 1.0
    %v1866 = vmul.f32 %v1865, %v1847
    %v1867 = vand.u32 2147483647, %v1847
    %vm1868 = vcmp.lt.f32.partialorder %v1867, 0.0004427343
    %v1869 = vsel %vm1868, %v1866, %v1863
    %v1870 = vadd.f32 %v1849, 1.0
    %v1871 = vlog2.pop %v1870
    %v1872 = vmul.f32 %v1871, 0.6931472
    %v1873 = vmul.f32 -0.5, %v1849
    %v1874 = vadd.f32 %v1873, 1.0
    %v1875 = vmul.f32 %v1874, %v1849
    %v1876 = vand.u32 2147483647, %v1849
    %vm1877 = vcmp.lt.f32.partialorder %v1876, 0.0004427343
    %v1878 = vsel %vm1877, %v1875, %v1872
    %v1879 = vadd.f32 %v1851, 1.0
    %v1880 = vlog2.pop %v1879
    %v1881 = vmul.f32 %v1880, 0.6931472
    %v1882 = vmul.f32 -0.5, %v1851
    %v1883 = vadd.f32 %v1882, 1.0
    %v1884 = vmul.f32 %v1883, %v1851
    %v1885 = vand.u32 2147483647, %v1851
    %vm1886 = vcmp.lt.f32.partialorder %v1885, 0.0004427343
    %v1887 = vsel %vm1886, %v1884, %v1881
    %v1888 = vadd.f32 %v1832, %v1860
    %v1889 = vadd.f32 %v1833, %v1869
    %v1890 = vadd.f32 %v1834, %v1878
    %v1891 = vadd.f32 %v1835, %v1887
    %v1892 = vlaneseq
    %v1893 = vshrl.u32 %v1892, 7
    %v1894 = vsub.s32 2, %v1893
    %v1895 = vrot.slane %v1662, %v1894
    %v1897 = vsel %vm1256, %v1888, 0
    %v1900 = vsel %vm1256, %v1889, 0
    %v1903 = vsel %vm1256, %v1890, 0
    %v1906 = vsel %vm1256, %v1891, 0
    %1908 = vmatprep.subr.mxu0 0.0
    %1909 = vmatpush1.msra.mxu0 %v1658
    %1910 = vmatprep.subr.mxu0 0.0
    %1911 = vmatpush1.msra.mxu0 %v1659
    %1912 = vmatprep.subr.mxu0 0.0
    %1913 = vmatpush1.msra.mxu0 %v1660
    %1914 = vmatprep.subr.mxu0 0.0
    %1915 = vmatpush1.msra.mxu0 %v1661
    %1916 = vmatprep.subr.mxu0 0.0
    %1917 = vmatpush1.msra.mxu0 0.0
    %1918 = vmatprep.subr.mxu0 0.0
    %1919 = vmatpush1.msra.mxu0 0.0
    %1920 = vmatprep.subr.mxu0 0.0
    %1921 = vmatpush1.msra.mxu0 0.0
    %1922 = vmatprep.subr.mxu0 0.0
    %1923 = vmatpush1.msra.mxu0 0.0
    %1924 = vmatprep.subr.mxu0 0.0
    %1925 = vmatpush1.msra.mxu0 0.0
    %1926 = vmatprep.subr.mxu0 0.0
    %1927 = vmatpush1.msra.mxu0 0.0
    %1928 = vmatprep.subr.mxu0 0.0
    %1929 = vmatpush1.msra.mxu0 0.0
    %1930 = vmatprep.subr.mxu0 0.0
    %1931 = vmatpush1.msra.mxu0 0.0
    %1932 = vmatprep.subr.mxu0 0.0
    %1933 = vmatpush1.msra.mxu0 0.0
    %1934 = vmatprep.subr.mxu0 0.0
    %1935 = vmatpush1.msra.mxu0 0.0
    %1936 = vmatprep.subr.mxu0 0.0
    %1937 = vmatpush1.msra.mxu0 0.0
    %1938 = vmatprep.subr.mxu0 0.0
    %1939 = vmatpush1.msra.mxu0 0.0
    %1940 = vmatprep.subr.mxu0 0.0
    %1941 = vmatpush1.msra.mxu0 0.0
    %1942 = vmatprep.subr.mxu0 0.0
    %1943 = vmatpush1.msra.mxu0 0.0
    %1944 = vmatprep.subr.mxu0 0.0
    %1945 = vmatpush1.msra.mxu0 0.0
    %1946 = vmatprep.subr.mxu0 0.0
    %1947 = vmatpush1.msra.mxu0 0.0
    %1948 = vmatprep.subr.mxu0 0.0
    %1949 = vmatpush1.msra.mxu0 0.0
    %1950 = vmatprep.subr.mxu0 0.0
    %1951 = vmatpush1.msra.mxu0 0.0
    %1952 = vmatprep.subr.mxu0 0.0
    %1953 = vmatpush1.msra.mxu0 0.0
    %1954 = vmatprep.subr.mxu0 0.0
    %1955 = vmatpush1.msra.mxu0 0.0
    %1956 = vmatprep.subr.mxu0 0.0
    %1957 = vmatpush1.msra.mxu0 0.0
    %1958 = vmatprep.subr.mxu0 0.0
    %1959 = vmatpush1.msra.mxu0 0.0
    %1960 = vmatprep.subr.mxu0 0.0
    %1961 = vmatpush1.msra.mxu0 0.0
    %1962 = vmatprep.subr.mxu0 0.0
    %1963 = vmatpush1.msra.mxu0 0.0
    %1964 = vmatprep.subr.mxu0 0.0
    %1965 = vmatpush1.msra.mxu0 0.0
    %1966 = vmatprep.subr.mxu0 0.0
    %1967 = vmatpush1.msra.mxu0 0.0
    %1968 = vmatprep.subr.mxu0 0.0
    %1969 = vmatpush1.msra.mxu0 0.0
    %1970 = vmatprep.subr.mxu0 0.0
    %1971 = vmatpush1.msra.mxu0 0.0
    %1972 = vmatprep.mubr.f32.mxu0 0.0
    %1973 = vmatmul.mubr.f32.gmra.mrb[0].mxu0 %v1897
    %v1974 = vpop.f32.mrb[0].mxu0
    %v1975 = vadd.f32 %v1895, %v1974
    %v1976 = vpop.f32.mrb[0].mxu0
    %1977 = vmatprep.mubr.f32.mxu0 0.0
    %1978 = vmatmul.mubr.f32.gmra.mrb[0].mxu0 %v1900
    %v1979 = vpop.f32.mrb[0].mxu0
    %v1980 = vadd.f32 %v1895, %v1979
    %v1981 = vpop.f32.mrb[0].mxu0
    %1982 = vmatprep.mubr.f32.mxu0 0.0
    %1983 = vmatmul.mubr.f32.gmra.mrb[0].mxu0 %v1903
    %v1984 = vpop.f32.mrb[0].mxu0
    %v1985 = vadd.f32 %v1895, %v1984
    %v1986 = vpop.f32.mrb[0].mxu0
    %1987 = vmatprep.mubr.f32.mxu0 0.0
    %1988 = vmatmul.mubr.f32.gmra.mrb[0].mxu0 %v1906
    %v1989 = vpop.f32.mrb[0].mxu0
    %v1990 = vadd.f32 %v1895, %v1989
    %v1991 = vpop.f32.mrb[0].mxu0
    %1992 = vdwg.mxu0
    %v1993 = vsel %vm1256, %v706, 0.0
    %1994 = vadd.xlane.f32.xlu0 %v1993
    %v1995 = vpop.xlane.xlu0 %1994
    %v1996 = vsel %vm1256, %v707, 0.0
    %1997 = vadd.xlane.f32.xlu0 %v1996
    %v1998 = vpop.xlane.xlu0 %1997
    %v1999 = vmax.f32 %v1995, 1.0
    %v2000 = vmax.f32 %v1998, 1.0
    %v2002 = vsel %vm1256, %v706, 0
    %v2005 = vsel %vm1256, %v707, 0
    %2007 = vmatprep.subr.mxu0 0.0
    %2008 = vmatpush1.msra.mxu0 %v1975
    %2009 = vmatprep.subr.mxu0 0.0
    %2010 = vmatpush1.msra.mxu0 %v1980
    %2011 = vmatprep.subr.mxu0 0.0
    %2012 = vmatpush1.msra.mxu0 %v1985
    %2013 = vmatprep.subr.mxu0 0.0
    %2014 = vmatpush1.msra.mxu0 %v1990
    %2015 = vmatprep.subr.mxu0 0.0
    %2016 = vmatpush1.msra.mxu0 0.0
    %2017 = vmatprep.subr.mxu0 0.0
    %2018 = vmatpush1.msra.mxu0 0.0
    %2019 = vmatprep.subr.mxu0 0.0
    %2020 = vmatpush1.msra.mxu0 0.0
    %2021 = vmatprep.subr.mxu0 0.0
    %2022 = vmatpush1.msra.mxu0 0.0
    %2023 = vmatprep.subr.mxu0 0.0
    %2024 = vmatpush1.msra.mxu0 0.0
    %2025 = vmatprep.subr.mxu0 0.0
    %2026 = vmatpush1.msra.mxu0 0.0
    %2027 = vmatprep.subr.mxu0 0.0
    %2028 = vmatpush1.msra.mxu0 0.0
    %2029 = vmatprep.subr.mxu0 0.0
    %2030 = vmatpush1.msra.mxu0 0.0
    %2031 = vmatprep.subr.mxu0 0.0
    %2032 = vmatpush1.msra.mxu0 0.0
    %2033 = vmatprep.subr.mxu0 0.0
    %2034 = vmatpush1.msra.mxu0 0.0
    %2035 = vmatprep.subr.mxu0 0.0
    %2036 = vmatpush1.msra.mxu0 0.0
    %2037 = vmatprep.subr.mxu0 0.0
    %2038 = vmatpush1.msra.mxu0 0.0
    %2039 = vmatprep.subr.mxu0 0.0
    %2040 = vmatpush1.msra.mxu0 0.0
    %2041 = vmatprep.subr.mxu0 0.0
    %2042 = vmatpush1.msra.mxu0 0.0
    %2043 = vmatprep.subr.mxu0 0.0
    %2044 = vmatpush1.msra.mxu0 0.0
    %2045 = vmatprep.subr.mxu0 0.0
    %2046 = vmatpush1.msra.mxu0 0.0
    %2047 = vmatprep.subr.mxu0 0.0
    %2048 = vmatpush1.msra.mxu0 0.0
    %2049 = vmatprep.subr.mxu0 0.0
    %2050 = vmatpush1.msra.mxu0 0.0
    %2051 = vmatprep.subr.mxu0 0.0
    %2052 = vmatpush1.msra.mxu0 0.0
    %2053 = vmatprep.subr.mxu0 0.0
    %2054 = vmatpush1.msra.mxu0 0.0
    %2055 = vmatprep.subr.mxu0 0.0
    %2056 = vmatpush1.msra.mxu0 0.0
    %2057 = vmatprep.subr.mxu0 0.0
    %2058 = vmatpush1.msra.mxu0 0.0
    %2059 = vmatprep.subr.mxu0 0.0
    %2060 = vmatpush1.msra.mxu0 0.0
    %2061 = vmatprep.subr.mxu0 0.0
    %2062 = vmatpush1.msra.mxu0 0.0
    %2063 = vmatprep.subr.mxu0 0.0
    %2064 = vmatpush1.msra.mxu0 0.0
    %2065 = vmatprep.subr.mxu0 0.0
    %2066 = vmatpush1.msra.mxu0 0.0
    %2067 = vmatprep.subr.mxu0 0.0
    %2068 = vmatpush1.msra.mxu0 0.0
    %2069 = vmatprep.subr.mxu0 0.0
    %2070 = vmatpush1.msra.mxu0 0.0
    %2071 = vmatprep.mubr.f32.mxu0 0.0
    %2072 = vmatmul.mubr.f32.gmra.mrb[0].mxu0 %v2002
    %v2073 = vpop.f32.mrb[0].mxu0
    %v2074 = vadd.f32 0.0, %v2073
    %v2075 = vpop.f32.mrb[0].mxu0
    %2076 = vmatprep.mubr.f32.mxu0 0.0
    %2077 = vmatmul.mubr.f32.gmra.mrb[0].mxu0 %v2005
    %v2078 = vpop.f32.mrb[0].mxu0
    %v2079 = vadd.f32 0.0, %v2078
    %v2080 = vpop.f32.mrb[0].mxu0
    %2081 = vdwg.mxu0
    %v2082 = vrcp.pop %v1999
    %v2083 = vrcp.pop %v2000
    %v2084 = vmul.f32 %v2074, %v2082
    %v2085 = vmul.f32 %v2079, %v2083
    %v2086 = vld [vmem:[%s14] sm:$0xff]
    %v2087 = vld [vmem:[%s14 + $0x8] sm:$0xff]
    %v2088 = vld [vmem:[%s14 + $0x10] sm:$0xff]
    %v2089 = vld [vmem:[%s14 + $0x18] sm:$0xff]
    %v2090 = vld [vmem:[%s14 + $0x20] sm:$0xff]
    %v2091 = vld [vmem:[%s14 + $0x28] sm:$0xff]
    %v2092 = vld [vmem:[%s14 + $0x30] sm:$0xff]
    %v2093 = vld [vmem:[%s14 + $0x38] sm:$0xff]
    %v2094 = vld [vmem:[%s14 + $0x40] sm:$0xff]
    %v2095 = vld [vmem:[%s14 + $0x48] sm:$0xff]
    %v2096 = vld [vmem:[%s14 + $0x50] sm:$0xff]
    %v2097 = vld [vmem:[%s14 + $0x58] sm:$0xff]
    %v2099 = vsel %vm1256, %v2084, 0
    %v2102 = vsel %vm1256, %v2085, 0
    %2104 = vmatprep.subr.mxu0 0.0
    %2105 = vmatpush1.msra.mxu0 %v2090
    %2106 = vmatprep.subr.mxu0 0.0
    %2107 = vmatpush1.msra.mxu0 %v2091
    %2108 = vmatprep.subr.mxu0 0.0
    %2109 = vmatpush1.msra.mxu0 %v2092
    %2110 = vmatprep.subr.mxu0 0.0
    %2111 = vmatpush1.msra.mxu0 %v2093
    %2112 = vmatprep.subr.mxu0 0.0
    %2113 = vmatpush1.msra.mxu0 0.0
    %2114 = vmatprep.subr.mxu0 0.0
    %2115 = vmatpush1.msra.mxu0 0.0
    %2116 = vmatprep.subr.mxu0 0.0
    %2117 = vmatpush1.msra.mxu0 0.0
    %2118 = vmatprep.subr.mxu0 0.0
    %2119 = vmatpush1.msra.mxu0 0.0
    %2120 = vmatprep.subr.mxu0 0.0
    %2121 = vmatpush1.msra.mxu0 0.0
    %2122 = vmatprep.subr.mxu0 0.0
    %2123 = vmatpush1.msra.mxu0 0.0
    %2124 = vmatprep.subr.mxu0 0.0
    %2125 = vmatpush1.msra.mxu0 0.0
    %2126 = vmatprep.subr.mxu0 0.0
    %2127 = vmatpush1.msra.mxu0 0.0
    %2128 = vmatprep.subr.mxu0 0.0
    %2129 = vmatpush1.msra.mxu0 0.0
    %2130 = vmatprep.subr.mxu0 0.0
    %2131 = vmatpush1.msra.mxu0 0.0
    %2132 = vmatprep.subr.mxu0 0.0
    %2133 = vmatpush1.msra.mxu0 0.0
    %2134 = vmatprep.subr.mxu0 0.0
    %2135 = vmatpush1.msra.mxu0 0.0
    %2136 = vmatprep.subr.mxu0 0.0
    %2137 = vmatpush1.msra.mxu0 0.0
    %2138 = vmatprep.subr.mxu0 0.0
    %2139 = vmatpush1.msra.mxu0 0.0
    %2140 = vmatprep.subr.mxu0 0.0
    %2141 = vmatpush1.msra.mxu0 0.0
    %2142 = vmatprep.subr.mxu0 0.0
    %2143 = vmatpush1.msra.mxu0 0.0
    %2144 = vmatprep.subr.mxu0 0.0
    %2145 = vmatpush1.msra.mxu0 0.0
    %2146 = vmatprep.subr.mxu0 0.0
    %2147 = vmatpush1.msra.mxu0 0.0
    %2148 = vmatprep.subr.mxu0 0.0
    %2149 = vmatpush1.msra.mxu0 0.0
    %2150 = vmatprep.subr.mxu0 0.0
    %2151 = vmatpush1.msra.mxu0 0.0
    %2152 = vmatprep.subr.mxu0 0.0
    %2153 = vmatpush1.msra.mxu0 0.0
    %2154 = vmatprep.subr.mxu0 0.0
    %2155 = vmatpush1.msra.mxu0 0.0
    %2156 = vmatprep.subr.mxu0 0.0
    %2157 = vmatpush1.msra.mxu0 0.0
    %2158 = vmatprep.subr.mxu0 0.0
    %2159 = vmatpush1.msra.mxu0 0.0
    %2160 = vmatprep.subr.mxu0 0.0
    %2161 = vmatpush1.msra.mxu0 0.0
    %2162 = vmatprep.subr.mxu0 0.0
    %2163 = vmatpush1.msra.mxu0 0.0
    %2164 = vmatprep.subr.mxu0 0.0
    %2165 = vmatpush1.msra.mxu0 0.0
    %2166 = vmatprep.subr.mxu0 0.0
    %2167 = vmatpush1.msra.mxu0 0.0
    %2168 = vmatprep.mubr.f32.mxu0 0.0
    %2169 = vmatmul.mubr.f32.gmra.mrb[0].mxu0 %v2099
    %v2170 = vpop.f32.mrb[0].mxu0
    %v2171 = vadd.f32 0.0, %v2170
    %v2172 = vpop.f32.mrb[0].mxu0
    %2173 = vmatprep.mubr.f32.mxu0 0.0
    %2174 = vmatmul.mubr.f32.gmra.mrb[0].mxu0 %v2102
    %v2175 = vpop.f32.mrb[0].mxu0
    %v2176 = vadd.f32 0.0, %v2175
    %v2177 = vpop.f32.mrb[0].mxu0
    %2178 = vdwg.mxu0
    %v2180 = vsel %vm1256, %v512, 0
    %v2183 = vsel %vm1256, %v513, 0
    %2185 = vmatprep.subr.mxu0 0.0
    %2186 = vmatpush1.msra.mxu0 %v2086
    %2187 = vmatprep.subr.mxu0 0.0
    %2188 = vmatpush1.msra.mxu0 %v2087
    %2189 = vmatprep.subr.mxu0 0.0
    %2190 = vmatpush1.msra.mxu0 %v2088
    %2191 = vmatprep.subr.mxu0 0.0
    %2192 = vmatpush1.msra.mxu0 %v2089
    %2193 = vmatprep.subr.mxu0 0.0
    %2194 = vmatpush1.msra.mxu0 0.0
    %2195 = vmatprep.subr.mxu0 0.0
    %2196 = vmatpush1.msra.mxu0 0.0
    %2197 = vmatprep.subr.mxu0 0.0
    %2198 = vmatpush1.msra.mxu0 0.0
    %2199 = vmatprep.subr.mxu0 0.0
    %2200 = vmatpush1.msra.mxu0 0.0
    %2201 = vmatprep.subr.mxu0 0.0
    %2202 = vmatpush1.msra.mxu0 0.0
    %2203 = vmatprep.subr.mxu0 0.0
    %2204 = vmatpush1.msra.mxu0 0.0
    %2205 = vmatprep.subr.mxu0 0.0
    %2206 = vmatpush1.msra.mxu0 0.0
    %2207 = vmatprep.subr.mxu0 0.0
    %2208 = vmatpush1.msra.mxu0 0.0
    %2209 = vmatprep.subr.mxu0 0.0
    %2210 = vmatpush1.msra.mxu0 0.0
    %2211 = vmatprep.subr.mxu0 0.0
    %2212 = vmatpush1.msra.mxu0 0.0
    %2213 = vmatprep.subr.mxu0 0.0
    %2214 = vmatpush1.msra.mxu0 0.0
    %2215 = vmatprep.subr.mxu0 0.0
    %2216 = vmatpush1.msra.mxu0 0.0
    %2217 = vmatprep.subr.mxu0 0.0
    %2218 = vmatpush1.msra.mxu0 0.0
    %2219 = vmatprep.subr.mxu0 0.0
    %2220 = vmatpush1.msra.mxu0 0.0
    %2221 = vmatprep.subr.mxu0 0.0
    %2222 = vmatpush1.msra.mxu0 0.0
    %2223 = vmatprep.subr.mxu0 0.0
    %2224 = vmatpush1.msra.mxu0 0.0
    %2225 = vmatprep.subr.mxu0 0.0
    %2226 = vmatpush1.msra.mxu0 0.0
    %2227 = vmatprep.subr.mxu0 0.0
    %2228 = vmatpush1.msra.mxu0 0.0
    %2229 = vmatprep.subr.mxu0 0.0
    %2230 = vmatpush1.msra.mxu0 0.0
    %2231 = vmatprep.subr.mxu0 0.0
    %2232 = vmatpush1.msra.mxu0 0.0
    %2233 = vmatprep.subr.mxu0 0.0
    %2234 = vmatpush1.msra.mxu0 0.0
    %2235 = vmatprep.subr.mxu0 0.0
    %2236 = vmatpush1.msra.mxu0 0.0
    %2237 = vmatprep.subr.mxu0 0.0
    %2238 = vmatpush1.msra.mxu0 0.0
    %2239 = vmatprep.subr.mxu0 0.0
    %2240 = vmatpush1.msra.mxu0 0.0
    %2241 = vmatprep.subr.mxu0 0.0
    %2242 = vmatpush1.msra.mxu0 0.0
    %2243 = vmatprep.subr.mxu0 0.0
    %2244 = vmatpush1.msra.mxu0 0.0
    %2245 = vmatprep.subr.mxu0 0.0
    %2246 = vmatpush1.msra.mxu0 0.0
    %2247 = vmatprep.subr.mxu0 0.0
    %2248 = vmatpush1.msra.mxu0 0.0
    %2249 = vmatprep.mubr.f32.mxu0 0.0
    %2250 = vmatmul.mubr.f32.gmra.mrb[0].mxu0 %v2180
    %v2251 = vpop.f32.mrb[0].mxu0
    %v2252 = vadd.f32 %v2171, %v2251
    %v2253 = vpop.f32.mrb[0].mxu0
    %2254 = vmatprep.mubr.f32.mxu0 0.0
    %2255 = vmatmul.mubr.f32.gmra.mrb[0].mxu0 %v2183
    %v2256 = vpop.f32.mrb[0].mxu0
    %v2257 = vadd.f32 %v2176, %v2256
    %v2258 = vpop.f32.mrb[0].mxu0
    %2259 = vdwg.mxu0
    %v2261 = vsel %vm1256, %v1232, 0
    %v2264 = vsel %vm1256, %v1237, 0
    %2266 = vmatprep.subr.mxu0 0.0
    %2267 = vmatpush1.msra.mxu0 %v2094
    %2268 = vmatprep.subr.mxu0 0.0
    %2269 = vmatpush1.msra.mxu0 %v2095
    %2270 = vmatprep.subr.mxu0 0.0
    %2271 = vmatpush1.msra.mxu0 %v2096
    %2272 = vmatprep.subr.mxu0 0.0
    %2273 = vmatpush1.msra.mxu0 %v2097
    %2274 = vmatprep.subr.mxu0 0.0
    %2275 = vmatpush1.msra.mxu0 0.0
    %2276 = vmatprep.subr.mxu0 0.0
    %2277 = vmatpush1.msra.mxu0 0.0
    %2278 = vmatprep.subr.mxu0 0.0
    %2279 = vmatpush1.msra.mxu0 0.0
    %2280 = vmatprep.subr.mxu0 0.0
    %2281 = vmatpush1.msra.mxu0 0.0
    %2282 = vmatprep.subr.mxu0 0.0
    %2283 = vmatpush1.msra.mxu0 0.0
    %2284 = vmatprep.subr.mxu0 0.0
    %2285 = vmatpush1.msra.mxu0 0.0
    %2286 = vmatprep.subr.mxu0 0.0
    %2287 = vmatpush1.msra.mxu0 0.0
    %2288 = vmatprep.subr.mxu0 0.0
    %2289 = vmatpush1.msra.mxu0 0.0
    %2290 = vmatprep.subr.mxu0 0.0
    %2291 = vmatpush1.msra.mxu0 0.0
    %2292 = vmatprep.subr.mxu0 0.0
    %2293 = vmatpush1.msra.mxu0 0.0
    %2294 = vmatprep.subr.mxu0 0.0
    %2295 = vmatpush1.msra.mxu0 0.0
    %2296 = vmatprep.subr.mxu0 0.0
    %2297 = vmatpush1.msra.mxu0 0.0
    %2298 = vmatprep.subr.mxu0 0.0
    %2299 = vmatpush1.msra.mxu0 0.0
    %2300 = vmatprep.subr.mxu0 0.0
    %2301 = vmatpush1.msra.mxu0 0.0
    %2302 = vmatprep.subr.mxu0 0.0
    %2303 = vmatpush1.msra.mxu0 0.0
    %2304 = vmatprep.subr.mxu0 0.0
    %2305 = vmatpush1.msra.mxu0 0.0
    %2306 = vmatprep.subr.mxu0 0.0
    %2307 = vmatpush1.msra.mxu0 0.0
    %2308 = vmatprep.subr.mxu0 0.0
    %2309 = vmatpush1.msra.mxu0 0.0
    %2310 = vmatprep.subr.mxu0 0.0
    %2311 = vmatpush1.msra.mxu0 0.0
    %2312 = vmatprep.subr.mxu0 0.0
    %2313 = vmatpush1.msra.mxu0 0.0
    %2314 = vmatprep.subr.mxu0 0.0
    %2315 = vmatpush1.msra.mxu0 0.0
    %2316 = vmatprep.subr.mxu0 0.0
    %2317 = vmatpush1.msra.mxu0 0.0
    %2318 = vmatprep.subr.mxu0 0.0
    %2319 = vmatpush1.msra.mxu0 0.0
    %2320 = vmatprep.subr.mxu0 0.0
    %2321 = vmatpush1.msra.mxu0 0.0
    %2322 = vmatprep.subr.mxu0 0.0
    %2323 = vmatpush1.msra.mxu0 0.0
    %2324 = vmatprep.subr.mxu0 0.0
    %2325 = vmatpush1.msra.mxu0 0.0
    %2326 = vmatprep.subr.mxu0 0.0
    %2327 = vmatpush1.msra.mxu0 0.0
    %2328 = vmatprep.subr.mxu0 0.0
    %2329 = vmatpush1.msra.mxu0 0.0
    %2330 = vmatprep.mubr.f32.mxu0 0.0
    %2331 = vmatmul.mubr.f32.gmra.mrb[0].mxu0 %v2261
    %v2332 = vpop.f32.mrb[0].mxu0
    %v2333 = vadd.f32 0.0, %v2332
    %v2334 = vpop.f32.mrb[0].mxu0
    %2335 = vmatprep.mubr.f32.mxu0 0.0
    %2336 = vmatmul.mubr.f32.gmra.mrb[0].mxu0 %v2264
    %v2337 = vpop.f32.mrb[0].mxu0
    %v2338 = vadd.f32 0.0, %v2337
    %v2339 = vpop.f32.mrb[0].mxu0
    %2340 = vdwg.mxu0
    %v2341 = vadd.f32 %v2252, %v2333
    %v2342 = vadd.f32 %v2257, %v2338
    %s2343 = scalar_lea.vmem %s16, 64
    %v2344 = vld [vmem:[%s2343] sm:$0xff]
    %v2345 = vld [vmem:[%s2343 + $0x8] sm:$0xff]
    %v2346 = vld [vmem:[%s2343 + $0x10] sm:$0xff]
    %v2347 = vld [vmem:[%s2343 + $0x18] sm:$0xff]
    %s2348 = scalar_lea.vmem %s16, 96
    %v2349 = vld [vmem:[%s2348] sm:$0xff]
    %v2350 = vld [vmem:[%s2348 + $0x8] sm:$0xff]
    %v2351 = vld [vmem:[%s2348 + $0x10] sm:$0xff]
    %v2352 = vld [vmem:[%s2348 + $0x18] sm:$0xff]
    %s2353 = scalar_lea.vmem %s17, 4
    %v2354 = vld [vmem:[%s2353] sm:$0x7]
    %v2355 = vlaneseq
    %v2356 = vshrl.u32 %v2355, 7
    %v2357 = vsub.s32 0, %v2356
    %v2358 = vrot.slane %v2354, %v2357
    %v2359 = vadd.f32 %v2341, %v2358
    %v2360 = vadd.f32 %v2342, %v2358
    %v2361 = vmax.f32 %v2359, 0.0
    %v2362 = vmax.f32 %v2360, 0.0
    %v2363 = vand.u32 2147483647, %v2359
    %v2364 = vand.u32 2147483647, %v2360
    %v2365 = vsub.f32 0.0, %v2363
    %v2366 = vsub.f32 0.0, %v2364
    %v2367 = vmul.f32 %v2365, 1.442695
    %v2368 = vpow.pop %v2367
    %v2369 = vmul.f32 %v2366, 1.442695
    %v2370 = vpow.pop %v2369
    %v2371 = vadd.f32 %v2368, 1.0
    %v2372 = vlog2.pop %v2371
    %v2373 = vmul.f32 %v2372, 0.6931472
    %v2374 = vmul.f32 -0.5, %v2368
    %v2375 = vadd.f32 %v2374, 1.0
    %v2376 = vmul.f32 %v2375, %v2368
    %v2377 = vand.u32 2147483647, %v2368
    %vm2378 = vcmp.lt.f32.partialorder %v2377, 0.0004427343
    %v2379 = vsel %vm2378, %v2376, %v2373
    %v2380 = vadd.f32 %v2370, 1.0
    %v2381 = vlog2.pop %v2380
    %v2382 = vmul.f32 %v2381, 0.6931472
    %v2383 = vmul.f32 -0.5, %v2370
    %v2384 = vadd.f32 %v2383, 1.0
    %v2385 = vmul.f32 %v2384, %v2370
    %v2386 = vand.u32 2147483647, %v2370
    %vm2387 = vcmp.lt.f32.partialorder %v2386, 0.0004427343
    %v2388 = vsel %vm2387, %v2385, %v2382
    %v2389 = vadd.f32 %v2361, %v2379
    %v2390 = vadd.f32 %v2362, %v2388
    %v2391 = vlaneseq
    %v2392 = vshrl.u32 %v2391, 7
    %v2393 = vsub.s32 1, %v2392
    %v2394 = vrot.slane %v2354, %v2393
    %v2396 = vsel %vm1256, %v2389, 0
    %v2399 = vsel %vm1256, %v2390, 0
    %2401 = vmatprep.subr.mxu0 0.0
    %2402 = vmatpush1.msra.mxu0 %v2344
    %2403 = vmatprep.subr.mxu0 0.0
    %2404 = vmatpush1.msra.mxu0 %v2345
    %2405 = vmatprep.subr.mxu0 0.0
    %2406 = vmatpush1.msra.mxu0 %v2346
    %2407 = vmatprep.subr.mxu0 0.0
    %2408 = vmatpush1.msra.mxu0 %v2347
    %2409 = vmatprep.subr.mxu0 0.0
    %2410 = vmatpush1.msra.mxu0 0.0
    %2411 = vmatprep.subr.mxu0 0.0
    %2412 = vmatpush1.msra.mxu0 0.0
    %2413 = vmatprep.subr.mxu0 0.0
    %2414 = vmatpush1.msra.mxu0 0.0
    %2415 = vmatprep.subr.mxu0 0.0
    %2416 = vmatpush1.msra.mxu0 0.0
    %2417 = vmatprep.subr.mxu0 0.0
    %2418 = vmatpush1.msra.mxu0 0.0
    %2419 = vmatprep.subr.mxu0 0.0
    %2420 = vmatpush1.msra.mxu0 0.0
    %2421 = vmatprep.subr.mxu0 0.0
    %2422 = vmatpush1.msra.mxu0 0.0
    %2423 = vmatprep.subr.mxu0 0.0
    %2424 = vmatpush1.msra.mxu0 0.0
    %2425 = vmatprep.subr.mxu0 0.0
    %2426 = vmatpush1.msra.mxu0 0.0
    %2427 = vmatprep.subr.mxu0 0.0
    %2428 = vmatpush1.msra.mxu0 0.0
    %2429 = vmatprep.subr.mxu0 0.0
    %2430 = vmatpush1.msra.mxu0 0.0
    %2431 = vmatprep.subr.mxu0 0.0
    %2432 = vmatpush1.msra.mxu0 0.0
    %2433 = vmatprep.subr.mxu0 0.0
    %2434 = vmatpush1.msra.mxu0 0.0
    %2435 = vmatprep.subr.mxu0 0.0
    %2436 = vmatpush1.msra.mxu0 0.0
    %2437 = vmatprep.subr.mxu0 0.0
    %2438 = vmatpush1.msra.mxu0 0.0
    %2439 = vmatprep.subr.mxu0 0.0
    %2440 = vmatpush1.msra.mxu0 0.0
    %2441 = vmatprep.subr.mxu0 0.0
    %2442 = vmatpush1.msra.mxu0 0.0
    %2443 = vmatprep.subr.mxu0 0.0
    %2444 = vmatpush1.msra.mxu0 0.0
    %2445 = vmatprep.subr.mxu0 0.0
    %2446 = vmatpush1.msra.mxu0 0.0
    %2447 = vmatprep.subr.mxu0 0.0
    %2448 = vmatpush1.msra.mxu0 0.0
    %2449 = vmatprep.subr.mxu0 0.0
    %2450 = vmatpush1.msra.mxu0 0.0
    %2451 = vmatprep.subr.mxu0 0.0
    %2452 = vmatpush1.msra.mxu0 0.0
    %2453 = vmatprep.subr.mxu0 0.0
    %2454 = vmatpush1.msra.mxu0 0.0
    %2455 = vmatprep.subr.mxu0 0.0
    %2456 = vmatpush1.msra.mxu0 0.0
    %2457 = vmatprep.subr.mxu0 0.0
    %2458 = vmatpush1.msra.mxu0 0.0
    %2459 = vmatprep.subr.mxu0 0.0
    %2460 = vmatpush1.msra.mxu0 0.0
    %2461 = vmatprep.subr.mxu0 0.0
    %2462 = vmatpush1.msra.mxu0 0.0
    %2463 = vmatprep.subr.mxu0 0.0
    %2464 = vmatpush1.msra.mxu0 0.0
    %2465 = vmatprep.mubr.f32.mxu0 0.0
    %2466 = vmatmul.mubr.f32.gmra.mrb[0].mxu0 %v2396
    %v2467 = vpop.f32.mrb[0].mxu0
    %v2468 = vadd.f32 %v2394, %v2467
    %v2469 = vpop.f32.mrb[0].mxu0
    %2470 = vmatprep.mubr.f32.mxu0 0.0
    %2471 = vmatmul.mubr.f32.gmra.mrb[0].mxu0 %v2399
    %v2472 = vpop.f32.mrb[0].mxu0
    %v2473 = vadd.f32 %v2394, %v2472
    %v2474 = vpop.f32.mrb[0].mxu0
    %2475 = vdwg.mxu0
    %v2476 = vmax.f32 %v2468, 0.0
    %v2477 = vmax.f32 %v2473, 0.0
    %v2478 = vand.u32 2147483647, %v2468
    %v2479 = vand.u32 2147483647, %v2473
    %v2480 = vsub.f32 0.0, %v2478
    %v2481 = vsub.f32 0.0, %v2479
    %v2482 = vmul.f32 %v2480, 1.442695
    %v2483 = vpow.pop %v2482
    %v2484 = vmul.f32 %v2481, 1.442695
    %v2485 = vpow.pop %v2484
    %v2486 = vadd.f32 %v2483, 1.0
    %v2487 = vlog2.pop %v2486
    %v2488 = vmul.f32 %v2487, 0.6931472
    %v2489 = vmul.f32 -0.5, %v2483
    %v2490 = vadd.f32 %v2489, 1.0
    %v2491 = vmul.f32 %v2490, %v2483
    %v2492 = vand.u32 2147483647, %v2483
    %vm2493 = vcmp.lt.f32.partialorder %v2492, 0.0004427343
    %v2494 = vsel %vm2493, %v2491, %v2488
    %v2495 = vadd.f32 %v2485, 1.0
    %v2496 = vlog2.pop %v2495
    %v2497 = vmul.f32 %v2496, 0.6931472
    %v2498 = vmul.f32 -0.5, %v2485
    %v2499 = vadd.f32 %v2498, 1.0
    %v2500 = vmul.f32 %v2499, %v2485
    %v2501 = vand.u32 2147483647, %v2485
    %vm2502 = vcmp.lt.f32.partialorder %v2501, 0.0004427343
    %v2503 = vsel %vm2502, %v2500, %v2497
    %v2504 = vadd.f32 %v2476, %v2494
    %v2505 = vadd.f32 %v2477, %v2503
    %v2506 = vlaneseq
    %v2507 = vshrl.u32 %v2506, 7
    %v2508 = vsub.s32 2, %v2507
    %v2509 = vrot.slane %v2354, %v2508
    %v2511 = vsel %vm1256, %v2504, 0
    %v2514 = vsel %vm1256, %v2505, 0
    %2516 = vmatprep.subr.mxu0 0.0
    %2517 = vmatpush1.msra.mxu0 %v2349
    %2518 = vmatprep.subr.mxu0 0.0
    %2519 = vmatpush1.msra.mxu0 %v2350
    %2520 = vmatprep.subr.mxu0 0.0
    %2521 = vmatpush1.msra.mxu0 %v2351
    %2522 = vmatprep.subr.mxu0 0.0
    %2523 = vmatpush1.msra.mxu0 %v2352
    %2524 = vmatprep.subr.mxu0 0.0
    %2525 = vmatpush1.msra.mxu0 0.0
    %2526 = vmatprep.subr.mxu0 0.0
    %2527 = vmatpush1.msra.mxu0 0.0
    %2528 = vmatprep.subr.mxu0 0.0
    %2529 = vmatpush1.msra.mxu0 0.0
    %2530 = vmatprep.subr.mxu0 0.0
    %2531 = vmatpush1.msra.mxu0 0.0
    %2532 = vmatprep.subr.mxu0 0.0
    %2533 = vmatpush1.msra.mxu0 0.0
    %2534 = vmatprep.subr.mxu0 0.0
    %2535 = vmatpush1.msra.mxu0 0.0
    %2536 = vmatprep.subr.mxu0 0.0
    %2537 = vmatpush1.msra.mxu0 0.0
    %2538 = vmatprep.subr.mxu0 0.0
    %2539 = vmatpush1.msra.mxu0 0.0
    %2540 = vmatprep.subr.mxu0 0.0
    %2541 = vmatpush1.msra.mxu0 0.0
    %2542 = vmatprep.subr.mxu0 0.0
    %2543 = vmatpush1.msra.mxu0 0.0
    %2544 = vmatprep.subr.mxu0 0.0
    %2545 = vmatpush1.msra.mxu0 0.0
    %2546 = vmatprep.subr.mxu0 0.0
    %2547 = vmatpush1.msra.mxu0 0.0
    %2548 = vmatprep.subr.mxu0 0.0
    %2549 = vmatpush1.msra.mxu0 0.0
    %2550 = vmatprep.subr.mxu0 0.0
    %2551 = vmatpush1.msra.mxu0 0.0
    %2552 = vmatprep.subr.mxu0 0.0
    %2553 = vmatpush1.msra.mxu0 0.0
    %2554 = vmatprep.subr.mxu0 0.0
    %2555 = vmatpush1.msra.mxu0 0.0
    %2556 = vmatprep.subr.mxu0 0.0
    %2557 = vmatpush1.msra.mxu0 0.0
    %2558 = vmatprep.subr.mxu0 0.0
    %2559 = vmatpush1.msra.mxu0 0.0
    %2560 = vmatprep.subr.mxu0 0.0
    %2561 = vmatpush1.msra.mxu0 0.0
    %2562 = vmatprep.subr.mxu0 0.0
    %2563 = vmatpush1.msra.mxu0 0.0
    %2564 = vmatprep.subr.mxu0 0.0
    %2565 = vmatpush1.msra.mxu0 0.0
    %2566 = vmatprep.subr.mxu0 0.0
    %2567 = vmatpush1.msra.mxu0 0.0
    %2568 = vmatprep.subr.mxu0 0.0
    %2569 = vmatpush1.msra.mxu0 0.0
    %2570 = vmatprep.subr.mxu0 0.0
    %2571 = vmatpush1.msra.mxu0 0.0
    %2572 = vmatprep.subr.mxu0 0.0
    %2573 = vmatpush1.msra.mxu0 0.0
    %2574 = vmatprep.subr.mxu0 0.0
    %2575 = vmatpush1.msra.mxu0 0.0
    %2576 = vmatprep.subr.mxu0 0.0
    %2577 = vmatpush1.msra.mxu0 0.0
    %2578 = vmatprep.subr.mxu0 0.0
    %2579 = vmatpush1.msra.mxu0 0.0
    %2580 = vmatprep.mubr.f32.mxu0 0.0
    %2581 = vmatmul.mubr.f32.gmra.mrb[0].mxu0 %v2511
    %v2582 = vpop.f32.mrb[0].mxu0
    %v2583 = vadd.f32 %v2509, %v2582
    %v2584 = vpop.f32.mrb[0].mxu0
    %2585 = vmatprep.mubr.f32.mxu0 0.0
    %2586 = vmatmul.mubr.f32.gmra.mrb[0].mxu0 %v2514
    %v2587 = vpop.f32.mrb[0].mxu0
    %v2588 = vadd.f32 %v2509, %v2587
    %v2589 = vpop.f32.mrb[0].mxu0
    %2590 = vdwg.mxu0
    %vm2591 = vcmask 254976
    %v2592 = vsel %vm2591, %v726, 0.0
    %2593 = vadd.xlane.f32.xlu0 %v2592
    %v2594 = vpop.xlane.xlu0 %2593
    %v2595 = vmax.f32 %v2594, 1.0
    %vm2596 = vcmask 123904
    %v2597 = vsel %vm2596, %v734, 0.0
    %2598 = vadd.xlane.f32.xlu0 %v2597
    %v2599 = vpop.xlane.xlu0 %2598
    %v2600 = vmax.f32 %v2599, 1.0
    %v2602 = vsel %vm1256, %v726, 0
    %2604 = vmatprep.subr.mxu0 0.0
    %2605 = vmatpush1.msra.mxu0 %v1975
    %2606 = vmatprep.subr.mxu0 0.0
    %2607 = vmatpush1.msra.mxu0 %v1980
    %2608 = vmatprep.subr.mxu0 0.0
    %2609 = vmatpush1.msra.mxu0 %v1985
    %2610 = vmatprep.subr.mxu0 0.0
    %2611 = vmatpush1.msra.mxu0 %v1990
    %2612 = vmatprep.subr.mxu0 0.0
    %2613 = vmatpush1.msra.mxu0 0.0
    %2614 = vmatprep.subr.mxu0 0.0
    %2615 = vmatpush1.msra.mxu0 0.0
    %2616 = vmatprep.subr.mxu0 0.0
    %2617 = vmatpush1.msra.mxu0 0.0
    %2618 = vmatprep.subr.mxu0 0.0
    %2619 = vmatpush1.msra.mxu0 0.0
    %2620 = vmatprep.subr.mxu0 0.0
    %2621 = vmatpush1.msra.mxu0 0.0
    %2622 = vmatprep.subr.mxu0 0.0
    %2623 = vmatpush1.msra.mxu0 0.0
    %2624 = vmatprep.subr.mxu0 0.0
    %2625 = vmatpush1.msra.mxu0 0.0
    %2626 = vmatprep.subr.mxu0 0.0
    %2627 = vmatpush1.msra.mxu0 0.0
    %2628 = vmatprep.subr.mxu0 0.0
    %2629 = vmatpush1.msra.mxu0 0.0
    %2630 = vmatprep.subr.mxu0 0.0
    %2631 = vmatpush1.msra.mxu0 0.0
    %2632 = vmatprep.subr.mxu0 0.0
    %2633 = vmatpush1.msra.mxu0 0.0
    %2634 = vmatprep.subr.mxu0 0.0
    %2635 = vmatpush1.msra.mxu0 0.0
    %2636 = vmatprep.subr.mxu0 0.0
    %2637 = vmatpush1.msra.mxu0 0.0
    %2638 = vmatprep.subr.mxu0 0.0
    %2639 = vmatpush1.msra.mxu0 0.0
    %2640 = vmatprep.subr.mxu0 0.0
    %2641 = vmatpush1.msra.mxu0 0.0
    %2642 = vmatprep.subr.mxu0 0.0
    %2643 = vmatpush1.msra.mxu0 0.0
    %2644 = vmatprep.subr.mxu0 0.0
    %2645 = vmatpush1.msra.mxu0 0.0
    %2646 = vmatprep.subr.mxu0 0.0
    %2647 = vmatpush1.msra.mxu0 0.0
    %2648 = vmatprep.subr.mxu0 0.0
    %2649 = vmatpush1.msra.mxu0 0.0
    %2650 = vmatprep.subr.mxu0 0.0
    %2651 = vmatpush1.msra.mxu0 0.0
    %2652 = vmatprep.subr.mxu0 0.0
    %2653 = vmatpush1.msra.mxu0 0.0
    %2654 = vmatprep.subr.mxu0 0.0
    %2655 = vmatpush1.msra.mxu0 0.0
    %2656 = vmatprep.subr.mxu0 0.0
    %2657 = vmatpush1.msra.mxu0 0.0
    %2658 = vmatprep.subr.mxu0 0.0
    %2659 = vmatpush1.msra.mxu0 0.0
    %2660 = vmatprep.subr.mxu0 0.0
    %2661 = vmatpush1.msra.mxu0 0.0
    %2662 = vmatprep.subr.mxu0 0.0
    %2663 = vmatpush1.msra.mxu0 0.0
    %2664 = vmatprep.subr.mxu0 0.0
    %2665 = vmatpush1.msra.mxu0 0.0
    %2666 = vmatprep.subr.mxu0 0.0
    %2667 = vmatpush1.msra.mxu0 0.0
    %2668 = vmatprep.mubr.f32.mxu0 0.0
    %2669 = vmatmul.mubr.f32.gmra.mrb[0].mxu0 %v2602
    %v2670 = vpop.f32.mrb[0].mxu0
    %v2671 = vadd.f32 0.0, %v2670
    %v2672 = vpop.f32.mrb[0].mxu0
    %2673 = vdwg.mxu0
    %v2674 = vrcp.pop %v2595
    %v2675 = vmul.f32 %v2671, %v2674
    %v2677 = vsel %vm331, %v734, 0
    %2679 = vmatprep.subr.mxu0 0.0
    %2680 = vmatpush1.msra.mxu0 %v2583
    %2681 = vmatprep.subr.mxu0 0.0
    %2682 = vmatpush1.msra.mxu0 %v2588
    %2683 = vmatprep.subr.mxu0 0.0
    %2684 = vmatpush1.msra.mxu0 0.0
    %2685 = vmatprep.subr.mxu0 0.0
    %2686 = vmatpush1.msra.mxu0 0.0
    %2687 = vmatprep.subr.mxu0 0.0
    %2688 = vmatpush1.msra.mxu0 0.0
    %2689 = vmatprep.subr.mxu0 0.0
    %2690 = vmatpush1.msra.mxu0 0.0
    %2691 = vmatprep.subr.mxu0 0.0
    %2692 = vmatpush1.msra.mxu0 0.0
    %2693 = vmatprep.subr.mxu0 0.0
    %2694 = vmatpush1.msra.mxu0 0.0
    %2695 = vmatprep.subr.mxu0 0.0
    %2696 = vmatpush1.msra.mxu0 0.0
    %2697 = vmatprep.subr.mxu0 0.0
    %2698 = vmatpush1.msra.mxu0 0.0
    %2699 = vmatprep.subr.mxu0 0.0
    %2700 = vmatpush1.msra.mxu0 0.0
    %2701 = vmatprep.subr.mxu0 0.0
    %2702 = vmatpush1.msra.mxu0 0.0
    %2703 = vmatprep.subr.mxu0 0.0
    %2704 = vmatpush1.msra.mxu0 0.0
    %2705 = vmatprep.subr.mxu0 0.0
    %2706 = vmatpush1.msra.mxu0 0.0
    %2707 = vmatprep.subr.mxu0 0.0
    %2708 = vmatpush1.msra.mxu0 0.0
    %2709 = vmatprep.subr.mxu0 0.0
    %2710 = vmatpush1.msra.mxu0 0.0
    %2711 = vmatprep.subr.mxu0 0.0
    %2712 = vmatpush1.msra.mxu0 0.0
    %2713 = vmatprep.subr.mxu0 0.0
    %2714 = vmatpush1.msra.mxu0 0.0
    %2715 = vmatprep.subr.mxu0 0.0
    %2716 = vmatpush1.msra.mxu0 0.0
    %2717 = vmatprep.subr.mxu0 0.0
    %2718 = vmatpush1.msra.mxu0 0.0
    %2719 = vmatprep.subr.mxu0 0.0
    %2720 = vmatpush1.msra.mxu0 0.0
    %2721 = vmatprep.subr.mxu0 0.0
    %2722 = vmatpush1.msra.mxu0 0.0
    %2723 = vmatprep.subr.mxu0 0.0
    %2724 = vmatpush1.msra.mxu0 0.0
    %2725 = vmatprep.subr.mxu0 0.0
    %2726 = vmatpush1.msra.mxu0 0.0
    %2727 = vmatprep.subr.mxu0 0.0
    %2728 = vmatpush1.msra.mxu0 0.0
    %2729 = vmatprep.subr.mxu0 0.0
    %2730 = vmatpush1.msra.mxu0 0.0
    %2731 = vmatprep.subr.mxu0 0.0
    %2732 = vmatpush1.msra.mxu0 0.0
    %2733 = vmatprep.subr.mxu0 0.0
    %2734 = vmatpush1.msra.mxu0 0.0
    %2735 = vmatprep.subr.mxu0 0.0
    %2736 = vmatpush1.msra.mxu0 0.0
    %2737 = vmatprep.subr.mxu0 0.0
    %2738 = vmatpush1.msra.mxu0 0.0
    %2739 = vmatprep.subr.mxu0 0.0
    %2740 = vmatpush1.msra.mxu0 0.0
    %2741 = vmatprep.subr.mxu0 0.0
    %2742 = vmatpush1.msra.mxu0 0.0
    %2743 = vmatprep.mubr.f32.mxu0 0.0
    %2744 = vmatmul.mubr.f32.gmra.mrb[0].mxu0 %v2677
    %v2745 = vpop.f32.mrb[0].mxu0
    %v2746 = vadd.f32 0.0, %v2745
    %v2747 = vpop.f32.mrb[0].mxu0
    %2748 = vdwg.mxu0
    %v2749 = vrcp.pop %v2600
    %v2750 = vmul.f32 %v2746, %v2749
    %v2751 = vld [vmem:[%s15] sm:$0xff]
    %v2752 = vld [vmem:[%s15 + $0x8] sm:$0xff]
    %v2753 = vld [vmem:[%s15 + $0x10] sm:$0xff]
    %v2754 = vld [vmem:[%s15 + $0x18] sm:$0xff]
    %v2755 = vld [vmem:[%s15 + $0x20] sm:$0xff]
    %v2756 = vld [vmem:[%s15 + $0x28] sm:$0xff]
    %v2757 = vld [vmem:[%s15 + $0x30] sm:$0xff]
    %v2758 = vld [vmem:[%s15 + $0x38] sm:$0xff]
    %v2759 = vld [vmem:[%s15 + $0x40] sm:$0xff]
    %v2760 = vld [vmem:[%s15 + $0x48] sm:$0xff]
    %v2761 = vld [vmem:[%s15 + $0x50] sm:$0xff]
    %v2762 = vld [vmem:[%s15 + $0x58] sm:$0xff]
    %v2764 = vsel %vm1256, %v2750, 0
    %2766 = vmatprep.subr.mxu0 0.0
    %2767 = vmatpush1.msra.mxu0 %v2755
    %2768 = vmatprep.subr.mxu0 0.0
    %2769 = vmatpush1.msra.mxu0 %v2756
    %2770 = vmatprep.subr.mxu0 0.0
    %2771 = vmatpush1.msra.mxu0 %v2757
    %2772 = vmatprep.subr.mxu0 0.0
    %2773 = vmatpush1.msra.mxu0 %v2758
    %2774 = vmatprep.subr.mxu0 0.0
    %2775 = vmatpush1.msra.mxu0 0.0
    %2776 = vmatprep.subr.mxu0 0.0
    %2777 = vmatpush1.msra.mxu0 0.0
    %2778 = vmatprep.subr.mxu0 0.0
    %2779 = vmatpush1.msra.mxu0 0.0
    %2780 = vmatprep.subr.mxu0 0.0
    %2781 = vmatpush1.msra.mxu0 0.0
    %2782 = vmatprep.subr.mxu0 0.0
    %2783 = vmatpush1.msra.mxu0 0.0
    %2784 = vmatprep.subr.mxu0 0.0
    %2785 = vmatpush1.msra.mxu0 0.0
    %2786 = vmatprep.subr.mxu0 0.0
    %2787 = vmatpush1.msra.mxu0 0.0
    %2788 = vmatprep.subr.mxu0 0.0
    %2789 = vmatpush1.msra.mxu0 0.0
    %2790 = vmatprep.subr.mxu0 0.0
    %2791 = vmatpush1.msra.mxu0 0.0
    %2792 = vmatprep.subr.mxu0 0.0
    %2793 = vmatpush1.msra.mxu0 0.0
    %2794 = vmatprep.subr.mxu0 0.0
    %2795 = vmatpush1.msra.mxu0 0.0
    %2796 = vmatprep.subr.mxu0 0.0
    %2797 = vmatpush1.msra.mxu0 0.0
    %2798 = vmatprep.subr.mxu0 0.0
    %2799 = vmatpush1.msra.mxu0 0.0
    %2800 = vmatprep.subr.mxu0 0.0
    %2801 = vmatpush1.msra.mxu0 0.0
    %2802 = vmatprep.subr.mxu0 0.0
    %2803 = vmatpush1.msra.mxu0 0.0
    %2804 = vmatprep.subr.mxu0 0.0
    %2805 = vmatpush1.msra.mxu0 0.0
    %2806 = vmatprep.subr.mxu0 0.0
    %2807 = vmatpush1.msra.mxu0 0.0
    %2808 = vmatprep.subr.mxu0 0.0
    %2809 = vmatpush1.msra.mxu0 0.0
    %2810 = vmatprep.subr.mxu0 0.0
    %2811 = vmatpush1.msra.mxu0 0.0
    %2812 = vmatprep.subr.mxu0 0.0
    %2813 = vmatpush1.msra.mxu0 0.0
    %2814 = vmatprep.subr.mxu0 0.0
    %2815 = vmatpush1.msra.mxu0 0.0
    %2816 = vmatprep.subr.mxu0 0.0
    %2817 = vmatpush1.msra.mxu0 0.0
    %2818 = vmatprep.subr.mxu0 0.0
    %2819 = vmatpush1.msra.mxu0 0.0
    %2820 = vmatprep.subr.mxu0 0.0
    %2821 = vmatpush1.msra.mxu0 0.0
    %2822 = vmatprep.subr.mxu0 0.0
    %2823 = vmatpush1.msra.mxu0 0.0
    %2824 = vmatprep.subr.mxu0 0.0
    %2825 = vmatpush1.msra.mxu0 0.0
    %2826 = vmatprep.subr.mxu0 0.0
    %2827 = vmatpush1.msra.mxu0 0.0
    %2828 = vmatprep.subr.mxu0 0.0
    %2829 = vmatpush1.msra.mxu0 0.0
    %2830 = vmatprep.mubr.f32.mxu0 0.0
    %2831 = vmatmul.mubr.f32.gmra.mrb[0].mxu0 %v2764
    %v2832 = vpop.f32.mrb[0].mxu0
    %v2833 = vadd.f32 0.0, %v2832
    %v2834 = vpop.f32.mrb[0].mxu0
    %2835 = vdwg.mxu0
    %v2837 = vsel %vm1256, %v2675, 0
    %2839 = vmatprep.subr.mxu0 0.0
    %2840 = vmatpush1.msra.mxu0 %v2751
    %2841 = vmatprep.subr.mxu0 0.0
    %2842 = vmatpush1.msra.mxu0 %v2752
    %2843 = vmatprep.subr.mxu0 0.0
    %2844 = vmatpush1.msra.mxu0 %v2753
    %2845 = vmatprep.subr.mxu0 0.0
    %2846 = vmatpush1.msra.mxu0 %v2754
    %2847 = vmatprep.subr.mxu0 0.0
    %2848 = vmatpush1.msra.mxu0 0.0
    %2849 = vmatprep.subr.mxu0 0.0
    %2850 = vmatpush1.msra.mxu0 0.0
    %2851 = vmatprep.subr.mxu0 0.0
    %2852 = vmatpush1.msra.mxu0 0.0
    %2853 = vmatprep.subr.mxu0 0.0
    %2854 = vmatpush1.msra.mxu0 0.0
    %2855 = vmatprep.subr.mxu0 0.0
    %2856 = vmatpush1.msra.mxu0 0.0
    %2857 = vmatprep.subr.mxu0 0.0
    %2858 = vmatpush1.msra.mxu0 0.0
    %2859 = vmatprep.subr.mxu0 0.0
    %2860 = vmatpush1.msra.mxu0 0.0
    %2861 = vmatprep.subr.mxu0 0.0
    %2862 = vmatpush1.msra.mxu0 0.0
    %2863 = vmatprep.subr.mxu0 0.0
    %2864 = vmatpush1.msra.mxu0 0.0
    %2865 = vmatprep.subr.mxu0 0.0
    %2866 = vmatpush1.msra.mxu0 0.0
    %2867 = vmatprep.subr.mxu0 0.0
    %2868 = vmatpush1.msra.mxu0 0.0
    %2869 = vmatprep.subr.mxu0 0.0
    %2870 = vmatpush1.msra.mxu0 0.0
    %2871 = vmatprep.subr.mxu0 0.0
    %2872 = vmatpush1.msra.mxu0 0.0
    %2873 = vmatprep.subr.mxu0 0.0
    %2874 = vmatpush1.msra.mxu0 0.0
    %2875 = vmatprep.subr.mxu0 0.0
    %2876 = vmatpush1.msra.mxu0 0.0
    %2877 = vmatprep.subr.mxu0 0.0
    %2878 = vmatpush1.msra.mxu0 0.0
    %2879 = vmatprep.subr.mxu0 0.0
    %2880 = vmatpush1.msra.mxu0 0.0
    %2881 = vmatprep.subr.mxu0 0.0
    %2882 = vmatpush1.msra.mxu0 0.0
    %2883 = vmatprep.subr.mxu0 0.0
    %2884 = vmatpush1.msra.mxu0 0.0
    %2885 = vmatprep.subr.mxu0 0.0
    %2886 = vmatpush1.msra.mxu0 0.0
    %2887 = vmatprep.subr.mxu0 0.0
    %2888 = vmatpush1.msra.mxu0 0.0
    %2889 = vmatprep.subr.mxu0 0.0
    %2890 = vmatpush1.msra.mxu0 0.0
    %2891 = vmatprep.subr.mxu0 0.0
    %2892 = vmatpush1.msra.mxu0 0.0
    %2893 = vmatprep.subr.mxu0 0.0
    %2894 = vmatpush1.msra.mxu0 0.0
    %2895 = vmatprep.subr.mxu0 0.0
    %2896 = vmatpush1.msra.mxu0 0.0
    %2897 = vmatprep.subr.mxu0 0.0
    %2898 = vmatpush1.msra.mxu0 0.0
    %2899 = vmatprep.subr.mxu0 0.0
    %2900 = vmatpush1.msra.mxu0 0.0
    %2901 = vmatprep.subr.mxu0 0.0
    %2902 = vmatpush1.msra.mxu0 0.0
    %2903 = vmatprep.mubr.f32.mxu0 0.0
    %2904 = vmatmul.mubr.f32.gmra.mrb[0].mxu0 %v2837
    %v2905 = vpop.f32.mrb[0].mxu0
    %v2906 = vadd.f32 %v2833, %v2905
    %v2907 = vpop.f32.mrb[0].mxu0
    %2908 = vdwg.mxu0
    %v2909 = vsel %vm1256, %v693, 0
    %2911 = vmatprep.subr.mxu0 0.0
    %2912 = vmatpush1.msra.mxu0 %v2759
    %2913 = vmatprep.subr.mxu0 0.0
    %2914 = vmatpush1.msra.mxu0 %v2760
    %2915 = vmatprep.subr.mxu0 0.0
    %2916 = vmatpush1.msra.mxu0 %v2761
    %2917 = vmatprep.subr.mxu0 0.0
    %2918 = vmatpush1.msra.mxu0 %v2762
    %2919 = vmatprep.subr.mxu0 0.0
    %2920 = vmatpush1.msra.mxu0 0.0
    %2921 = vmatprep.subr.mxu0 0.0
    %2922 = vmatpush1.msra.mxu0 0.0
    %2923 = vmatprep.subr.mxu0 0.0
    %2924 = vmatpush1.msra.mxu0 0.0
    %2925 = vmatprep.subr.mxu0 0.0
    %2926 = vmatpush1.msra.mxu0 0.0
    %2927 = vmatprep.subr.mxu0 0.0
    %2928 = vmatpush1.msra.mxu0 0.0
    %2929 = vmatprep.subr.mxu0 0.0
    %2930 = vmatpush1.msra.mxu0 0.0
    %2931 = vmatprep.subr.mxu0 0.0
    %2932 = vmatpush1.msra.mxu0 0.0
    %2933 = vmatprep.subr.mxu0 0.0
    %2934 = vmatpush1.msra.mxu0 0.0
    %2935 = vmatprep.subr.mxu0 0.0
    %2936 = vmatpush1.msra.mxu0 0.0
    %2937 = vmatprep.subr.mxu0 0.0
    %2938 = vmatpush1.msra.mxu0 0.0
    %2939 = vmatprep.subr.mxu0 0.0
    %2940 = vmatpush1.msra.mxu0 0.0
    %2941 = vmatprep.subr.mxu0 0.0
    %2942 = vmatpush1.msra.mxu0 0.0
    %2943 = vmatprep.subr.mxu0 0.0
    %2944 = vmatpush1.msra.mxu0 0.0
    %2945 = vmatprep.subr.mxu0 0.0
    %2946 = vmatpush1.msra.mxu0 0.0
    %2947 = vmatprep.subr.mxu0 0.0
    %2948 = vmatpush1.msra.mxu0 0.0
    %2949 = vmatprep.subr.mxu0 0.0
    %2950 = vmatpush1.msra.mxu0 0.0
    %2951 = vmatprep.subr.mxu0 0.0
    %2952 = vmatpush1.msra.mxu0 0.0
    %2953 = vmatprep.subr.mxu0 0.0
    %2954 = vmatpush1.msra.mxu0 0.0
    %2955 = vmatprep.subr.mxu0 0.0
    %2956 = vmatpush1.msra.mxu0 0.0
    %2957 = vmatprep.subr.mxu0 0.0
    %2958 = vmatpush1.msra.mxu0 0.0
    %2959 = vmatprep.subr.mxu0 0.0
    %2960 = vmatpush1.msra.mxu0 0.0
    %2961 = vmatprep.subr.mxu0 0.0
    %2962 = vmatpush1.msra.mxu0 0.0
    %2963 = vmatprep.subr.mxu0 0.0
    %2964 = vmatpush1.msra.mxu0 0.0
    %2965 = vmatprep.subr.mxu0 0.0
    %2966 = vmatpush1.msra.mxu0 0.0
    %2967 = vmatprep.subr.mxu0 0.0
    %2968 = vmatpush1.msra.mxu0 0.0
    %2969 = vmatprep.subr.mxu0 0.0
    %2970 = vmatpush1.msra.mxu0 0.0
    %2971 = vmatprep.subr.mxu0 0.0
    %2972 = vmatpush1.msra.mxu0 0.0
    %2973 = vmatprep.subr.mxu0 0.0
    %2974 = vmatpush1.msra.mxu0 0.0
    %2975 = vmatprep.mubr.f32.mxu0 0.0
    %2976 = vmatmul.mubr.f32.gmra.mrb[0].mxu0 %v2909
    %v2977 = vpop.f32.mrb[0].mxu0
    %v2978 = vadd.f32 0.0, %v2977
    %v2979 = vpop.f32.mrb[0].mxu0
    %2980 = vdwg.mxu0
    %v2981 = vadd.f32 %v2906, %v2978
    %s2982 = scalar_lea.vmem %s16, 128
    %v2983 = vld [vmem:[%s2982] sm:$0xff]
    %v2984 = vld [vmem:[%s2982 + $0x8] sm:$0xff]
    %v2985 = vld [vmem:[%s2982 + $0x10] sm:$0xff]
    %v2986 = vld [vmem:[%s2982 + $0x18] sm:$0xff]
    %s2987 = scalar_lea.vmem %s16, 160
    %v2988 = vld [vmem:[%s2987] sm:$0xff]
    %v2989 = vld [vmem:[%s2987 + $0x8] sm:$0xff]
    %v2990 = vld [vmem:[%s2987 + $0x10] sm:$0xff]
    %v2991 = vld [vmem:[%s2987 + $0x18] sm:$0xff]
    %s2992 = scalar_lea.vmem %s17, 8
    %v2993 = vld [vmem:[%s2992] sm:$0x7]
    %v2994 = vlaneseq
    %v2995 = vshrl.u32 %v2994, 7
    %v2996 = vsub.s32 0, %v2995
    %v2997 = vrot.slane %v2993, %v2996
    %v2998 = vadd.f32 %v2981, %v2997
    %v2999 = vmax.f32 %v2998, 0.0
    %v3000 = vand.u32 2147483647, %v2998
    %v3001 = vsub.f32 0.0, %v3000
    %v3002 = vmul.f32 %v3001, 1.442695
    %v3003 = vpow.pop %v3002
    %v3004 = vadd.f32 %v3003, 1.0
    %v3005 = vlog2.pop %v3004
    %v3006 = vmul.f32 %v3005, 0.6931472
    %v3007 = vmul.f32 -0.5, %v3003
    %v3008 = vadd.f32 %v3007, 1.0
    %v3009 = vmul.f32 %v3008, %v3003
    %v3010 = vand.u32 2147483647, %v3003
    %vm3011 = vcmp.lt.f32.partialorder %v3010, 0.0004427343
    %v3012 = vsel %vm3011, %v3009, %v3006
    %v3013 = vadd.f32 %v2999, %v3012
    %v3014 = vlaneseq
    %v3015 = vshrl.u32 %v3014, 7
    %v3016 = vsub.s32 1, %v3015
    %v3017 = vrot.slane %v2993, %v3016
    %v3019 = vsel %vm1256, %v3013, 0
    %3021 = vmatprep.subr.mxu0 0.0
    %3022 = vmatpush1.msra.mxu0 %v2983
    %3023 = vmatprep.subr.mxu0 0.0
    %3024 = vmatpush1.msra.mxu0 %v2984
    %3025 = vmatprep.subr.mxu0 0.0
    %3026 = vmatpush1.msra.mxu0 %v2985
    %3027 = vmatprep.subr.mxu0 0.0
    %3028 = vmatpush1.msra.mxu0 %v2986
    %3029 = vmatprep.subr.mxu0 0.0
    %3030 = vmatpush1.msra.mxu0 0.0
    %3031 = vmatprep.subr.mxu0 0.0
    %3032 = vmatpush1.msra.mxu0 0.0
    %3033 = vmatprep.subr.mxu0 0.0
    %3034 = vmatpush1.msra.mxu0 0.0
    %3035 = vmatprep.subr.mxu0 0.0
    %3036 = vmatpush1.msra.mxu0 0.0
    %3037 = vmatprep.subr.mxu0 0.0
    %3038 = vmatpush1.msra.mxu0 0.0
    %3039 = vmatprep.subr.mxu0 0.0
    %3040 = vmatpush1.msra.mxu0 0.0
    %3041 = vmatprep.subr.mxu0 0.0
    %3042 = vmatpush1.msra.mxu0 0.0
    %3043 = vmatprep.subr.mxu0 0.0
    %3044 = vmatpush1.msra.mxu0 0.0
    %3045 = vmatprep.subr.mxu0 0.0
    %3046 = vmatpush1.msra.mxu0 0.0
    %3047 = vmatprep.subr.mxu0 0.0
    %3048 = vmatpush1.msra.mxu0 0.0
    %3049 = vmatprep.subr.mxu0 0.0
    %3050 = vmatpush1.msra.mxu0 0.0
    %3051 = vmatprep.subr.mxu0 0.0
    %3052 = vmatpush1.msra.mxu0 0.0
    %3053 = vmatprep.subr.mxu0 0.0
    %3054 = vmatpush1.msra.mxu0 0.0
    %3055 = vmatprep.subr.mxu0 0.0
    %3056 = vmatpush1.msra.mxu0 0.0
    %3057 = vmatprep.subr.mxu0 0.0
    %3058 = vmatpush1.msra.mxu0 0.0
    %3059 = vmatprep.subr.mxu0 0.0
    %3060 = vmatpush1.msra.mxu0 0.0
    %3061 = vmatprep.subr.mxu0 0.0
    %3062 = vmatpush1.msra.mxu0 0.0
    %3063 = vmatprep.subr.mxu0 0.0
    %3064 = vmatpush1.msra.mxu0 0.0
    %3065 = vmatprep.subr.mxu0 0.0
    %3066 = vmatpush1.msra.mxu0 0.0
    %3067 = vmatprep.subr.mxu0 0.0
    %3068 = vmatpush1.msra.mxu0 0.0
    %3069 = vmatprep.subr.mxu0 0.0
    %3070 = vmatpush1.msra.mxu0 0.0
    %3071 = vmatprep.subr.mxu0 0.0
    %3072 = vmatpush1.msra.mxu0 0.0
    %3073 = vmatprep.subr.mxu0 0.0
    %3074 = vmatpush1.msra.mxu0 0.0
    %3075 = vmatprep.subr.mxu0 0.0
    %3076 = vmatpush1.msra.mxu0 0.0
    %3077 = vmatprep.subr.mxu0 0.0
    %3078 = vmatpush1.msra.mxu0 0.0
    %3079 = vmatprep.subr.mxu0 0.0
    %3080 = vmatpush1.msra.mxu0 0.0
    %3081 = vmatprep.subr.mxu0 0.0
    %3082 = vmatpush1.msra.mxu0 0.0
    %3083 = vmatprep.subr.mxu0 0.0
    %3084 = vmatpush1.msra.mxu0 0.0
    %3085 = vmatprep.mubr.f32.mxu0 0.0
    %3086 = vmatmul.mubr.f32.gmra.mrb[0].mxu0 %v3019
    %v3087 = vpop.f32.mrb[0].mxu0
    %v3088 = vadd.f32 %v3017, %v3087
    %v3089 = vpop.f32.mrb[0].mxu0
    %3090 = vdwg.mxu0
    %v3091 = vmax.f32 %v3088, 0.0
    %v3092 = vand.u32 2147483647, %v3088
    %v3093 = vsub.f32 0.0, %v3092
    %v3094 = vmul.f32 %v3093, 1.442695
    %v3095 = vpow.pop %v3094
    %v3096 = vadd.f32 %v3095, 1.0
    %v3097 = vlog2.pop %v3096
    %v3098 = vmul.f32 %v3097, 0.6931472
    %v3099 = vmul.f32 -0.5, %v3095
    %v3100 = vadd.f32 %v3099, 1.0
    %v3101 = vmul.f32 %v3100, %v3095
    %v3102 = vand.u32 2147483647, %v3095
    %vm3103 = vcmp.lt.f32.partialorder %v3102, 0.0004427343
    %v3104 = vsel %vm3103, %v3101, %v3098
    %v3105 = vadd.f32 %v3091, %v3104
    %v3106 = vlaneseq
    %v3107 = vshrl.u32 %v3106, 7
    %v3108 = vsub.s32 2, %v3107
    %v3109 = vrot.slane %v2993, %v3108
    %v3111 = vsel %vm1256, %v3105, 0
    %3113 = vmatprep.subr.mxu0 0.0
    %3114 = vmatpush1.msra.mxu0 %v2988
    %3115 = vmatprep.subr.mxu0 0.0
    %3116 = vmatpush1.msra.mxu0 %v2989
    %3117 = vmatprep.subr.mxu0 0.0
    %3118 = vmatpush1.msra.mxu0 %v2990
    %3119 = vmatprep.subr.mxu0 0.0
    %3120 = vmatpush1.msra.mxu0 %v2991
    %3121 = vmatprep.subr.mxu0 0.0
    %3122 = vmatpush1.msra.mxu0 0.0
    %3123 = vmatprep.subr.mxu0 0.0
    %3124 = vmatpush1.msra.mxu0 0.0
    %3125 = vmatprep.subr.mxu0 0.0
    %3126 = vmatpush1.msra.mxu0 0.0
    %3127 = vmatprep.subr.mxu0 0.0
    %3128 = vmatpush1.msra.mxu0 0.0
    %3129 = vmatprep.subr.mxu0 0.0
    %3130 = vmatpush1.msra.mxu0 0.0
    %3131 = vmatprep.subr.mxu0 0.0
    %3132 = vmatpush1.msra.mxu0 0.0
    %3133 = vmatprep.subr.mxu0 0.0
    %3134 = vmatpush1.msra.mxu0 0.0
    %3135 = vmatprep.subr.mxu0 0.0
    %3136 = vmatpush1.msra.mxu0 0.0
    %3137 = vmatprep.subr.mxu0 0.0
    %3138 = vmatpush1.msra.mxu0 0.0
    %3139 = vmatprep.subr.mxu0 0.0
    %3140 = vmatpush1.msra.mxu0 0.0
    %3141 = vmatprep.subr.mxu0 0.0
    %3142 = vmatpush1.msra.mxu0 0.0
    %3143 = vmatprep.subr.mxu0 0.0
    %3144 = vmatpush1.msra.mxu0 0.0
    %3145 = vmatprep.subr.mxu0 0.0
    %3146 = vmatpush1.msra.mxu0 0.0
    %3147 = vmatprep.subr.mxu0 0.0
    %3148 = vmatpush1.msra.mxu0 0.0
    %3149 = vmatprep.subr.mxu0 0.0
    %3150 = vmatpush1.msra.mxu0 0.0
    %3151 = vmatprep.subr.mxu0 0.0
    %3152 = vmatpush1.msra.mxu0 0.0
    %3153 = vmatprep.subr.mxu0 0.0
    %3154 = vmatpush1.msra.mxu0 0.0
    %3155 = vmatprep.subr.mxu0 0.0
    %3156 = vmatpush1.msra.mxu0 0.0
    %3157 = vmatprep.subr.mxu0 0.0
    %3158 = vmatpush1.msra.mxu0 0.0
    %3159 = vmatprep.subr.mxu0 0.0
    %3160 = vmatpush1.msra.mxu0 0.0
    %3161 = vmatprep.subr.mxu0 0.0
    %3162 = vmatpush1.msra.mxu0 0.0
    %3163 = vmatprep.subr.mxu0 0.0
    %3164 = vmatpush1.msra.mxu0 0.0
    %3165 = vmatprep.subr.mxu0 0.0
    %3166 = vmatpush1.msra.mxu0 0.0
    %3167 = vmatprep.subr.mxu0 0.0
    %3168 = vmatpush1.msra.mxu0 0.0
    %3169 = vmatprep.subr.mxu0 0.0
    %3170 = vmatpush1.msra.mxu0 0.0
    %3171 = vmatprep.subr.mxu0 0.0
    %3172 = vmatpush1.msra.mxu0 0.0
    %3173 = vmatprep.subr.mxu0 0.0
    %3174 = vmatpush1.msra.mxu0 0.0
    %3175 = vmatprep.subr.mxu0 0.0
    %3176 = vmatpush1.msra.mxu0 0.0
    %3177 = vmatprep.mubr.f32.mxu0 0.0
    %3178 = vmatmul.mubr.f32.gmra.mrb[0].mxu0 %v3111
    %v3179 = vpop.f32.mrb[0].mxu0
    %v3180 = vadd.f32 %v3109, %v3179
    %v3181 = vpop.f32.mrb[0].mxu0
    %3182 = vdwg.mxu0
    %3183 = vst.msk [vmem:[#allocation2] sm:$0xff] %vm1256, %v2583
    %3184 = vst.msk [vmem:[#allocation2 + $0x8] sm:$0xff] %vm1256, %v2588
    %3185 = vst.msk [vmem:[#allocation4] sm:$0xff] %vm1256, %v1975
    %3186 = vst.msk [vmem:[#allocation4 + $0x8] sm:$0xff] %vm1256, %v1980
    %3187 = vst.msk [vmem:[#allocation4 + $0x10] sm:$0xff] %vm1256, %v1985
    %3188 = vst.msk [vmem:[#allocation4 + $0x18] sm:$0xff] %vm1256, %v1990
    %3189 = vst.msk [vmem:[#allocation6] sm:$0x3] %vm2591, %v3180
    // Predicated region
    $region74: #{megnet_block_forward.1} parent=1 // pred_check
      _
    $region75: #{megnet_block_forward.1} parent=1 // pred_check_branch
      %3191 = sbr.rel (0) target = $region77
    $region76: #{megnet_block_forward.1} parent=1 // pred_region
      %s3193 = ssub.s32 256, 256
      %3194 = vsyncadd [#allocation3], %s3193
      %s3195 = sshll.u32 [#allocation2], 4
      %s3196 = int_to_ptr.vmem [resolvable:$true] %s3195
      %3201 = dma.vmem_to_hbm [thread:$0]  %s3196, 256, %s18, [#allocation3], 128, 128, 8
    $region77: #{megnet_block_forward.1} parent=1 // pred_fallthru
      _
    // Predicated region
    $region78: #{megnet_block_forward.1} parent=1 // pred_check
      _
    $region79: #{megnet_block_forward.1} parent=1 // pred_check_branch
      %3203 = sbr.rel (0) target = $region81
    $region80: #{megnet_block_forward.1} parent=1 // pred_region
      %s3205 = ssub.s32 512, 512
      %3206 = vsyncadd [#allocation5], %s3205
      %s3207 = sshll.u32 [#allocation4], 4
      %s3208 = int_to_ptr.vmem [resolvable:$true] %s3207
      %3213 = dma.vmem_to_hbm [thread:$0]  %s3208, 512, %s19, [#allocation5], 128, 128, 8
    $region81: #{megnet_block_forward.1} parent=1 // pred_fallthru
      _
    // Predicated region
    $region82: #{megnet_block_forward.1} parent=1 // pred_check
      _
    $region83: #{megnet_block_forward.1} parent=1 // pred_check_branch
      %3215 = sbr.rel (0) target = $region85
    $region84: #{megnet_block_forward.1} parent=1 // pred_region
      %s3217 = ssub.s32 32, 32
      %3218 = vsyncadd [#allocation5], %s3217
      %s3220 = sshll.u32 [#allocation6], 4
      %s3221 = int_to_ptr.vmem [resolvable:$true] %s3220
      %3223 = dma.vmem_to_hbm [thread:$0]  %s3221, 32, %s20, [#allocation5]
    $region85: #{megnet_block_forward.1} parent=1 // pred_fallthru
      _
    // Predicated region
    $region86: #{megnet_block_forward.1} parent=1 // pred_check
      _
    $region87: #{megnet_block_forward.1} parent=1 // pred_check_branch
      %3225 = sbr.rel (0) target = $region89
    $region88: #{megnet_block_forward.1} parent=1 // pred_region
      %3226 = dma.done [#allocation3], 256
    $region89: #{megnet_block_forward.1} parent=1 // pred_fallthru
      _
    // Predicated region
    $region90: #{megnet_block_forward.1} parent=1 // pred_check
      _
    $region91: #{megnet_block_forward.1} parent=1 // pred_check_branch
      %3228 = sbr.rel (0) target = $region93
    $region92: #{megnet_block_forward.1} parent=1 // pred_region
      %3229 = dma.done [#allocation5], 512
    $region93: #{megnet_block_forward.1} parent=1 // pred_fallthru
      _
    // Predicated region
    $region94: #{megnet_block_forward.1} parent=1 // pred_check
      _
    $region95: #{megnet_block_forward.1} parent=1 // pred_check_branch
      %3231 = sbr.rel (0) target = $region97
    $region96: #{megnet_block_forward.1} parent=1 // pred_region
      %3232 = dma.done [#allocation5], 32
    $region97: #{megnet_block_forward.1} parent=1 // pred_fallthru
      _
    %3233 = vsyncpa [#allocation3], 1
    %3234 = vsyncpa [#allocation5], 1

</llo_original>
